<compile_context>
chip_gen: v5e
topology: v5e:2x2
jax: 0.10.0
libtpu: 0.0.40
codegen_flags: <defaults>
</compile_context>

<pallas_src>
import functools

import numpy as np
import jax
import jax.numpy as jnp
from jax.experimental import pallas as pl
from jax.experimental.pallas import tpu as pltpu

VMEM_LIMIT = 32 * 1024 * 1024          # dense / banded conv calls
STAGE_VMEM_LIMIT = 48 * 1024 * 1024    # fused 3-conv stage calls (weights resident)

# torchvision.models.vgg16 "features" configuration
VGG16_CFG = [64, 64, "M", 128, 128, "M", 256, 256, 256, "M",
             512, 512, 512, "M", 512, 512, 512, "M"]


# ---------------------------------------------------------------------------
# shared in-kernel helpers
# ---------------------------------------------------------------------------
def _conv3x3_accum(xp_ref, w_ref, nb, hh, ww, cin, cout, fuse_kx):
    """3x3 'SAME' conv over a zero-padded (nb, hh+2, ww+2, cin) VMEM ref.

    w_ref is (3, 3*cin, cout) with w_ref[ky, kx*cin + c, o] = w_hwio[ky, kx, c, o].
    Returns the f32 accumulator flattened to (nb*hh*ww, cout)."""
    acc = jnp.zeros((nb * hh * ww, cout), jnp.float32)
    if fuse_kx:
        # cin <= 128: fuse the three kx taps into one K = 3*cin matmul per ky
        xcat = jnp.concatenate([xp_ref[:, :, 0:ww, :],
                                xp_ref[:, :, 1:ww + 1, :],
                                xp_ref[:, :, 2:ww + 2, :]], axis=-1)
        for ky in range(3):
            a = xcat[:, ky:ky + hh].reshape(nb * hh * ww, 3 * cin)
            acc = acc + jnp.dot(a, w_ref[ky], preferred_element_type=jnp.float32)
    else:
        # cin >= 256: K already fills an MXU pass per tap -> 9 direct matmuls,
        # no concatenate / relayout traffic.
        for ky in range(3):
            for kx in range(3):
                a = xp_ref[:, ky:ky + hh, kx:kx + ww, :].reshape(nb * hh * ww, cin)
                acc = acc + jnp.dot(a, w_ref[ky, kx * cin:(kx + 1) * cin, :],
                                    preferred_element_type=jnp.float32)
    return acc


def _maxpool2x2(y_flat, nb, hh, ww, c):
    """2x2 / stride-2 max pool of a flat (nb*hh*ww, c) f32 accumulator."""
    y = y_flat.reshape(nb * hh, ww // 2, 2, c)
    y = jnp.max(y, axis=2)                      # pool along W
    y = y.reshape(nb * hh // 2, 2, ww // 2, c)
    y = jnp.max(y, axis=1)                      # pool along H (pairs stay in-image)
    return y.reshape(nb, hh // 2, ww // 2, c)


# ---------------------------------------------------------------------------
# banded 3x3 conv (stride 1, pad 1) + bias + ReLU (+ optional fused 2x2/2 pool)
# used for the large-spatial stages 1-2 (conv1_2, conv2_1, conv2_2)
# ---------------------------------------------------------------------------
def _conv3x3_band_kernel(x_ref, w_ref, b_ref, o_ref, xpad_ref,
                         *, tb, h, w, pool, fuse_kx):
    # x_ref:    (1, H, W, Cin)           bf16, whole image (resident across bands)
    # w_ref:    (3, 3*Cin, Cout)         bf16
    # b_ref:    (1, Cout)                f32
    # o_ref:    (1, tb[/2], W[/2], Cout) bf16
    # xpad_ref: (1, tb+2, W+2, Cin)      bf16 scratch: zero-padded input band
    cin = x_ref.shape[-1]
    cout = w_ref.shape[-1]
    r = pl.program_id(1)
    row0 = pl.multiple_of(r * tb, tb)

    # ---- build the zero-padded band in VMEM (in-kernel pad, where-masked halo) ----
    zcol = jnp.zeros((1, tb + 2, 1, cin), jnp.bfloat16)
    xpad_ref[:, :, 0:1, :] = zcol
    xpad_ref[:, :, w + 1:w + 2, :] = zcol
    xpad_ref[:, 1:tb + 1, 1:w + 1, :] = x_ref[:, pl.ds(row0, tb), :, :]
    zrow = jnp.zeros((1, 1, w, cin), jnp.bfloat16)
    top_i = jnp.maximum(row0 - 1, 0)
    bot_i = jnp.minimum(row0 + tb, h - 1)
    top = jnp.where(row0 > 0, x_ref[:, pl.ds(top_i, 1), :, :], zrow)
    bot = jnp.where(row0 + tb < h, x_ref[:, pl.ds(bot_i, 1), :, :], zrow)
    xpad_ref[:, 0:1, 1:w + 1, :] = top
    xpad_ref[:, tb + 1:tb + 2, 1:w + 1, :] = bot

    # ---- conv as shifted matmuls, f32 accumulation on the MXU ----
    acc = _conv3x3_accum(xpad_ref, w_ref, 1, tb, w, cin, cout, fuse_kx)

    # ---- epilogue: (pool) -> +bias -> ReLU -> store (bias/ReLU commute with max) ----
    if pool:
        y = _maxpool2x2(acc, 1, tb, w, cout)
    else:
        y = acc.reshape(1, tb, w, cout)
    y = jnp.maximum(y + b_ref[...], 0.0)
    o_ref[...] = y.astype(o_ref.dtype)


def conv3x3_relu(x, wk, b, *, pool):
    """x: (N,H,W,Cin) bf16, wk: (3, 3*Cin, Cout) bf16, b: (Cout,) f32.

    Returns conv+bias+ReLU (+ fused MaxPool2d(2,2) if pool)."""
    x = x.astype(jnp.bfloat16)
    wk = wk.astype(jnp.bfloat16)
    b = b.astype(jnp.float32)
    n, h, w, cin = x.shape
    cout = wk.shape[-1]
    tb = min(h, 8)                       # output-row band per grid step
    assert h % tb == 0 and tb % 2 == 0
    tbo, ho, wo = (tb // 2, h // 2, w // 2) if pool else (tb, h, w)
    fuse_kx = cin <= 128                 # K = 3*Cin fusion only where it deepens K

    kern = functools.partial(_conv3x3_band_kernel, tb=tb, h=h, w=w,
                             pool=pool, fuse_kx=fuse_kx)
    return pl.pallas_call(
        kern,
        out_shape=jax.ShapeDtypeStruct((n, ho, wo, cout), jnp.bfloat16),
        grid=(n, h // tb),
        in_specs=[
            pl.BlockSpec((1, h, w, cin), lambda i, r: (i, 0, 0, 0)),
            pl.BlockSpec((3, 3 * cin, cout), lambda i, r: (0, 0, 0)),
            pl.BlockSpec((1, cout), lambda i, r: (0, 0)),
        ],
        out_specs=pl.BlockSpec((1, tbo, wo, cout), lambda i, r: (i, r, 0, 0)),
        scratch_shapes=[pltpu.VMEM((1, tb + 2, w + 2, cin), jnp.bfloat16)],
        compiler_params=pltpu.CompilerParams(
            dimension_semantics=("parallel", "parallel"),
            vmem_limit_bytes=VMEM_LIMIT),
    )(x, wk, b.reshape(1, cout))


# ---------------------------------------------------------------------------
# fused VGG stage: 3x (3x3 conv + bias + ReLU) + 2x2/2 max-pool, batch folded,
# single grid step, all intermediates in VMEM (stages 3, 4, 5)
# ---------------------------------------------------------------------------
def _vgg_stage3_kernel(x_ref, w1_ref, b1_ref, w2_ref, b2_ref, w3_ref, b3_ref,
                       o_ref, xp1_ref, xp2_ref, xp3_ref, *, nb, hh, ww):
    c0 = x_ref.shape[-1]
    c1 = w1_ref.shape[-1]
    c2 = w2_ref.shape[-1]
    c3 = w3_ref.shape[-1]

    # conv a
    xp1_ref[...] = jnp.zeros_like(xp1_ref)
    xp1_ref[:, 1:hh + 1, 1:ww + 1, :] = x_ref[...]
    acc = _conv3x3_accum(xp1_ref, w1_ref, nb, hh, ww, c0, c1, c0 <= 128)
    y = jnp.maximum(acc.reshape(nb, hh, ww, c1) + b1_ref[...], 0.0)

    # conv b
    xp2_ref[...] = jnp.zeros_like(xp2_ref)
    xp2_ref[:, 1:hh + 1, 1:ww + 1, :] = y.astype(jnp.bfloat16)
    acc = _conv3x3_accum(xp2_ref, w2_ref, nb, hh, ww, c1, c2, c1 <= 128)
    y = jnp.maximum(acc.reshape(nb, hh, ww, c2) + b2_ref[...], 0.0)

    # conv c + pool (+bias/ReLU after the max: exact, bias/ReLU commute with max)
    xp3_ref[...] = jnp.zeros_like(xp3_ref)
    xp3_ref[:, 1:hh + 1, 1:ww + 1, :] = y.astype(jnp.bfloat16)
    acc = _conv3x3_accum(xp3_ref, w3_ref, nb, hh, ww, c2, c3, c2 <= 128)
    y = _maxpool2x2(acc, nb, hh, ww, c3)
    y = jnp.maximum(y + b3_ref[...], 0.0)
    o_ref[...] = y.astype(o_ref.dtype)


def vgg_stage3(x, wks, bs):
    """x: (N,H,W,C0) bf16, wks/bs: 3 conv weights (3,3*Cin,Cout) / biases.

    Returns the stage output after the trailing 2x2 max-pool: (N,H/2,W/2,C3)."""
    x = x.astype(jnp.bfloat16)
    n, h, w, c0 = x.shape
    c1 = wks[0].shape[-1]
    c2 = wks[1].shape[-1]
    c3 = wks[2].shape[-1]

    kern = functools.partial(_vgg_stage3_kernel, nb=n, hh=h, ww=w)
    return pl.pallas_call(
        kern,
        out_shape=jax.ShapeDtypeStruct((n, h // 2, w // 2, c3), jnp.bfloat16),
        grid=(1,),
        in_specs=[
            pl.BlockSpec((n, h, w, c0), lambda i: (0, 0, 0, 0)),
            pl.BlockSpec((3, 3 * c0, c1), lambda i: (0, 0, 0)),
            pl.BlockSpec((1, c1), lambda i: (0, 0)),
            pl.BlockSpec((3, 3 * c1, c2), lambda i: (0, 0, 0)),
            pl.BlockSpec((1, c2), lambda i: (0, 0)),
            pl.BlockSpec((3, 3 * c2, c3), lambda i: (0, 0, 0)),
            pl.BlockSpec((1, c3), lambda i: (0, 0)),
        ],
        out_specs=pl.BlockSpec((n, h // 2, w // 2, c3), lambda i: (0, 0, 0, 0)),
        scratch_shapes=[pltpu.VMEM((n, h + 2, w + 2, c0), jnp.bfloat16),
                        pltpu.VMEM((n, h + 2, w + 2, c1), jnp.bfloat16),
                        pltpu.VMEM((n, h + 2, w + 2, c2), jnp.bfloat16)],
        compiler_params=pltpu.CompilerParams(
            dimension_semantics=("arbitrary",),
            vmem_limit_bytes=STAGE_VMEM_LIMIT),
    )(x, wks[0].astype(jnp.bfloat16), bs[0].astype(jnp.float32).reshape(1, c1),
      wks[1].astype(jnp.bfloat16), bs[1].astype(jnp.float32).reshape(1, c2),
      wks[2].astype(jnp.bfloat16), bs[2].astype(jnp.float32).reshape(1, c3))


# ---------------------------------------------------------------------------
# dense / 1x1-conv style matmul + bias (+ReLU), tiled over M and output channels
# ---------------------------------------------------------------------------
def _dense_kernel(x_ref, w_ref, b_ref, o_ref, *, relu):
    acc = jnp.dot(x_ref[...], w_ref[...], preferred_element_type=jnp.float32)
    acc = acc + b_ref[...]
    if relu:
        acc = jnp.maximum(acc, 0.0)
    o_ref[...] = acc.astype(o_ref.dtype)


def dense(x, w, b, *, relu, out_dtype=jnp.bfloat16, tile_n=1024, tile_m=None):
    x = x.astype(jnp.bfloat16)
    w = w.astype(jnp.bfloat16)
    b = b.astype(jnp.float32)
    m, k = x.shape
    k2, nout = w.shape
    assert k == k2
    tn = tile_n if (tile_n is not None and nout > tile_n and nout % tile_n == 0) else nout
    tm = tile_m if (tile_m is not None and m > tile_m and m % tile_m == 0) else m
    return pl.pallas_call(
        functools.partial(_dense_kernel, relu=relu),
        out_shape=jax.ShapeDtypeStruct((m, nout), out_dtype),
        grid=(m // tm, nout // tn),
        in_specs=[
            pl.BlockSpec((tm, k), lambda i, j: (i, 0)),
            pl.BlockSpec((k, tn), lambda i, j: (0, j)),
            pl.BlockSpec((1, tn), lambda i, j: (0, j)),
        ],
        out_specs=pl.BlockSpec((tm, tn), lambda i, j: (i, j)),
        compiler_params=pltpu.CompilerParams(
            dimension_semantics=("parallel", "parallel"),
            vmem_limit_bytes=VMEM_LIMIT),
    )(x, w, b.reshape(1, nout))


# ---------------------------------------------------------------------------
# fused score (Conv2d 4096->nc, 1x1) + ConvTranspose2d(nc, nc, 64, 32) on a 1x1
# input: one single-step kernel, two chained matmuls
# ---------------------------------------------------------------------------
def _score_deconv_kernel(x_ref, ws_ref, bs_ref, wd_ref, o_ref):
    s = jnp.dot(x_ref[...], ws_ref[...], preferred_element_type=jnp.float32)
    s = (s + bs_ref[...]).astype(jnp.bfloat16)
    o_ref[...] = jnp.dot(s, wd_ref[...], preferred_element_type=jnp.float32)


def score_deconv(x, ws, bs, wd_flat):
    x = x.astype(jnp.bfloat16)
    ws = ws.astype(jnp.bfloat16)
    bs = bs.astype(jnp.float32)
    wd_flat = wd_flat.astype(jnp.bfloat16)
    m, k = x.shape
    nc = ws.shape[1]
    kout = wd_flat.shape[1]
    return pl.pallas_call(
        _score_deconv_kernel,
        out_shape=jax.ShapeDtypeStruct((m, kout), jnp.float32),
        grid=(1,),
        in_specs=[
            pl.BlockSpec((m, k), lambda i: (0, 0)),
            pl.BlockSpec((k, nc), lambda i: (0, 0)),
            pl.BlockSpec((1, nc), lambda i: (0, 0)),
            pl.BlockSpec((nc, kout), lambda i: (0, 0)),
        ],
        out_specs=pl.BlockSpec((m, kout), lambda i: (0, 0)),
        compiler_params=pltpu.CompilerParams(
            dimension_semantics=("arbitrary",),
            vmem_limit_bytes=VMEM_LIMIT),
    )(x, ws, bs.reshape(1, nc), wd_flat)


# ---------------------------------------------------------------------------
# fcn32s forward
# ---------------------------------------------------------------------------
def _im2col3x3(x):
    """(N,H,W,C) -> (N,H,W,9*C) with zero 'SAME' padding (XLA-side, tiny)."""
    n, h, w, c = x.shape
    xp = jnp.pad(x, ((0, 0), (1, 1), (1, 1), (0, 0)))
    cols = [xp[:, ky:ky + h, kx:kx + w, :] for ky in range(3) for kx in range(3)]
    return jnp.concatenate(cols, axis=-1)


def fcn32s_forward(params, x_nchw):
    x = jnp.transpose(x_nchw, (0, 2, 3, 1)).astype(jnp.bfloat16)   # NCHW -> NHWC
    n, h, w, _ = x.shape

    # conv1_1: im2col (K = 27, zero-padded to 32) -> one dense matmul, full lanes
    xc = _im2col3x3(x)                                             # (n, h, w, 27)
    xc = jnp.pad(xc, ((0, 0), (0, 0), (0, 0), (0, 32 - 27)))
    y = dense(xc.reshape(n * h * w, 32), params["w11"], params["b11"],
              relu=True, tile_n=None, tile_m=2048)
    x = y.reshape(n, h, w, 64)

    # stages 1-2 (large spatial): banded conv kernels, pool fused into the last conv
    x = conv3x3_relu(x, params["conv_w"][0], params["conv_b"][0], pool=True)   # conv1_2
    x = conv3x3_relu(x, params["conv_w"][1], params["conv_b"][1], pool=False)  # conv2_1
    x = conv3x3_relu(x, params["conv_w"][2], params["conv_b"][2], pool=True)   # conv2_2

    # stages 3-5 (small spatial): fused 3-conv + pool kernels, batch folded into M
    x = vgg_stage3(x, params["conv_w"][3:6], params["conv_b"][3:6])    # -> (n, 8, 8, 256)
    x = vgg_stage3(x, params["conv_w"][6:9], params["conv_b"][6:9])    # -> (n, 4, 4, 512)
    x = vgg_stage3(x, params["conv_w"][9:12], params["conv_b"][9:12])  # -> (n, 2, 2, 512)

    # self.vgg.classifier
    nb, hf, wf, c = x.shape
    # Conv2d(512, 4096, kernel_size=(2,2)): with a 64x64 input the feature map is
    # exactly 2x2, so the conv reduces to one flattened matmul.
    assert (hf, wf, c) == (2, 2, 512), "demo supports 64x64 inputs (2x2 feature map)"
    # TODO(synk): general spatial sizes need a sliding 2x2 window here and
    # overlap-add inside the ConvTranspose kernel; not reached for demo shapes.
    x = x.reshape(nb, hf * wf * c)

    x = dense(x, params["w6"], params["b6"], relu=True)    # fc6 + ReLU (+Dropout2d = id)
    x = dense(x, params["w7"], params["b7"], relu=True)    # fc7 + ReLU (+Dropout2d = id)

    # score (Conv2d 4096->nc, 1x1) + ConvTranspose2d(nc, nc, 64, 32, bias=False)
    # on a 1x1 input, fused into one single-step kernel.
    y = score_deconv(x, params["ws"], params["bs"], params["wd_flat"])  # (nb, 64*64*nc) f32
    nc_ = params["ws"].shape[1]
    y = y.reshape(nb, 64, 64, nc_)
    return jnp.transpose(y, (0, 3, 1, 2))                  # (N, num_classes, 64, 64) f32


# ---------------------------------------------------------------------------
# deterministic synthetic parameters (shapes from the module's __init__)
# ---------------------------------------------------------------------------
def init_params(key, num_classes):
    n_conv = sum(1 for v in VGG16_CFG if v != "M")
    ki = iter(jax.random.split(key, 2 * n_conv + 8))

    conv_w, conv_b = [], []
    cin = 3
    for v in VGG16_CFG:
        if v == "M":
            continue
        std = float(np.sqrt(2.0 / (9 * cin)))
        conv_w.append(jax.random.normal(next(ki), (3, 3, cin, v), jnp.float32) * std)
        conv_b.append(jax.random.normal(next(ki), (v,), jnp.float32) * 0.01)
        cin = v

    w6 = jax.random.normal(next(ki), (2, 2, 512, 4096), jnp.float32) * float(np.sqrt(2.0 / 2048))
    b6 = jax.random.normal(next(ki), (4096,), jnp.float32) * 0.01
    w7 = jax.random.normal(next(ki), (4096, 4096), jnp.float32) * float(np.sqrt(2.0 / 4096))
    b7 = jax.random.normal(next(ki), (4096,), jnp.float32) * 0.01
    ws = jax.random.normal(next(ki), (4096, num_classes), jnp.float32) * float(np.sqrt(1.0 / 4096))
    bs = jax.random.normal(next(ki), (num_classes,), jnp.float32) * 0.01
    wd = jax.random.normal(next(ki), (num_classes, 64, 64, num_classes), jnp.float32) * 0.05

    return {"conv_w": conv_w, "conv_b": conv_b,
            "w6": w6.reshape(2 * 2 * 512, 4096), "b6": b6,
            "w7": w7, "b7": b7, "ws": ws, "bs": bs, "wd": wd}


def prepare_params(params):
    """One-time (outside jit) conversion to bf16 / kernel-ready layouts."""
    p = {}
    # conv1_1: HWIO (3,3,3,64) -> im2col weight (27,64), K zero-padded to 32
    w0 = params["conv_w"][0].reshape(27, 64)
    p["w11"] = jnp.pad(w0, ((0, 32 - 27), (0, 0))).astype(jnp.bfloat16)
    p["b11"] = params["conv_b"][0].astype(jnp.float32)
    # remaining conv weights: HWIO (3,3,Cin,Cout) -> (3, 3*Cin, Cout), bf16
    p["conv_w"] = [w.reshape(3, 3 * w.shape[2], w.shape[3]).astype(jnp.bfloat16)
                   for w in params["conv_w"][1:]]
    p["conv_b"] = [b.astype(jnp.float32) for b in params["conv_b"][1:]]
    p["w6"] = params["w6"].astype(jnp.bfloat16)
    p["b6"] = params["b6"].astype(jnp.float32)
    p["w7"] = params["w7"].astype(jnp.bfloat16)
    p["b7"] = params["b7"].astype(jnp.float32)
    p["ws"] = params["ws"].astype(jnp.bfloat16)
    p["bs"] = params["bs"].astype(jnp.float32)
    nc = params["ws"].shape[1]
    kk = params["wd"].shape[1]
    p["wd_flat"] = params["wd"].reshape(nc, kk * kk * nc).astype(jnp.bfloat16)
    return p


if __name__ == "__main__":
    num_classes = 5
    key = jax.random.PRNGKey(0)
    kp, kx = jax.random.split(key)
    params_f32 = init_params(kp, num_classes)
    params = prepare_params(params_f32)          # bf16 conversion once, outside jit
    x = jax.random.normal(kx, (2, 3, 64, 64), jnp.float32)  # NCHW, like PyTorch

    # --- sanity-check the Pallas conv kernels against XLA references ---
    def conv_ref(inp, w_hwio, b, pool):
        r = jax.lax.conv_general_dilated(
            inp.astype(jnp.bfloat16), w_hwio.astype(jnp.bfloat16), (1, 1), "SAME",
            dimension_numbers=("NHWC", "HWIO", "NHWC"),
            preferred_element_type=jnp.float32)
        r = jnp.maximum(r + b, 0.0)
        if pool:
            r = jax.lax.reduce_window(r, -jnp.inf, jax.lax.max,
                                      (1, 2, 2, 1), (1, 2, 2, 1), "VALID")
        return r

    # banded conv (cin=64, fused kx, fused pool) vs XLA
    x1 = (0.5 * jax.random.normal(jax.random.PRNGKey(1), (2, 32, 32, 64),
                                  jnp.float32)).astype(jnp.bfloat16)
    got1 = conv3x3_relu(x1, params["conv_w"][0], params["conv_b"][0], pool=True)
    ref1 = conv_ref(x1, params_f32["conv_w"][1], params_f32["conv_b"][1], True)
    assert float(jnp.max(jnp.abs(got1.astype(jnp.float32) - ref1))) < 1e-1, "conv+pool mismatch"

    # fused 3-conv stage (stage 3 weights) vs XLA (bf16 intermediates like the kernel)
    x2 = (0.5 * jax.random.normal(jax.random.PRNGKey(2), (2, 16, 16, 128),
                                  jnp.float32)).astype(jnp.bfloat16)
    got2 = vgg_stage3(x2, params["conv_w"][3:6], params["conv_b"][3:6])
    r = x2
    for i in range(3):
        r = conv_ref(r, params_f32["conv_w"][4 + i], params_f32["conv_b"][4 + i],
                     pool=(i == 2)).astype(jnp.bfloat16)
    ref2 = r.astype(jnp.float32)
    assert float(jnp.max(jnp.abs(got2.astype(jnp.float32) - ref2))) < 1e-1, "stage mismatch"

    # --- full forward ---
    out = jax.jit(fcn32s_forward)(params, x)
    out = jax.block_until_ready(out)

    assert out.shape == (2, num_classes, 64, 64), out.shape
    assert out.dtype == jnp.float32
    assert bool(jnp.all(jnp.isfinite(out)))
    print("KERNEL_OK")
</pallas_src>

<mosaic_0001>
module attributes {stable_mosaic.version = 11 : i64} {
  func.func @_conv3x3_band_kernel(%arg0: i32, %arg1: i32, %arg2: memref<1x32x32x64xbf16, #tpu.memory_space<vmem>>, %arg3: memref<3x192x64xbf16, #tpu.memory_space<vmem>>, %arg4: memref<1x64xf32, #tpu.memory_space<vmem>>, %arg5: memref<1x4x16x64xbf16, #tpu.memory_space<vmem>>, %arg6: memref<1x10x34x64xbf16, #tpu.memory_space<vmem>>) attributes {dimension_semantics = [#tpu.dimension_semantics<parallel>, #tpu.dimension_semantics<parallel>], iteration_bounds = array<i64: 2, 4>, scalar_prefetch = 0 : i64, scratch_operands = 1 : i64, tpu.core_type = #tpu.core_type<tc>, window_params = [{transform_indices = @transform_0, window_bounds = array<i64: 1, 32, 32, 64>}, {pipeline_mode = #tpu.pipeline_mode<synchronous>, transform_indices = @transform_1, window_bounds = array<i64: 3, 192, 64>}, {pipeline_mode = #tpu.pipeline_mode<synchronous>, transform_indices = @transform_2, window_bounds = array<i64: 1, 64>}, {transform_indices = @transform_3, window_bounds = array<i64: 1, 4, 16, 64>}]} {
    %c8_i32 = arith.constant 8 : i32
    %0 = arith.muli %arg1, %c8_i32 : i32
    %1 = tpu.assume_multiple %0, 8 : i32
    %cst = arith.constant 0.000000e+00 : bf16
    %2 = vector.broadcast %cst : bf16 to vector<1x10x1x64xbf16>
    %c0 = arith.constant 0 : index
    %c0_0 = arith.constant 0 : index
    %c0_1 = arith.constant 0 : index
    %c0_2 = arith.constant 0 : index
    %3 = vector.load %arg6[%c0, %c0_0, %c0_1, %c0_2] : memref<1x10x34x64xbf16, #tpu.memory_space<vmem>>, vector<1x10x1x64xbf16>
    tpu.vector_store %arg6[%c0, %c0_0, %c0_1, %c0_2], %2 {strides = array<i32>} : memref<1x10x34x64xbf16, #tpu.memory_space<vmem>>, vector<1x10x1x64xbf16>,
    %c0_3 = arith.constant 0 : index
    %c0_4 = arith.constant 0 : index
    %c33 = arith.constant 33 : index
    %c0_5 = arith.constant 0 : index
    %4 = vector.load %arg6[%c0_3, %c0_4, %c33, %c0_5] : memref<1x10x34x64xbf16, #tpu.memory_space<vmem>>, vector<1x10x1x64xbf16>
    tpu.vector_store %arg6[%c0_3, %c0_4, %c33, %c0_5], %2 {strides = array<i32>} : memref<1x10x34x64xbf16, #tpu.memory_space<vmem>>, vector<1x10x1x64xbf16>,
    %c0_6 = arith.constant 0 : index
    %5 = arith.index_cast %1 : i32 to index
    %c0_7 = arith.constant 0 : index
    %c0_8 = arith.constant 0 : index
    %6 = vector.load %arg2[%c0_6, %5, %c0_7, %c0_8] : memref<1x32x32x64xbf16, #tpu.memory_space<vmem>>, vector<1x8x32x64xbf16>
    %c0_9 = arith.constant 0 : index
    %c1 = arith.constant 1 : index
    %c1_10 = arith.constant 1 : index
    %c0_11 = arith.constant 0 : index
    %7 = vector.load %arg6[%c0_9, %c1, %c1_10, %c0_11] : memref<1x10x34x64xbf16, #tpu.memory_space<vmem>>, vector<1x8x32x64xbf16>
    tpu.vector_store %arg6[%c0_9, %c1, %c1_10, %c0_11], %6 {strides = array<i32>} : memref<1x10x34x64xbf16, #tpu.memory_space<vmem>>, vector<1x8x32x64xbf16>,
    %cst_12 = arith.constant 0.000000e+00 : bf16
    %8 = vector.broadcast %cst_12 : bf16 to vector<1x1x32x64xbf16>
    %c1_i32 = arith.constant 1 : i32
    %9 = arith.subi %1, %c1_i32 : i32
    %c0_i32 = arith.constant 0 : i32
    %10 = arith.maxsi %9, %c0_i32 : i32
    %c8_i32_13 = arith.constant 8 : i32
    %11 = arith.addi %1, %c8_i32_13 : i32
    %c31_i32 = arith.constant 31 : i32
    %12 = arith.minsi %11, %c31_i32 : i32
    %c0_i32_14 = arith.constant 0 : i32
    %13 = arith.cmpi sgt, %1, %c0_i32_14 : i32
    %c0_15 = arith.constant 0 : index
    %14 = arith.index_cast %10 : i32 to index
    %c0_16 = arith.constant 0 : index
    %c0_17 = arith.constant 0 : index
    %15 = vector.load %arg2[%c0_15, %14, %c0_16, %c0_17] : memref<1x32x32x64xbf16, #tpu.memory_space<vmem>>, vector<1x1x32x64xbf16>
    %16 = arith.select %13, %15, %8 : vector<1x1x32x64xbf16>
    %c8_i32_18 = arith.constant 8 : i32
    %17 = arith.addi %1, %c8_i32_18 : i32
    %c32_i32 = arith.constant 32 : i32
    %18 = arith.cmpi slt, %17, %c32_i32 : i32
    %c0_19 = arith.constant 0 : index
    %19 = arith.index_cast %12 : i32 to index
    %c0_20 = arith.constant 0 : index
    %c0_21 = arith.constant 0 : index
    %20 = vector.load %arg2[%c0_19, %19, %c0_20, %c0_21] : memref<1x32x32x64xbf16, #tpu.memory_space<vmem>>, vector<1x1x32x64xbf16>
    %21 = arith.select %18, %20, %8 : vector<1x1x32x64xbf16>
    %c0_22 = arith.constant 0 : index
    %c0_23 = arith.constant 0 : index
    %c1_24 = arith.constant 1 : index
    %c0_25 = arith.constant 0 : index
    %22 = vector.load %arg6[%c0_22, %c0_23, %c1_24, %c0_25] : memref<1x10x34x64xbf16, #tpu.memory_space<vmem>>, vector<1x1x32x64xbf16>
    tpu.vector_store %arg6[%c0_22, %c0_23, %c1_24, %c0_25], %16 {strides = array<i32>} : memref<1x10x34x64xbf16, #tpu.memory_space<vmem>>, vector<1x1x32x64xbf16>,
    %c0_26 = arith.constant 0 : index
    %c9 = arith.constant 9 : index
    %c1_27 = arith.constant 1 : index
    %c0_28 = arith.constant 0 : index
    %23 = vector.load %arg6[%c0_26, %c9, %c1_27, %c0_28] : memref<1x10x34x64xbf16, #tpu.memory_space<vmem>>, vector<1x1x32x64xbf16>
    tpu.vector_store %arg6[%c0_26, %c9, %c1_27, %c0_28], %21 {strides = array<i32>} : memref<1x10x34x64xbf16, #tpu.memory_space<vmem>>, vector<1x1x32x64xbf16>,
    %cst_29 = arith.constant 0.000000e+00 : f32
    %24 = vector.broadcast %cst_29 : f32 to vector<256x64xf32>
    %c0_30 = arith.constant 0 : index
    %c0_31 = arith.constant 0 : index
    %c0_32 = arith.constant 0 : index
    %c0_33 = arith.constant 0 : index
    %25 = vector.load %arg6[%c0_30, %c0_31, %c0_32, %c0_33] : memref<1x10x34x64xbf16, #tpu.memory_space<vmem>>, vector<1x10x32x64xbf16>
    %c0_34 = arith.constant 0 : index
    %c0_35 = arith.constant 0 : index
    %c1_36 = arith.constant 1 : index
    %c0_37 = arith.constant 0 : index
    %26 = vector.load %arg6[%c0_34, %c0_35, %c1_36, %c0_37] : memref<1x10x34x64xbf16, #tpu.memory_space<vmem>>, vector<1x10x32x64xbf16>
    %c0_38 = arith.constant 0 : index
    %c0_39 = arith.constant 0 : index
    %c2 = arith.constant 2 : index
    %c0_40 = arith.constant 0 : index
    %27 = vector.load %arg6[%c0_38, %c0_39, %c2, %c0_40] : memref<1x10x34x64xbf16, #tpu.memory_space<vmem>>, vector<1x10x32x64xbf16>
    %28 = tpu.concatenate %25, %26, %27 in 3 : vector<1x10x32x64xbf16>, vector<1x10x32x64xbf16>, vector<1x10x32x64xbf16> -> vector<1x10x32x192xbf16>
    %29 = vector.extract_strided_slice %28 {offsets = [0, 0, 0, 0], sizes = [1, 8, 32, 192], strides = [1, 1, 1, 1]} : vector<1x10x32x192xbf16> to vector<1x8x32x192xbf16>
    %30 = vector.shape_cast %29 : vector<1x8x32x192xbf16> to vector<256x192xbf16>
    %c0_41 = arith.constant 0 : index
    %c0_42 = arith.constant 0 : index
    %c0_43 = arith.constant 0 : index
    %31 = vector.load %arg3[%c0_41, %c0_42, %c0_43] : memref<3x192x64xbf16, #tpu.memory_space<vmem>>, vector<1x192x64xbf16>
    %32 = vector.shape_cast %31 : vector<1x192x64xbf16> to vector<192x64xbf16>
    %cst_44 = arith.constant dense<0.000000e+00> : vector<256x64xf32>
    %33 = tpu.matmul %30, %32, %cst_44 {dimension_numbers = #tpu.dot_dimension_numbers<[1], [0], [0], [1], [0, 0, 1, 1], [], []>} : vector<256x192xbf16>, vector<192x64xbf16>, vector<256x64xf32> -> vector<256x64xf32>
    %34 = arith.addf %24, %33 : vector<256x64xf32>
    %35 = vector.extract_strided_slice %28 {offsets = [0, 1, 0, 0], sizes = [1, 8, 32, 192], strides = [1, 1, 1, 1]} : vector<1x10x32x192xbf16> to vector<1x8x32x192xbf16>
    %36 = vector.shape_cast %35 : vector<1x8x32x192xbf16> to vector<256x192xbf16>
    %c1_45 = arith.constant 1 : index
    %c0_46 = arith.constant 0 : index
    %c0_47 = arith.constant 0 : index
    %37 = vector.load %arg3[%c1_45, %c0_46, %c0_47] : memref<3x192x64xbf16, #tpu.memory_space<vmem>>, vector<1x192x64xbf16>
    %38 = vector.shape_cast %37 : vector<1x192x64xbf16> to vector<192x64xbf16>
    %cst_48 = arith.constant dense<0.000000e+00> : vector<256x64xf32>
    %39 = tpu.matmul %36, %38, %cst_48 {dimension_numbers = #tpu.dot_dimension_numbers<[1], [0], [0], [1], [0, 0, 1, 1], [], []>} : vector<256x192xbf16>, vector<192x64xbf16>, vector<256x64xf32> -> vector<256x64xf32>
    %40 = arith.addf %34, %39 : vector<256x64xf32>
    %41 = vector.extract_strided_slice %28 {offsets = [0, 2, 0, 0], sizes = [1, 8, 32, 192], strides = [1, 1, 1, 1]} : vector<1x10x32x192xbf16> to vector<1x8x32x192xbf16>
    %42 = vector.shape_cast %41 : vector<1x8x32x192xbf16> to vector<256x192xbf16>
    %c2_49 = arith.constant 2 : index
    %c0_50 = arith.constant 0 : index
    %c0_51 = arith.constant 0 : index
    %43 = vector.load %arg3[%c2_49, %c0_50, %c0_51] : memref<3x192x64xbf16, #tpu.memory_space<vmem>>, vector<1x192x64xbf16>
    %44 = vector.shape_cast %43 : vector<1x192x64xbf16> to vector<192x64xbf16>
    %cst_52 = arith.constant dense<0.000000e+00> : vector<256x64xf32>
    %45 = tpu.matmul %42, %44, %cst_52 {dimension_numbers = #tpu.dot_dimension_numbers<[1], [0], [0], [1], [0, 0, 1, 1], [], []>} : vector<256x192xbf16>, vector<192x64xbf16>, vector<256x64xf32> -> vector<256x64xf32>
    %46 = arith.addf %40, %45 : vector<256x64xf32>
    %47 = vector.shape_cast %46 : vector<256x64xf32> to vector<8x16x2x64xf32>
    %cst_53 = arith.constant dense<0xFF800000> : vector<8x16x64xf32>
    %48 = vector.multi_reduction <maximumf>, %47, %cst_53 [2] : vector<8x16x2x64xf32> to vector<8x16x64xf32>
    %49 = vector.shape_cast %48 : vector<8x16x64xf32> to vector<4x2x16x64xf32>
    %cst_54 = arith.constant dense<0xFF800000> : vector<4x16x64xf32>
    %50 = vector.multi_reduction <maximumf>, %49, %cst_54 [1] : vector<4x2x16x64xf32> to vector<4x16x64xf32>
    %51 = vector.shape_cast %50 : vector<4x16x64xf32> to vector<1x4x16x64xf32>
    %c0_55 = arith.constant 0 : index
    %c0_56 = arith.constant 0 : index
    %52 = vector.load %arg4[%c0_55, %c0_56] : memref<1x64xf32, #tpu.memory_space<vmem>>, vector<1x64xf32>
    %53 = vector.shape_cast %52 : vector<1x64xf32> to vector<1x1x1x64xf32>
    %54 = vector.broadcast %53 : vector<1x1x1x64xf32> to vector<1x4x16x64xf32>
    %55 = arith.addf %51, %54 : vector<1x4x16x64xf32>
    %cst_57 = arith.constant 0.000000e+00 : f32
    %56 = vector.broadcast %cst_57 : f32 to vector<1x4x16x64xf32>
    %57 = arith.maximumf %55, %56 : vector<1x4x16x64xf32>
    %58 = arith.truncf %57 : vector<1x4x16x64xf32> to vector<1x4x16x64xbf16>
    %c0_58 = arith.constant 0 : index
    %c0_59 = arith.constant 0 : index
    %c0_60 = arith.constant 0 : index
    %c0_61 = arith.constant 0 : index
    %59 = vector.load %arg5[%c0_58, %c0_59, %c0_60, %c0_61] : memref<1x4x16x64xbf16, #tpu.memory_space<vmem>>, vector<1x4x16x64xbf16>
    tpu.vector_store %arg5[%c0_58, %c0_59, %c0_60, %c0_61], %58 {strides = array<i32>} : memref<1x4x16x64xbf16, #tpu.memory_space<vmem>>, vector<1x4x16x64xbf16>,
    return
  }
  func.func @transform_0(%arg0: i32, %arg1: i32) -> (i32, i32, i32, i32) {
    %c0_i32 = arith.constant 0 : i32
    %c0_i32_0 = arith.constant 0 : i32
    %c0_i32_1 = arith.constant 0 : i32
    %c0_i32_2 = arith.constant 0 : i32
    return %arg0, %c0_i32, %c0_i32_0, %c0_i32_1 : i32, i32, i32, i32
  }
  func.func @transform_1(%arg0: i32, %arg1: i32) -> (i32, i32, i32) {
    %c0_i32 = arith.constant 0 : i32
    %c0_i32_0 = arith.constant 0 : i32
    %c0_i32_1 = arith.constant 0 : i32
    %c0_i32_2 = arith.constant 0 : i32
    return %c0_i32, %c0_i32_0, %c0_i32_1 : i32, i32, i32
  }
  func.func @transform_2(%arg0: i32, %arg1: i32) -> (i32, i32) {
    %c0_i32 = arith.constant 0 : i32
    %c0_i32_0 = arith.constant 0 : i32
    %c0_i32_1 = arith.constant 0 : i32
    return %c0_i32, %c0_i32_0 : i32, i32
  }
  func.func @transform_3(%arg0: i32, %arg1: i32) -> (i32, i32, i32, i32) {
    %c0_i32 = arith.constant 0 : i32
    %c0_i32_0 = arith.constant 0 : i32
    %c0_i32_1 = arith.constant 0 : i32
    return %arg0, %arg1, %c0_i32, %c0_i32_0 : i32, i32, i32, i32
  }
}

</mosaic_0001>

<llo_original>
// kernel: tpu_custom_call.1
$region0: #{tpu_custom_call.1}
  #allocation0 [shape = 'u32[]', space=smem, size = 0x4, offset = 0x4, fixed_abs, tag = 'smem constant byte address 0x4 - core index']
  #allocation1 [shape = 'u32[72,128]{1,0:T(1,128)}', space=vmem, size = 0x9000, scoped, tag = 'internal scratch']
  #allocation2 [shape = 'bf16[1,10,34,64]{3,2,1,0:T(8,128)(2,1)}', space=vmem, size = 0x19000, scoped, tag = 'scratch operand']
  %s0 = inlined_call_operand.hbm [shape: bf16[2,32,32,64], index: 0, kind: input, shape index: {}]
  %s1 = inlined_call_operand.vmem [shape: bf16[3,192,64], index: 1, kind: input, shape index: {}]
  %s2 = inlined_call_operand.vmem [shape: f32[1,64], index: 2, kind: input, shape index: {}]
  %s3 = inlined_call_operand.hbm [shape: bf16[2,16,16,64], index: 3, kind: output, shape index: {}]
  %s4 = sld [smem:[#allocation0]]
  $region49: #{tpu_custom_call.1} parent=0
    _
  %s6 = ssub.s32 1, %s4
  %s7 = scalar_select 0, %s6, %s4
  $region1: #{tpu_custom_call.1} parent=0
    #allocation3 [shape = 'u8[524288]{0}', space=vmem, size = 0x80000, scoped, tag = 'input window, operand 0']
    #allocation4 [shape = 's32[2]{0}', space=sflag, size = 0x8, scoped, tag = 'scoped memory for tpu_custom_call.1']
    #allocation5 [shape = 's32[2]{0}', space=sflag, size = 0x8, scoped, tag = 'scoped memory for tpu_custom_call.1']
    #allocation6 [shape = 'u8[32768]{0}', space=vmem, size = 0x8000, scoped, tag = 'output window, operand 0']
    %8 = vsyncpa [#allocation4], 0
    %s9 = scalar_lea.sflag [#allocation4], 1
    %10 = vsyncpa %s9, 0
    %11 = vsyncpa [#allocation5], 0
    %s12 = scalar_lea.sflag [#allocation5], 1
    %13 = vsyncpa %s12, 0
    loop: start=0, step=1, limit=10
    $region2: #{tpu_custom_call.1} parent=1 // loop_pre_header
      _
    $region3: #{tpu_custom_call.1} parent=1 // loop_header
      %s15 = sphi 0, %s19
      %p16 = scmp.ge.s32.totalorder %s15, 10
      %s22 = sphi 0, %s34
      %s23 = sphi 0, %s30
      %s24 = sphi 0, %s22
      %s25 = sphi 0, %s23
      %s26 = sphi 0, %s24
      %s27 = sphi 0, %s25
      %s37 = sphi 0, %s39
      %s40 = sphi 0, %s37
      %s41 = sphi 0, %s40
      %s57 = sphi 0, %s41
      %s61 = sphi 0, %s61
      %s63 = sphi 0, %s61
      %s64 = sphi 0, %s63
      %s78 = sphi 0, %s64
      %s82 = sphi 0, %s82
      %s84 = sphi 0, %s82
      %s85 = sphi 0, %s84
      %s99 = sphi 0, %s85
      %s107 = sphi 0, %s109
      %s110 = sphi 0, %s107
      %s111 = sphi 0, %s110
      %s127 = sphi 0, %s111
    $region4: #{tpu_custom_call.1} parent=1 // loop_header_branch
      %18 = sbr.rel (%p16) target = $region8
    $region5: #{tpu_custom_call.1} parent=1 // loop_body
      %s20 = ssub.s32 %s15, 1
      %s21 = ssub.s32 %s15, 2
      %s28 = sadd.s32 1, %s23
      %p29 = scmp.ge.s32.totalorder %s28, 4
      %s30 = scalar_select %p29, 0, %s28
      %s31 = sadd.s32 1, %s22
      %s32 = scalar_select %p29, %s31, %s22
      %p33 = scmp.ge.s32.totalorder %s32, 2
      %s34 = scalar_select %p33, 0, %s32
      %s35 = ssub.s32 %s22, %s34
      %p36 = scmp.eq.s32.totalorder %s35, 0
      %s38 = sadd.s32 %s37, 1
      %s39 = scalar_select %p36, %s37, %s38
      %p42 = pneg %p36
      %p43 = scmp.eq.s32.totalorder %s15, 7
      %p44 = por %p42, %p43
      %p45 = scmp.ne.s32.totalorder %s37, %s40
      %p46 = scmp.eq.s32.totalorder %s15, 0
      %p47 = por %p45, %p46
      %p48 = scmp.ne.s32.totalorder %s37, %s40
      %p49 = scmp.eq.s32.totalorder %s20, 7
      %p50 = por %p48, %p49
      %p51 = scmp.ne.s32.totalorder %s40, %s41
      %p52 = scmp.eq.s32.totalorder %s20, 0
      %p53 = por %p51, %p52
      %p54 = scmp.ne.s32.totalorder %s40, %s41
      %p55 = scmp.eq.s32.totalorder %s21, 7
      %p56 = por %p54, %p55
      %p58 = scmp.ne.s32.totalorder %s41, %s57
      %p59 = scmp.eq.s32.totalorder %s21, 0
      %p60 = por %p58, %p59
      %s62 = sadd.s32 %s61, 1
      %p65 = scmp.eq.s32.totalorder %s15, 7
      %p66 = scmp.ne.s32.totalorder %s61, %s63
      %p67 = scmp.eq.s32.totalorder %s15, 0
      %p68 = por %p66, %p67
      %p69 = scmp.ne.s32.totalorder %s61, %s63
      %p70 = scmp.eq.s32.totalorder %s20, 7
      %p71 = por %p69, %p70
      %p72 = scmp.ne.s32.totalorder %s63, %s64
      %p73 = scmp.eq.s32.totalorder %s20, 0
      %p74 = por %p72, %p73
      %p75 = scmp.ne.s32.totalorder %s63, %s64
      %p76 = scmp.eq.s32.totalorder %s21, 7
      %p77 = por %p75, %p76
      %p79 = scmp.ne.s32.totalorder %s64, %s78
      %p80 = scmp.eq.s32.totalorder %s21, 0
      %p81 = por %p79, %p80
      %s83 = sadd.s32 %s82, 1
      %p86 = scmp.eq.s32.totalorder %s15, 7
      %p87 = scmp.ne.s32.totalorder %s82, %s84
      %p88 = scmp.eq.s32.totalorder %s15, 0
      %p89 = por %p87, %p88
      %p90 = scmp.ne.s32.totalorder %s82, %s84
      %p91 = scmp.eq.s32.totalorder %s20, 7
      %p92 = por %p90, %p91
      %p93 = scmp.ne.s32.totalorder %s84, %s85
      %p94 = scmp.eq.s32.totalorder %s20, 0
      %p95 = por %p93, %p94
      %p96 = scmp.ne.s32.totalorder %s84, %s85
      %p97 = scmp.eq.s32.totalorder %s21, 7
      %p98 = por %p96, %p97
      %p100 = scmp.ne.s32.totalorder %s85, %s99
      %p101 = scmp.eq.s32.totalorder %s21, 0
      %p102 = por %p100, %p101
      %s103 = ssub.s32 %s22, %s34
      %s104 = ssub.s32 %s23, %s30
      %s105 = sor.u32 %s103, %s104
      %p106 = scmp.eq.s32.totalorder %s105, 0
      %s108 = sadd.s32 %s107, 1
      %s109 = scalar_select %p106, %s107, %s108
      %p112 = pneg %p106
      %p113 = scmp.eq.s32.totalorder %s15, 7
      %p114 = por %p112, %p113
      %p115 = scmp.ne.s32.totalorder %s107, %s110
      %p116 = scmp.eq.s32.totalorder %s15, 0
      %p117 = por %p115, %p116
      %p118 = scmp.ne.s32.totalorder %s107, %s110
      %p119 = scmp.eq.s32.totalorder %s20, 7
      %p120 = por %p118, %p119
      %p121 = scmp.ne.s32.totalorder %s110, %s111
      %p122 = scmp.eq.s32.totalorder %s20, 0
      %p123 = por %p121, %p122
      %p124 = scmp.ne.s32.totalorder %s110, %s111
      %p125 = scmp.eq.s32.totalorder %s21, 7
      %p126 = por %p124, %p125
      %p128 = scmp.ne.s32.totalorder %s111, %s127
      %p129 = scmp.eq.s32.totalorder %s21, 0
      %p130 = por %p128, %p129
      %p131 = scmp.le.s32.totalorder 1, %s15
      %p132 = scmp.lt.s32.totalorder %s15, 9
      %p133 = pnand %p131, %p132
      %p134 = pneg %p133
      // Predicated region
      $region9: #{tpu_custom_call.1} parent=5 // pred_check
        _
      $region10: #{tpu_custom_call.1} parent=5 // pred_check_branch
        %136 = sbr.rel (%p133) target = $region12
      $region11: #{tpu_custom_call.1} parent=5 // pred_region
        %s137 = ssub.s32 %s15, 1
        // Predicated region
        $region13: #{tpu_custom_call.1} parent=11 // pred_check
          %p138 = pneg %p74
        $region14: #{tpu_custom_call.1} parent=11 // pred_check_branch
          %140 = sbr.rel (%p138) target = $region16
        $region15: #{tpu_custom_call.1} parent=11 // pred_region
          _
        $region16: #{tpu_custom_call.1} parent=11 // pred_fallthru
          _
        // Predicated region
        $region17: #{tpu_custom_call.1} parent=11 // pred_check
          %p141 = pneg %p95
        $region18: #{tpu_custom_call.1} parent=11 // pred_check_branch
          %143 = sbr.rel (%p141) target = $region20
        $region19: #{tpu_custom_call.1} parent=11 // pred_region
          _
        $region20: #{tpu_custom_call.1} parent=11 // pred_fallthru
          _
      $region12: #{tpu_custom_call.1} parent=5 // pred_fallthru
        _
      %p144 = scmp.lt.s32.totalorder %s15, 8
      // Predicated region
      $region21: #{tpu_custom_call.1} parent=5 // pred_check
        %p145 = pneg %p144
      $region22: #{tpu_custom_call.1} parent=5 // pred_check_branch
        %147 = sbr.rel (%p145) target = $region24
      $region23: #{tpu_custom_call.1} parent=5 // pred_region
        // Predicated region
        $region25: #{tpu_custom_call.1} parent=23 // pred_check
          %p148 = pneg %p47
        $region26: #{tpu_custom_call.1} parent=23 // pred_check_branch
          %150 = sbr.rel (%p148) target = $region28
        $region27: #{tpu_custom_call.1} parent=23 // pred_region
          %s151 = sand.u32 %s37, 1
          %s152 = scalar_lea.sflag [#allocation4], %s151
          %s153 = sand.u32 %s37, 1
          %s154 = smul.addr %s153, 512
          %s155 = scalar_lea.vmem [#allocation3], %s154
          %157 = vsyncadd %s152, 0
          %s158 = smul.addr %s22, 128
          %s159 = smul.addr %s158, 4
          %s160 = scalar_lea.hbm %s0, %s159
          %s161 = sshll.u32 %s160, 4
          %s162 = int_to_ptr.hbm [resolvable:$true] %s161
          %s163 = sshll.u32 %s155, 4
          %s164 = int_to_ptr.vmem [resolvable:$true] %s163
          %169 = dma.hbm_to_vmem [thread:$0]  %s162, 8192, %s164, %s152, 64, 64, 4
        $region28: #{tpu_custom_call.1} parent=23 // pred_fallthru
          _
      $region24: #{tpu_custom_call.1} parent=5 // pred_fallthru
        _
      %p170 = scmp.le.s32.totalorder 1, %s15
      %p171 = scmp.lt.s32.totalorder %s15, 9
      %p172 = pnand %p170, %p171
      %p173 = pneg %p172
      // Predicated region
      $region29: #{tpu_custom_call.1} parent=5 // pred_check
        _
      $region30: #{tpu_custom_call.1} parent=5 // pred_check_branch
        %175 = sbr.rel (%p172) target = $region32
      $region31: #{tpu_custom_call.1} parent=5 // pred_region
        %s176 = ssub.s32 %s15, 1
        %s177 = sand.u32 %s40, 1
        %s178 = scalar_lea.sflag [#allocation4], %s177
        %s179 = sand.u32 %s40, 1
        %s180 = smul.addr %s179, 512
        %s181 = scalar_lea.vmem [#allocation3], %s180
        // Predicated region
        $region33: #{tpu_custom_call.1} parent=31 // pred_check
          %p182 = pneg %p53
        $region34: #{tpu_custom_call.1} parent=31 // pred_check_branch
          %184 = sbr.rel (%p182) target = $region36
        $region35: #{tpu_custom_call.1} parent=31 // pred_region
          %186 = dma.done %s178, 8192
        $region36: #{tpu_custom_call.1} parent=31 // pred_fallthru
          _
        %s187 = sand.u32 %s40, 1
        %s188 = scalar_lea.sflag [#allocation4], %s187
        %s189 = sand.u32 %s40, 1
        %s190 = smul.addr %s189, 512
        %s191 = scalar_lea.vmem [#allocation3], %s190
        %p192 = pneg %p53
        %p193 = pneg %p50
        %p194 = pneg %p74
        %p195 = pneg %p71
        %p196 = pneg %p95
        %p197 = pneg %p92
        %p198 = pneg %p123
        %p199 = pneg %p120
        %s200 = sand.u32 %s110, 1
        %s201 = scalar_lea.sflag [#allocation5], %s200
        %s202 = sand.u32 %s110, 1
        %s203 = smul.addr %s202, 32
        %s204 = scalar_lea.vmem [#allocation6], %s203
        %s205 = smul.u32 4, %s25
        %s207 = smul.u32 %s25, 8
        %vm208 = vcmask 516096
        %vm209 = vsmask.f32 256
        %vm210 = vmand %vm208, %vm209
        %v211 = vld [vmem:[#allocation2] sm:$0x1]
        %v212 = vsel %vm210, 0, %v211
        %213 = vst [vmem:[#allocation2] sm:$0x1] %v212
        %v214 = vld [vmem:[#allocation2 + $0x14] sm:$0x1]
        %v215 = vsel %vm210, 0, %v214
        %216 = vst [vmem:[#allocation2 + $0x14] sm:$0x1] %v215
        %v217 = vld [vmem:[#allocation2 + $0x28] sm:$0x1]
        %v218 = vsel %vm210, 0, %v217
        %219 = vst [vmem:[#allocation2 + $0x28] sm:$0x1] %v218
        %v220 = vld [vmem:[#allocation2 + $0x3c] sm:$0x1]
        %v221 = vsel %vm210, 0, %v220
        %222 = vst [vmem:[#allocation2 + $0x3c] sm:$0x1] %v221
        %v223 = vld [vmem:[#allocation2 + $0x50] sm:$0x1]
        %v224 = vsel %vm210, 0, %v223
        %225 = vst [vmem:[#allocation2 + $0x50] sm:$0x1] %v224
        %v226 = vld [vmem:[#allocation2 + $0x64] sm:$0x1]
        %v227 = vsel %vm210, 0, %v226
        %228 = vst [vmem:[#allocation2 + $0x64] sm:$0x1] %v227
        %v229 = vld [vmem:[#allocation2 + $0x78] sm:$0x1]
        %v230 = vsel %vm210, 0, %v229
        %231 = vst [vmem:[#allocation2 + $0x78] sm:$0x1] %v230
        %v232 = vld [vmem:[#allocation2 + $0x8c] sm:$0x1]
        %v233 = vsel %vm210, 0, %v232
        %234 = vst [vmem:[#allocation2 + $0x8c] sm:$0x1] %v233
        %v235 = vld [vmem:[#allocation2 + $0xa0] sm:$0x1]
        %v236 = vsel %vm210, 0, %v235
        %237 = vst [vmem:[#allocation2 + $0xa0] sm:$0x1] %v236
        %v238 = vld [vmem:[#allocation2 + $0xb4] sm:$0x1]
        %v239 = vsel %vm210, 0, %v238
        %240 = vst [vmem:[#allocation2 + $0xb4] sm:$0x1] %v239
        %vm241 = vsmask.f32 7938
        %vm242 = vmand %vm208, %vm241
        %v243 = vld [vmem:[#allocation2 + $0x10] sm:$0x1]
        %v244 = vsel %vm242, 0, %v243
        %245 = vst [vmem:[#allocation2 + $0x10] sm:$0x1] %v244
        %v246 = vld [vmem:[#allocation2 + $0x24] sm:$0x1]
        %v247 = vsel %vm242, 0, %v246
        %248 = vst [vmem:[#allocation2 + $0x24] sm:$0x1] %v247
        %v249 = vld [vmem:[#allocation2 + $0x38] sm:$0x1]
        %v250 = vsel %vm242, 0, %v249
        %251 = vst [vmem:[#allocation2 + $0x38] sm:$0x1] %v250
        %v252 = vld [vmem:[#allocation2 + $0x4c] sm:$0x1]
        %v253 = vsel %vm242, 0, %v252
        %254 = vst [vmem:[#allocation2 + $0x4c] sm:$0x1] %v253
        %v255 = vld [vmem:[#allocation2 + $0x60] sm:$0x1]
        %v256 = vsel %vm242, 0, %v255
        %257 = vst [vmem:[#allocation2 + $0x60] sm:$0x1] %v256
        %v258 = vld [vmem:[#allocation2 + $0x74] sm:$0x1]
        %v259 = vsel %vm242, 0, %v258
        %260 = vst [vmem:[#allocation2 + $0x74] sm:$0x1] %v259
        %v261 = vld [vmem:[#allocation2 + $0x88] sm:$0x1]
        %v262 = vsel %vm242, 0, %v261
        %263 = vst [vmem:[#allocation2 + $0x88] sm:$0x1] %v262
        %v264 = vld [vmem:[#allocation2 + $0x9c] sm:$0x1]
        %v265 = vsel %vm242, 0, %v264
        %266 = vst [vmem:[#allocation2 + $0x9c] sm:$0x1] %v265
        %v267 = vld [vmem:[#allocation2 + $0xb0] sm:$0x1]
        %v268 = vsel %vm242, 0, %v267
        %269 = vst [vmem:[#allocation2 + $0xb0] sm:$0x1] %v268
        %v270 = vld [vmem:[#allocation2 + $0xc4] sm:$0x1]
        %v271 = vsel %vm242, 0, %v270
        %272 = vst [vmem:[#allocation2 + $0xc4] sm:$0x1] %v271
        %s273 = smul.u32 %s207, 4
        %s274 = smul.addr %s273, 4
        %s275 = scalar_lea.vmem %s181, %s274 [#allocation3]
        %v276 = vld [vmem:[%s275] sm:$0xf]
        %v277 = vld [vmem:[%s275 + $0x4] sm:$0xf]
        %v278 = vld [vmem:[%s275 + $0x8] sm:$0xf]
        %v279 = vld [vmem:[%s275 + $0xc] sm:$0xf]
        %v280 = vld [vmem:[%s275 + $0x10] sm:$0xf]
        %v281 = vld [vmem:[%s275 + $0x14] sm:$0xf]
        %v282 = vld [vmem:[%s275 + $0x18] sm:$0xf]
        %v283 = vld [vmem:[%s275 + $0x1c] sm:$0xf]
        %v284 = vld [vmem:[%s275 + $0x20] sm:$0xf]
        %v285 = vld [vmem:[%s275 + $0x24] sm:$0xf]
        %v286 = vld [vmem:[%s275 + $0x28] sm:$0xf]
        %v287 = vld [vmem:[%s275 + $0x2c] sm:$0xf]
        %v288 = vld [vmem:[%s275 + $0x30] sm:$0xf]
        %v289 = vld [vmem:[%s275 + $0x34] sm:$0xf]
        %v290 = vld [vmem:[%s275 + $0x38] sm:$0xf]
        %v291 = vld [vmem:[%s275 + $0x3c] sm:$0xf]
        %v292 = vld [vmem:[%s275 + $0x40] sm:$0xf]
        %v293 = vld [vmem:[%s275 + $0x44] sm:$0xf]
        %v294 = vld [vmem:[%s275 + $0x48] sm:$0xf]
        %v295 = vld [vmem:[%s275 + $0x4c] sm:$0xf]
        %v296 = vld [vmem:[%s275 + $0x50] sm:$0xf]
        %v297 = vld [vmem:[%s275 + $0x54] sm:$0xf]
        %v298 = vld [vmem:[%s275 + $0x58] sm:$0xf]
        %v299 = vld [vmem:[%s275 + $0x5c] sm:$0xf]
        %v300 = vld [vmem:[%s275 + $0x60] sm:$0xf]
        %v301 = vld [vmem:[%s275 + $0x64] sm:$0xf]
        %v302 = vld [vmem:[%s275 + $0x68] sm:$0xf]
        %v303 = vld [vmem:[%s275 + $0x6c] sm:$0xf]
        %v304 = vld [vmem:[%s275 + $0x70] sm:$0xf]
        %v305 = vld [vmem:[%s275 + $0x74] sm:$0xf]
        %v306 = vld [vmem:[%s275 + $0x78] sm:$0xf]
        %v307 = vld [vmem:[%s275 + $0x7c] sm:$0xf]
        %vm308 = vsmask.f32 4368
        %vm309 = vmor %vm209, %vm308
        %v311 = vshrl.u32 %v276, 16
        %v313 = vrot.slane %v311, 7
        %v314 = vshll.u32 %v276, 16
        %v316 = vor.u32 %v313, %v314
        %v317 = vrot.slane %v313, 4
        %v319 = vshrl.u32 %v277, 16
        %v321 = vrot.slane %v319, 7
        %v322 = vshll.u32 %v277, 16
        %v324 = vor.u32 %v321, %v322
        %v325 = vsel %vm309, %v317, %v324
        %v326 = vrot.slane %v321, 4
        %v328 = vshrl.u32 %v278, 16
        %v330 = vrot.slane %v328, 7
        %v331 = vshll.u32 %v278, 16
        %v333 = vor.u32 %v330, %v331
        %v334 = vsel %vm309, %v326, %v333
        %v335 = vrot.slane %v330, 4
        %v337 = vshrl.u32 %v279, 16
        %v339 = vrot.slane %v337, 7
        %v340 = vshll.u32 %v279, 16
        %v342 = vor.u32 %v339, %v340
        %v343 = vsel %vm309, %v335, %v342
        %v344 = vrot.slane %v339, 4
        %v346 = vshrl.u32 %v280, 16
        %v348 = vrot.slane %v346, 7
        %v349 = vshll.u32 %v280, 16
        %v351 = vor.u32 %v348, %v349
        %v352 = vrot.slane %v348, 4
        %v354 = vshrl.u32 %v281, 16
        %v356 = vrot.slane %v354, 7
        %v357 = vshll.u32 %v281, 16
        %v359 = vor.u32 %v356, %v357
        %v360 = vsel %vm309, %v352, %v359
        %v361 = vrot.slane %v356, 4
        %v363 = vshrl.u32 %v282, 16
        %v365 = vrot.slane %v363, 7
        %v366 = vshll.u32 %v282, 16
        %v368 = vor.u32 %v365, %v366
        %v369 = vsel %vm309, %v361, %v368
        %v370 = vrot.slane %v365, 4
        %v372 = vshrl.u32 %v283, 16
        %v374 = vrot.slane %v372, 7
        %v375 = vshll.u32 %v283, 16
        %v377 = vor.u32 %v374, %v375
        %v378 = vsel %vm309, %v370, %v377
        %v379 = vrot.slane %v374, 4
        %v381 = vshrl.u32 %v284, 16
        %v383 = vrot.slane %v381, 7
        %v384 = vshll.u32 %v284, 16
        %v386 = vor.u32 %v383, %v384
        %v387 = vrot.slane %v383, 4
        %v389 = vshrl.u32 %v285, 16
        %v391 = vrot.slane %v389, 7
        %v392 = vshll.u32 %v285, 16
        %v394 = vor.u32 %v391, %v392
        %v395 = vsel %vm309, %v387, %v394
        %v396 = vrot.slane %v391, 4
        %v398 = vshrl.u32 %v286, 16
        %v400 = vrot.slane %v398, 7
        %v401 = vshll.u32 %v286, 16
        %v403 = vor.u32 %v400, %v401
        %v404 = vsel %vm309, %v396, %v403
        %v405 = vrot.slane %v400, 4
        %v407 = vshrl.u32 %v287, 16
        %v409 = vrot.slane %v407, 7
        %v410 = vshll.u32 %v287, 16
        %v412 = vor.u32 %v409, %v410
        %v413 = vsel %vm309, %v405, %v412
        %v414 = vrot.slane %v409, 4
        %v416 = vshrl.u32 %v288, 16
        %v418 = vrot.slane %v416, 7
        %v419 = vshll.u32 %v288, 16
        %v421 = vor.u32 %v418, %v419
        %v422 = vrot.slane %v418, 4
        %v424 = vshrl.u32 %v289, 16
        %v426 = vrot.slane %v424, 7
        %v427 = vshll.u32 %v289, 16
        %v429 = vor.u32 %v426, %v427
        %v430 = vsel %vm309, %v422, %v429
        %v431 = vrot.slane %v426, 4
        %v433 = vshrl.u32 %v290, 16
        %v435 = vrot.slane %v433, 7
        %v436 = vshll.u32 %v290, 16
        %v438 = vor.u32 %v435, %v436
        %v439 = vsel %vm309, %v431, %v438
        %v440 = vrot.slane %v435, 4
        %v442 = vshrl.u32 %v291, 16
        %v444 = vrot.slane %v442, 7
        %v445 = vshll.u32 %v291, 16
        %v447 = vor.u32 %v444, %v445
        %v448 = vsel %vm309, %v440, %v447
        %v449 = vrot.slane %v444, 4
        %v451 = vshrl.u32 %v292, 16
        %v453 = vrot.slane %v451, 7
        %v454 = vshll.u32 %v292, 16
        %v456 = vor.u32 %v453, %v454
        %v457 = vrot.slane %v453, 4
        %v459 = vshrl.u32 %v293, 16
        %v461 = vrot.slane %v459, 7
        %v462 = vshll.u32 %v293, 16
        %v464 = vor.u32 %v461, %v462
        %v465 = vsel %vm309, %v457, %v464
        %v466 = vrot.slane %v461, 4
        %v468 = vshrl.u32 %v294, 16
        %v470 = vrot.slane %v468, 7
        %v471 = vshll.u32 %v294, 16
        %v473 = vor.u32 %v470, %v471
        %v474 = vsel %vm309, %v466, %v473
        %v475 = vrot.slane %v470, 4
        %v477 = vshrl.u32 %v295, 16
        %v479 = vrot.slane %v477, 7
        %v480 = vshll.u32 %v295, 16
        %v482 = vor.u32 %v479, %v480
        %v483 = vsel %vm309, %v475, %v482
        %v484 = vrot.slane %v479, 4
        %v486 = vshrl.u32 %v296, 16
        %v488 = vrot.slane %v486, 7
        %v489 = vshll.u32 %v296, 16
        %v491 = vor.u32 %v488, %v489
        %v492 = vrot.slane %v488, 4
        %v494 = vshrl.u32 %v297, 16
        %v496 = vrot.slane %v494, 7
        %v497 = vshll.u32 %v297, 16
        %v499 = vor.u32 %v496, %v497
        %v500 = vsel %vm309, %v492, %v499
        %v501 = vrot.slane %v496, 4
        %v503 = vshrl.u32 %v298, 16
        %v505 = vrot.slane %v503, 7
        %v506 = vshll.u32 %v298, 16
        %v508 = vor.u32 %v505, %v506
        %v509 = vsel %vm309, %v501, %v508
        %v510 = vrot.slane %v505, 4
        %v512 = vshrl.u32 %v299, 16
        %v514 = vrot.slane %v512, 7
        %v515 = vshll.u32 %v299, 16
        %v517 = vor.u32 %v514, %v515
        %v518 = vsel %vm309, %v510, %v517
        %v519 = vrot.slane %v514, 4
        %v521 = vshrl.u32 %v300, 16
        %v523 = vrot.slane %v521, 7
        %v524 = vshll.u32 %v300, 16
        %v526 = vor.u32 %v523, %v524
        %v527 = vrot.slane %v523, 4
        %v529 = vshrl.u32 %v301, 16
        %v531 = vrot.slane %v529, 7
        %v532 = vshll.u32 %v301, 16
        %v534 = vor.u32 %v531, %v532
        %v535 = vsel %vm309, %v527, %v534
        %v536 = vrot.slane %v531, 4
        %v538 = vshrl.u32 %v302, 16
        %v540 = vrot.slane %v538, 7
        %v541 = vshll.u32 %v302, 16
        %v543 = vor.u32 %v540, %v541
        %v544 = vsel %vm309, %v536, %v543
        %v545 = vrot.slane %v540, 4
        %v547 = vshrl.u32 %v303, 16
        %v549 = vrot.slane %v547, 7
        %v550 = vshll.u32 %v303, 16
        %v552 = vor.u32 %v549, %v550
        %v553 = vsel %vm309, %v545, %v552
        %v554 = vrot.slane %v549, 4
        %v556 = vshrl.u32 %v304, 16
        %v558 = vrot.slane %v556, 7
        %v559 = vshll.u32 %v304, 16
        %v561 = vor.u32 %v558, %v559
        %v562 = vrot.slane %v558, 4
        %v564 = vshrl.u32 %v305, 16
        %v566 = vrot.slane %v564, 7
        %v567 = vshll.u32 %v305, 16
        %v569 = vor.u32 %v566, %v567
        %v570 = vsel %vm309, %v562, %v569
        %v571 = vrot.slane %v566, 4
        %v573 = vshrl.u32 %v306, 16
        %v575 = vrot.slane %v573, 7
        %v576 = vshll.u32 %v306, 16
        %v578 = vor.u32 %v575, %v576
        %v579 = vsel %vm309, %v571, %v578
        %v580 = vrot.slane %v575, 4
        %v582 = vshrl.u32 %v307, 16
        %v584 = vrot.slane %v582, 7
        %v585 = vshll.u32 %v307, 16
        %v587 = vor.u32 %v584, %v585
        %v588 = vsel %vm309, %v580, %v587
        %v589 = vrot.slane %v584, 4
        %s630 = scalar_lea.vmem [#allocation2], 20
        %vm631 = vcmask 519168
        %vm632 = vmand %vm631, %vm241
        %v633 = vld [vmem:[%s630] sm:$0xf]
        %v634 = vsel %vm632, %v316, %v633
        %635 = vst [vmem:[%s630] sm:$0xf] %v634
        %vm636 = vcmask 519168
        %637 = vst.msk [vmem:[%s630 + $0x4] sm:$0xf] %vm636, %v325
        %638 = vst.msk [vmem:[%s630 + $0x8] sm:$0xf] %vm636, %v334
        %639 = vst.msk [vmem:[%s630 + $0xc] sm:$0xf] %vm636, %v343
        %v640 = vld [vmem:[%s630 + $0x10] sm:$0x1]
        %v641 = vsel %vm210, %v344, %v640
        %642 = vst [vmem:[%s630 + $0x10] sm:$0x1] %v641
        %v643 = vld [vmem:[%s630 + $0x14] sm:$0xf]
        %v644 = vsel %vm632, %v351, %v643
        %645 = vst [vmem:[%s630 + $0x14] sm:$0xf] %v644
        %646 = vst.msk [vmem:[%s630 + $0x18] sm:$0xf] %vm636, %v360
        %647 = vst.msk [vmem:[%s630 + $0x1c] sm:$0xf] %vm636, %v369
        %648 = vst.msk [vmem:[%s630 + $0x20] sm:$0xf] %vm636, %v378
        %v649 = vld [vmem:[%s630 + $0x24] sm:$0x1]
        %v650 = vsel %vm210, %v379, %v649
        %651 = vst [vmem:[%s630 + $0x24] sm:$0x1] %v650
        %v652 = vld [vmem:[%s630 + $0x28] sm:$0xf]
        %v653 = vsel %vm632, %v386, %v652
        %654 = vst [vmem:[%s630 + $0x28] sm:$0xf] %v653
        %655 = vst.msk [vmem:[%s630 + $0x2c] sm:$0xf] %vm636, %v395
        %656 = vst.msk [vmem:[%s630 + $0x30] sm:$0xf] %vm636, %v404
        %657 = vst.msk [vmem:[%s630 + $0x34] sm:$0xf] %vm636, %v413
        %v658 = vld [vmem:[%s630 + $0x38] sm:$0x1]
        %v659 = vsel %vm210, %v414, %v658
        %660 = vst [vmem:[%s630 + $0x38] sm:$0x1] %v659
        %v661 = vld [vmem:[%s630 + $0x3c] sm:$0xf]
        %v662 = vsel %vm632, %v421, %v661
        %663 = vst [vmem:[%s630 + $0x3c] sm:$0xf] %v662
        %664 = vst.msk [vmem:[%s630 + $0x40] sm:$0xf] %vm636, %v430
        %665 = vst.msk [vmem:[%s630 + $0x44] sm:$0xf] %vm636, %v439
        %666 = vst.msk [vmem:[%s630 + $0x48] sm:$0xf] %vm636, %v448
        %v667 = vld [vmem:[%s630 + $0x4c] sm:$0x1]
        %v668 = vsel %vm210, %v449, %v667
        %669 = vst [vmem:[%s630 + $0x4c] sm:$0x1] %v668
        %v670 = vld [vmem:[%s630 + $0x50] sm:$0xf]
        %v671 = vsel %vm632, %v456, %v670
        %672 = vst [vmem:[%s630 + $0x50] sm:$0xf] %v671
        %673 = vst.msk [vmem:[%s630 + $0x54] sm:$0xf] %vm636, %v465
        %674 = vst.msk [vmem:[%s630 + $0x58] sm:$0xf] %vm636, %v474
        %675 = vst.msk [vmem:[%s630 + $0x5c] sm:$0xf] %vm636, %v483
        %v676 = vld [vmem:[%s630 + $0x60] sm:$0x1]
        %v677 = vsel %vm210, %v484, %v676
        %678 = vst [vmem:[%s630 + $0x60] sm:$0x1] %v677
        %v679 = vld [vmem:[%s630 + $0x64] sm:$0xf]
        %v680 = vsel %vm632, %v491, %v679
        %681 = vst [vmem:[%s630 + $0x64] sm:$0xf] %v680
        %682 = vst.msk [vmem:[%s630 + $0x68] sm:$0xf] %vm636, %v500
        %683 = vst.msk [vmem:[%s630 + $0x6c] sm:$0xf] %vm636, %v509
        %684 = vst.msk [vmem:[%s630 + $0x70] sm:$0xf] %vm636, %v518
        %v685 = vld [vmem:[%s630 + $0x74] sm:$0x1]
        %v686 = vsel %vm210, %v519, %v685
        %687 = vst [vmem:[%s630 + $0x74] sm:$0x1] %v686
        %v688 = vld [vmem:[%s630 + $0x78] sm:$0xf]
        %v689 = vsel %vm632, %v526, %v688
        %690 = vst [vmem:[%s630 + $0x78] sm:$0xf] %v689
        %691 = vst.msk [vmem:[%s630 + $0x7c] sm:$0xf] %vm636, %v535
        %692 = vst.msk [vmem:[%s630 + $0x80] sm:$0xf] %vm636, %v544
        %693 = vst.msk [vmem:[%s630 + $0x84] sm:$0xf] %vm636, %v553
        %v694 = vld [vmem:[%s630 + $0x88] sm:$0x1]
        %v695 = vsel %vm210, %v554, %v694
        %696 = vst [vmem:[%s630 + $0x88] sm:$0x1] %v695
        %v697 = vld [vmem:[%s630 + $0x8c] sm:$0xf]
        %v698 = vsel %vm632, %v561, %v697
        %699 = vst [vmem:[%s630 + $0x8c] sm:$0xf] %v698
        %700 = vst.msk [vmem:[%s630 + $0x90] sm:$0xf] %vm636, %v570
        %701 = vst.msk [vmem:[%s630 + $0x94] sm:$0xf] %vm636, %v579
        %702 = vst.msk [vmem:[%s630 + $0x98] sm:$0xf] %vm636, %v588
        %v703 = vld [vmem:[%s630 + $0x9c] sm:$0x1]
        %v704 = vsel %vm210, %v589, %v703
        %705 = vst [vmem:[%s630 + $0x9c] sm:$0x1] %v704
        %s706 = ssub.s32 %s207, 1
        %p707 = scmp.gt.s32.totalorder %s706, 0
        %s708 = scalar_select %p707, %s706, 0
        %s709 = sadd.s32 %s207, 8
        %p710 = scmp.lt.s32.totalorder %s709, 31
        %s711 = scalar_select %p710, %s709, 31
        %p712 = scmp.gt.s32.totalorder %s207, 0
        %s713 = smul.u32 %s708, 4
        %s714 = smul.addr %s713, 4
        %s715 = scalar_lea.vmem %s181, %s714 [#allocation3]
        %v716 = vld [vmem:[%s715] sm:$0xf]
        %v717 = vld [vmem:[%s715 + $0x4] sm:$0xf]
        %v718 = vld [vmem:[%s715 + $0x8] sm:$0xf]
        %v719 = vld [vmem:[%s715 + $0xc] sm:$0xf]
        %s720 = scalar_select %p712, 1, 0
        %v721 = vstv %s720
        %vm722 = vcmp.eq.s32.totalorder %v721, 1
        %v723 = vsel %vm722, %v716, 0
        %v724 = vsel %vm722, %v717, 0
        %v725 = vsel %vm722, %v718, 0
        %v726 = vsel %vm722, %v719, 0
        %p727 = scmp.lt.s32.totalorder %s709, 32
        %s728 = smul.u32 %s711, 4
        %s729 = smul.addr %s728, 4
        %s730 = scalar_lea.vmem %s181, %s729 [#allocation3]
        %v731 = vld [vmem:[%s730] sm:$0xf]
        %v732 = vld [vmem:[%s730 + $0x4] sm:$0xf]
        %v733 = vld [vmem:[%s730 + $0x8] sm:$0xf]
        %v734 = vld [vmem:[%s730 + $0xc] sm:$0xf]
        %s735 = scalar_select %p727, 1, 0
        %v736 = vstv %s735
        %vm737 = vcmp.eq.s32.totalorder %v736, 1
        %v738 = vsel %vm737, %v731, 0
        %v739 = vsel %vm737, %v732, 0
        %v740 = vsel %vm737, %v733, 0
        %v741 = vsel %vm737, %v734, 0
        %v743 = vshrl.u32 %v723, 16
        %v745 = vrot.slane %v743, 7
        %v746 = vshll.u32 %v723, 16
        %v748 = vor.u32 %v745, %v746
        %v749 = vrot.slane %v745, 4
        %v751 = vshrl.u32 %v724, 16
        %v753 = vrot.slane %v751, 7
        %v754 = vshll.u32 %v724, 16
        %v756 = vor.u32 %v753, %v754
        %v757 = vsel %vm309, %v749, %v756
        %v758 = vrot.slane %v753, 4
        %v760 = vshrl.u32 %v725, 16
        %v762 = vrot.slane %v760, 7
        %v763 = vshll.u32 %v725, 16
        %v765 = vor.u32 %v762, %v763
        %v766 = vsel %vm309, %v758, %v765
        %v767 = vrot.slane %v762, 4
        %v769 = vshrl.u32 %v726, 16
        %v771 = vrot.slane %v769, 7
        %v772 = vshll.u32 %v726, 16
        %v774 = vor.u32 %v771, %v772
        %v775 = vsel %vm309, %v767, %v774
        %v776 = vrot.slane %v771, 4
        %v782 = vld [vmem:[#allocation2] sm:$0xf]
        %v783 = vsel %vm632, %v748, %v782
        %784 = vst [vmem:[#allocation2] sm:$0xf] %v783
        %785 = vst.msk [vmem:[#allocation2 + $0x4] sm:$0xf] %vm636, %v757
        %786 = vst.msk [vmem:[#allocation2 + $0x8] sm:$0xf] %vm636, %v766
        %787 = vst.msk [vmem:[#allocation2 + $0xc] sm:$0xf] %vm636, %v775
        %v788 = vld [vmem:[#allocation2 + $0x10] sm:$0x1]
        %v789 = vsel %vm210, %v776, %v788
        %790 = vst [vmem:[#allocation2 + $0x10] sm:$0x1] %v789
        %v792 = vshrl.u32 %v738, 16
        %v794 = vrot.slane %v792, 7
        %v795 = vshll.u32 %v738, 16
        %v797 = vor.u32 %v794, %v795
        %v798 = vrot.slane %v794, 4
        %v800 = vshrl.u32 %v739, 16
        %v802 = vrot.slane %v800, 7
        %v803 = vshll.u32 %v739, 16
        %v805 = vor.u32 %v802, %v803
        %v806 = vsel %vm309, %v798, %v805
        %v807 = vrot.slane %v802, 4
        %v809 = vshrl.u32 %v740, 16
        %v811 = vrot.slane %v809, 7
        %v812 = vshll.u32 %v740, 16
        %v814 = vor.u32 %v811, %v812
        %v815 = vsel %vm309, %v807, %v814
        %v816 = vrot.slane %v811, 4
        %v818 = vshrl.u32 %v741, 16
        %v820 = vrot.slane %v818, 7
        %v821 = vshll.u32 %v741, 16
        %v823 = vor.u32 %v820, %v821
        %v824 = vsel %vm309, %v816, %v823
        %v825 = vrot.slane %v820, 4
        %s831 = scalar_lea.vmem [#allocation2], 180
        %v832 = vld [vmem:[%s831] sm:$0xf]
        %v833 = vsel %vm632, %v797, %v832
        %834 = vst [vmem:[%s831] sm:$0xf] %v833
        %835 = vst.msk [vmem:[%s831 + $0x4] sm:$0xf] %vm636, %v806
        %836 = vst.msk [vmem:[%s831 + $0x8] sm:$0xf] %vm636, %v815
        %837 = vst.msk [vmem:[%s831 + $0xc] sm:$0xf] %vm636, %v824
        %v838 = vld [vmem:[%s831 + $0x10] sm:$0x1]
        %v839 = vsel %vm210, %v825, %v838
        %840 = vst [vmem:[%s831 + $0x10] sm:$0x1] %v839
        %v841 = vld [vmem:[#allocation2] sm:$0xf]
        %v842 = vld [vmem:[#allocation2 + $0x4] sm:$0xf]
        %v843 = vld [vmem:[#allocation2 + $0x8] sm:$0xf]
        %v844 = vld [vmem:[#allocation2 + $0xc] sm:$0xf]
        %v845 = vld [vmem:[#allocation2 + $0x14] sm:$0xf]
        %v846 = vld [vmem:[#allocation2 + $0x18] sm:$0xf]
        %v847 = vld [vmem:[#allocation2 + $0x1c] sm:$0xf]
        %v848 = vld [vmem:[#allocation2 + $0x20] sm:$0xf]
        %v849 = vld [vmem:[#allocation2 + $0x28] sm:$0xf]
        %v850 = vld [vmem:[#allocation2 + $0x2c] sm:$0xf]
        %v851 = vld [vmem:[#allocation2 + $0x30] sm:$0xf]
        %v852 = vld [vmem:[#allocation2 + $0x34] sm:$0xf]
        %v853 = vld [vmem:[#allocation2 + $0x3c] sm:$0xf]
        %v854 = vld [vmem:[#allocation2 + $0x40] sm:$0xf]
        %v855 = vld [vmem:[#allocation2 + $0x44] sm:$0xf]
        %v856 = vld [vmem:[#allocation2 + $0x48] sm:$0xf]
        %v857 = vld [vmem:[#allocation2 + $0x50] sm:$0xf]
        %v858 = vld [vmem:[#allocation2 + $0x54] sm:$0xf]
        %v859 = vld [vmem:[#allocation2 + $0x58] sm:$0xf]
        %v860 = vld [vmem:[#allocation2 + $0x5c] sm:$0xf]
        %v861 = vld [vmem:[#allocation2 + $0x64] sm:$0xf]
        %v862 = vld [vmem:[#allocation2 + $0x68] sm:$0xf]
        %v863 = vld [vmem:[#allocation2 + $0x6c] sm:$0xf]
        %v864 = vld [vmem:[#allocation2 + $0x70] sm:$0xf]
        %v865 = vld [vmem:[#allocation2 + $0x78] sm:$0xf]
        %v866 = vld [vmem:[#allocation2 + $0x7c] sm:$0xf]
        %v867 = vld [vmem:[#allocation2 + $0x80] sm:$0xf]
        %v868 = vld [vmem:[#allocation2 + $0x84] sm:$0xf]
        %v869 = vld [vmem:[#allocation2 + $0x8c] sm:$0xf]
        %v870 = vld [vmem:[#allocation2 + $0x90] sm:$0xf]
        %v871 = vld [vmem:[#allocation2 + $0x94] sm:$0xf]
        %v872 = vld [vmem:[#allocation2 + $0x98] sm:$0xf]
        %v873 = vld [vmem:[#allocation2 + $0xa0] sm:$0xf]
        %v874 = vld [vmem:[#allocation2 + $0xa4] sm:$0xf]
        %v875 = vld [vmem:[#allocation2 + $0xa8] sm:$0xf]
        %v876 = vld [vmem:[#allocation2 + $0xac] sm:$0xf]
        %v877 = vld [vmem:[#allocation2 + $0xb4] sm:$0xf]
        %v878 = vld [vmem:[#allocation2 + $0xb8] sm:$0xf]
        %v879 = vld [vmem:[#allocation2 + $0xbc] sm:$0xf]
        %v880 = vld [vmem:[#allocation2 + $0xc0] sm:$0xf]
        %v881 = vld [vmem:[#allocation2 + $0x10] sm:$0x1]
        %v882 = vld [vmem:[#allocation2 + $0x24] sm:$0x1]
        %v883 = vld [vmem:[#allocation2 + $0x38] sm:$0x1]
        %v884 = vld [vmem:[#allocation2 + $0x4c] sm:$0x1]
        %v885 = vld [vmem:[#allocation2 + $0x60] sm:$0x1]
        %v886 = vld [vmem:[#allocation2 + $0x74] sm:$0x1]
        %v887 = vld [vmem:[#allocation2 + $0x88] sm:$0x1]
        %v888 = vld [vmem:[#allocation2 + $0x9c] sm:$0x1]
        %v889 = vld [vmem:[#allocation2 + $0xb0] sm:$0x1]
        %v890 = vld [vmem:[#allocation2 + $0xc4] sm:$0x1]
        %v891 = vld [vmem:[#allocation2] sm:$0xe]
        %v892 = vld [vmem:[#allocation2 + $0x14] sm:$0xe]
        %v893 = vld [vmem:[#allocation2 + $0x28] sm:$0xe]
        %v894 = vld [vmem:[#allocation2 + $0x3c] sm:$0xe]
        %v895 = vld [vmem:[#allocation2 + $0x50] sm:$0xe]
        %v896 = vld [vmem:[#allocation2 + $0x64] sm:$0xe]
        %v897 = vld [vmem:[#allocation2 + $0x78] sm:$0xe]
        %v898 = vld [vmem:[#allocation2 + $0x8c] sm:$0xe]
        %v899 = vld [vmem:[#allocation2 + $0xa0] sm:$0xe]
        %v900 = vld [vmem:[#allocation2 + $0xb4] sm:$0xe]
        %v941 = vunpack.c.l.b16 %v841
        %v942 = vunpack.c.l.b16 %v842
        %v943 = vunpack.c.l.b16 %v843
        %v944 = vunpack.c.l.b16 %v844
        %v945 = vunpack.c.l.b16 %v845
        %v946 = vunpack.c.l.b16 %v846
        %v947 = vunpack.c.l.b16 %v847
        %v948 = vunpack.c.l.b16 %v848
        %v949 = vunpack.c.l.b16 %v849
        %v950 = vunpack.c.l.b16 %v850
        %v951 = vunpack.c.l.b16 %v851
        %v952 = vunpack.c.l.b16 %v852
        %v953 = vunpack.c.l.b16 %v853
        %v954 = vunpack.c.l.b16 %v854
        %v955 = vunpack.c.l.b16 %v855
        %v956 = vunpack.c.l.b16 %v856
        %v957 = vunpack.c.l.b16 %v857
        %v958 = vunpack.c.l.b16 %v858
        %v959 = vunpack.c.l.b16 %v859
        %v960 = vunpack.c.l.b16 %v860
        %v961 = vunpack.c.l.b16 %v861
        %v962 = vunpack.c.l.b16 %v862
        %v963 = vunpack.c.l.b16 %v863
        %v964 = vunpack.c.l.b16 %v864
        %v965 = vunpack.c.l.b16 %v865
        %v966 = vunpack.c.l.b16 %v866
        %v967 = vunpack.c.l.b16 %v867
        %v968 = vunpack.c.l.b16 %v868
        %v969 = vunpack.c.l.b16 %v869
        %v970 = vunpack.c.l.b16 %v870
        %v971 = vunpack.c.l.b16 %v871
        %v972 = vunpack.c.l.b16 %v872
        %v973 = vunpack.c.l.b16 %v873
        %v974 = vunpack.c.l.b16 %v874
        %v975 = vunpack.c.l.b16 %v875
        %v976 = vunpack.c.l.b16 %v876
        %v977 = vunpack.c.l.b16 %v877
        %v978 = vunpack.c.l.b16 %v878
        %v979 = vunpack.c.l.b16 %v879
        %v980 = vunpack.c.l.b16 %v880
        %v981 = vpack.c.b16 %v942, %v941
        %v982 = vpack.c.b16 %v944, %v943
        %v983 = vpack.c.b16 %v946, %v945
        %v984 = vpack.c.b16 %v948, %v947
        %v985 = vpack.c.b16 %v950, %v949
        %v986 = vpack.c.b16 %v952, %v951
        %v987 = vpack.c.b16 %v954, %v953
        %v988 = vpack.c.b16 %v956, %v955
        %v989 = vpack.c.b16 %v958, %v957
        %v990 = vpack.c.b16 %v960, %v959
        %v991 = vpack.c.b16 %v962, %v961
        %v992 = vpack.c.b16 %v964, %v963
        %v993 = vpack.c.b16 %v966, %v965
        %v994 = vpack.c.b16 %v968, %v967
        %v995 = vpack.c.b16 %v970, %v969
        %v996 = vpack.c.b16 %v972, %v971
        %v997 = vpack.c.b16 %v974, %v973
        %v998 = vpack.c.b16 %v976, %v975
        %v999 = vpack.c.b16 %v978, %v977
        %v1000 = vpack.c.b16 %v980, %v979
        %v1011 = vunpack.c.l.b16 %v881
        %v1012 = vunpack.c.l.b16 %v882
        %v1013 = vunpack.c.l.b16 %v883
        %v1014 = vunpack.c.l.b16 %v884
        %v1015 = vunpack.c.l.b16 %v885
        %v1016 = vunpack.c.l.b16 %v886
        %v1017 = vunpack.c.l.b16 %v887
        %v1018 = vunpack.c.l.b16 %v888
        %v1019 = vunpack.c.l.b16 %v889
        %v1020 = vunpack.c.l.b16 %v890
        %v1021 = vpack.c.b16 %v1011, %v1011
        %v1022 = vpack.c.b16 %v1012, %v1012
        %v1023 = vpack.c.b16 %v1013, %v1013
        %v1024 = vpack.c.b16 %v1014, %v1014
        %v1025 = vpack.c.b16 %v1015, %v1015
        %v1026 = vpack.c.b16 %v1016, %v1016
        %v1027 = vpack.c.b16 %v1017, %v1017
        %v1028 = vpack.c.b16 %v1018, %v1018
        %v1029 = vpack.c.b16 %v1019, %v1019
        %v1030 = vpack.c.b16 %v1020, %v1020
        %vm1031 = vsmask.f32 7424
        %v1033 = vshrl.u32 %v981, 16
        %v1035 = vshll.u32 %v981, 16
        %v1037 = vrot.slane %v1035, 1
        %v1038 = vor.u32 %v1033, %v1037
        %v1040 = vshll.u32 %v982, 16
        %v1042 = vrot.slane %v1040, 1
        %v1043 = vsel %vm1031, %v1038, %v1042
        %v1044 = vshrl.u32 %v982, 16
        %v1046 = vor.u32 %v1044, %v1042
        %v1048 = vshll.u32 %v1021, 16
        %v1050 = vrot.slane %v1048, 1
        %v1051 = vsel %vm1031, %v1046, %v1050
        %v1053 = vshrl.u32 %v983, 16
        %v1055 = vshll.u32 %v983, 16
        %v1057 = vrot.slane %v1055, 1
        %v1058 = vor.u32 %v1053, %v1057
        %v1060 = vshll.u32 %v984, 16
        %v1062 = vrot.slane %v1060, 1
        %v1063 = vsel %vm1031, %v1058, %v1062
        %v1064 = vshrl.u32 %v984, 16
        %v1066 = vor.u32 %v1064, %v1062
        %v1068 = vshll.u32 %v1022, 16
        %v1070 = vrot.slane %v1068, 1
        %v1071 = vsel %vm1031, %v1066, %v1070
        %v1073 = vshrl.u32 %v985, 16
        %v1075 = vshll.u32 %v985, 16
        %v1077 = vrot.slane %v1075, 1
        %v1078 = vor.u32 %v1073, %v1077
        %v1080 = vshll.u32 %v986, 16
        %v1082 = vrot.slane %v1080, 1
        %v1083 = vsel %vm1031, %v1078, %v1082
        %v1084 = vshrl.u32 %v986, 16
        %v1086 = vor.u32 %v1084, %v1082
        %v1088 = vshll.u32 %v1023, 16
        %v1090 = vrot.slane %v1088, 1
        %v1091 = vsel %vm1031, %v1086, %v1090
        %v1093 = vshrl.u32 %v987, 16
        %v1095 = vshll.u32 %v987, 16
        %v1097 = vrot.slane %v1095, 1
        %v1098 = vor.u32 %v1093, %v1097
        %v1100 = vshll.u32 %v988, 16
        %v1102 = vrot.slane %v1100, 1
        %v1103 = vsel %vm1031, %v1098, %v1102
        %v1104 = vshrl.u32 %v988, 16
        %v1106 = vor.u32 %v1104, %v1102
        %v1108 = vshll.u32 %v1024, 16
        %v1110 = vrot.slane %v1108, 1
        %v1111 = vsel %vm1031, %v1106, %v1110
        %v1113 = vshrl.u32 %v989, 16
        %v1115 = vshll.u32 %v989, 16
        %v1117 = vrot.slane %v1115, 1
        %v1118 = vor.u32 %v1113, %v1117
        %v1120 = vshll.u32 %v990, 16
        %v1122 = vrot.slane %v1120, 1
        %v1123 = vsel %vm1031, %v1118, %v1122
        %v1124 = vshrl.u32 %v990, 16
        %v1126 = vor.u32 %v1124, %v1122
        %v1128 = vshll.u32 %v1025, 16
        %v1130 = vrot.slane %v1128, 1
        %v1131 = vsel %vm1031, %v1126, %v1130
        %v1133 = vshrl.u32 %v991, 16
        %v1135 = vshll.u32 %v991, 16
        %v1137 = vrot.slane %v1135, 1
        %v1138 = vor.u32 %v1133, %v1137
        %v1140 = vshll.u32 %v992, 16
        %v1142 = vrot.slane %v1140, 1
        %v1143 = vsel %vm1031, %v1138, %v1142
        %v1144 = vshrl.u32 %v992, 16
        %v1146 = vor.u32 %v1144, %v1142
        %v1148 = vshll.u32 %v1026, 16
        %v1150 = vrot.slane %v1148, 1
        %v1151 = vsel %vm1031, %v1146, %v1150
        %v1153 = vshrl.u32 %v993, 16
        %v1155 = vshll.u32 %v993, 16
        %v1157 = vrot.slane %v1155, 1
        %v1158 = vor.u32 %v1153, %v1157
        %v1160 = vshll.u32 %v994, 16
        %v1162 = vrot.slane %v1160, 1
        %v1163 = vsel %vm1031, %v1158, %v1162
        %v1164 = vshrl.u32 %v994, 16
        %v1166 = vor.u32 %v1164, %v1162
        %v1168 = vshll.u32 %v1027, 16
        %v1170 = vrot.slane %v1168, 1
        %v1171 = vsel %vm1031, %v1166, %v1170
        %v1173 = vshrl.u32 %v995, 16
        %v1175 = vshll.u32 %v995, 16
        %v1177 = vrot.slane %v1175, 1
        %v1178 = vor.u32 %v1173, %v1177
        %v1180 = vshll.u32 %v996, 16
        %v1182 = vrot.slane %v1180, 1
        %v1183 = vsel %vm1031, %v1178, %v1182
        %v1184 = vshrl.u32 %v996, 16
        %v1186 = vor.u32 %v1184, %v1182
        %v1188 = vshll.u32 %v1028, 16
        %v1190 = vrot.slane %v1188, 1
        %v1191 = vsel %vm1031, %v1186, %v1190
        %v1193 = vshrl.u32 %v997, 16
        %v1195 = vshll.u32 %v997, 16
        %v1197 = vrot.slane %v1195, 1
        %v1198 = vor.u32 %v1193, %v1197
        %v1200 = vshll.u32 %v998, 16
        %v1202 = vrot.slane %v1200, 1
        %v1203 = vsel %vm1031, %v1198, %v1202
        %v1204 = vshrl.u32 %v998, 16
        %v1206 = vor.u32 %v1204, %v1202
        %v1208 = vshll.u32 %v1029, 16
        %v1210 = vrot.slane %v1208, 1
        %v1211 = vsel %vm1031, %v1206, %v1210
        %v1213 = vshrl.u32 %v999, 16
        %v1215 = vshll.u32 %v999, 16
        %v1217 = vrot.slane %v1215, 1
        %v1218 = vor.u32 %v1213, %v1217
        %v1220 = vshll.u32 %v1000, 16
        %v1222 = vrot.slane %v1220, 1
        %v1223 = vsel %vm1031, %v1218, %v1222
        %v1224 = vshrl.u32 %v1000, 16
        %v1226 = vor.u32 %v1224, %v1222
        %v1228 = vshll.u32 %v1030, 16
        %v1230 = vrot.slane %v1228, 1
        %v1231 = vsel %vm1031, %v1226, %v1230
        %1232 = vrot.lane.b32.xlu0 %v1043, 64
        %v1233 = vpop.permute.xlu0 %1232
        %1234 = vrot.lane.b32.xlu0 %v1051, 64
        %v1235 = vpop.permute.xlu0 %1234
        %1236 = vrot.lane.b32.xlu0 %v1063, 64
        %v1237 = vpop.permute.xlu0 %1236
        %1238 = vrot.lane.b32.xlu0 %v1071, 64
        %v1239 = vpop.permute.xlu0 %1238
        %1240 = vrot.lane.b32.xlu0 %v1083, 64
        %v1241 = vpop.permute.xlu0 %1240
        %1242 = vrot.lane.b32.xlu0 %v1091, 64
        %v1243 = vpop.permute.xlu0 %1242
        %1244 = vrot.lane.b32.xlu0 %v1103, 64
        %v1245 = vpop.permute.xlu0 %1244
        %1246 = vrot.lane.b32.xlu0 %v1111, 64
        %v1247 = vpop.permute.xlu0 %1246
        %1248 = vrot.lane.b32.xlu0 %v1123, 64
        %v1249 = vpop.permute.xlu0 %1248
        %1250 = vrot.lane.b32.xlu0 %v1131, 64
        %v1251 = vpop.permute.xlu0 %1250
        %1252 = vrot.lane.b32.xlu0 %v1143, 64
        %v1253 = vpop.permute.xlu0 %1252
        %1254 = vrot.lane.b32.xlu0 %v1151, 64
        %v1255 = vpop.permute.xlu0 %1254
        %1256 = vrot.lane.b32.xlu0 %v1163, 64
        %v1257 = vpop.permute.xlu0 %1256
        %1258 = vrot.lane.b32.xlu0 %v1171, 64
        %v1259 = vpop.permute.xlu0 %1258
        %1260 = vrot.lane.b32.xlu0 %v1183, 64
        %v1261 = vpop.permute.xlu0 %1260
        %1262 = vrot.lane.b32.xlu0 %v1191, 64
        %v1263 = vpop.permute.xlu0 %1262
        %1264 = vrot.lane.b32.xlu0 %v1203, 64
        %v1265 = vpop.permute.xlu0 %1264
        %1266 = vrot.lane.b32.xlu0 %v1211, 64
        %v1267 = vpop.permute.xlu0 %1266
        %1268 = vrot.lane.b32.xlu0 %v1223, 64
        %v1269 = vpop.permute.xlu0 %1268
        %1270 = vrot.lane.b32.xlu0 %v1231, 64
        %v1271 = vpop.permute.xlu0 %1270
        %v1282 = vunpack.c.l.b16 %v891
        %v1283 = vunpack.c.l.b16 %v892
        %v1284 = vunpack.c.l.b16 %v893
        %v1285 = vunpack.c.l.b16 %v894
        %v1286 = vunpack.c.l.b16 %v895
        %v1287 = vunpack.c.l.b16 %v896
        %v1288 = vunpack.c.l.b16 %v897
        %v1289 = vunpack.c.l.b16 %v898
        %v1290 = vunpack.c.l.b16 %v899
        %v1291 = vunpack.c.l.b16 %v900
        %v1292 = vpack.c.b16 %v942, %v1282
        %v1293 = vpack.c.b16 %v946, %v1283
        %v1294 = vpack.c.b16 %v950, %v1284
        %v1295 = vpack.c.b16 %v954, %v1285
        %v1296 = vpack.c.b16 %v958, %v1286
        %v1297 = vpack.c.b16 %v962, %v1287
        %v1298 = vpack.c.b16 %v966, %v1288
        %v1299 = vpack.c.b16 %v970, %v1289
        %v1300 = vpack.c.b16 %v974, %v1290
        %v1301 = vpack.c.b16 %v978, %v1291
        %vm1302 = vcmask 1046528
        %v1303 = vrot.slane %v1292, 1
        %v1304 = vrot.slane %v982, 1
        %v1305 = vsel %vm1302, %v1303, %v1304
        %v1306 = vrot.slane %v1021, 1
        %v1307 = vsel %vm1302, %v1304, %v1306
        %v1308 = vrot.slane %v1293, 1
        %v1309 = vrot.slane %v984, 1
        %v1310 = vsel %vm1302, %v1308, %v1309
        %v1311 = vrot.slane %v1022, 1
        %v1312 = vsel %vm1302, %v1309, %v1311
        %v1313 = vrot.slane %v1294, 1
        %v1314 = vrot.slane %v986, 1
        %v1315 = vsel %vm1302, %v1313, %v1314
        %v1316 = vrot.slane %v1023, 1
        %v1317 = vsel %vm1302, %v1314, %v1316
        %v1318 = vrot.slane %v1295, 1
        %v1319 = vrot.slane %v988, 1
        %v1320 = vsel %vm1302, %v1318, %v1319
        %v1321 = vrot.slane %v1024, 1
        %v1322 = vsel %vm1302, %v1319, %v1321
        %v1323 = vrot.slane %v1296, 1
        %v1324 = vrot.slane %v990, 1
        %v1325 = vsel %vm1302, %v1323, %v1324
        %v1326 = vrot.slane %v1025, 1
        %v1327 = vsel %vm1302, %v1324, %v1326
        %v1328 = vrot.slane %v1297, 1
        %v1329 = vrot.slane %v992, 1
        %v1330 = vsel %vm1302, %v1328, %v1329
        %v1331 = vrot.slane %v1026, 1
        %v1332 = vsel %vm1302, %v1329, %v1331
        %v1333 = vrot.slane %v1298, 1
        %v1334 = vrot.slane %v994, 1
        %v1335 = vsel %vm1302, %v1333, %v1334
        %v1336 = vrot.slane %v1027, 1
        %v1337 = vsel %vm1302, %v1334, %v1336
        %v1338 = vrot.slane %v1299, 1
        %v1339 = vrot.slane %v996, 1
        %v1340 = vsel %vm1302, %v1338, %v1339
        %v1341 = vrot.slane %v1028, 1
        %v1342 = vsel %vm1302, %v1339, %v1341
        %v1343 = vrot.slane %v1300, 1
        %v1344 = vrot.slane %v998, 1
        %v1345 = vsel %vm1302, %v1343, %v1344
        %v1346 = vrot.slane %v1029, 1
        %v1347 = vsel %vm1302, %v1344, %v1346
        %v1348 = vrot.slane %v1301, 1
        %v1349 = vrot.slane %v1000, 1
        %v1350 = vsel %vm1302, %v1348, %v1349
        %v1351 = vrot.slane %v1030, 1
        %v1352 = vsel %vm1302, %v1349, %v1351
        %vm1353 = vcmask 523264
        %v1355 = vsel %vm1353, %v981, %v1233
        %v1358 = vsel %vm1353, %v982, %v1235
        %v1361 = vsel %vm1353, %v983, %v1237
        %v1364 = vsel %vm1353, %v984, %v1239
        %v1367 = vsel %vm1353, %v985, %v1241
        %v1370 = vsel %vm1353, %v986, %v1243
        %v1373 = vsel %vm1353, %v987, %v1245
        %v1376 = vsel %vm1353, %v988, %v1247
        %v1379 = vsel %vm1353, %v989, %v1249
        %v1382 = vsel %vm1353, %v990, %v1251
        %v1385 = vsel %vm1353, %v991, %v1253
        %v1388 = vsel %vm1353, %v992, %v1255
        %v1391 = vsel %vm1353, %v993, %v1257
        %v1394 = vsel %vm1353, %v994, %v1259
        %v1397 = vsel %vm1353, %v995, %v1261
        %v1400 = vsel %vm1353, %v996, %v1263
        %v1403 = vsel %vm1353, %v997, %v1265
        %v1406 = vsel %vm1353, %v998, %v1267
        %v1409 = vsel %vm1353, %v999, %v1269
        %v1412 = vsel %vm1353, %v1000, %v1271
        %v1414 = vld [vmem:[%s1] sm:$0xf]
        %v1415 = vld [vmem:[%s1 + $0x4] sm:$0xf]
        %v1416 = vld [vmem:[%s1 + $0x8] sm:$0xf]
        %v1417 = vld [vmem:[%s1 + $0xc] sm:$0xf]
        %v1418 = vld [vmem:[%s1 + $0x10] sm:$0xf]
        %v1419 = vld [vmem:[%s1 + $0x14] sm:$0xf]
        %v1420 = vld [vmem:[%s1 + $0x18] sm:$0xf]
        %v1421 = vld [vmem:[%s1 + $0x1c] sm:$0xf]
        %v1422 = vld [vmem:[%s1 + $0x20] sm:$0xf]
        %v1423 = vld [vmem:[%s1 + $0x24] sm:$0xf]
        %v1424 = vld [vmem:[%s1 + $0x28] sm:$0xf]
        %v1425 = vld [vmem:[%s1 + $0x2c] sm:$0xf]
        %v1426 = vld [vmem:[%s1 + $0x30] sm:$0xf]
        %v1427 = vld [vmem:[%s1 + $0x34] sm:$0xf]
        %v1428 = vld [vmem:[%s1 + $0x38] sm:$0xf]
        %v1429 = vld [vmem:[%s1 + $0x3c] sm:$0xf]
        %v1430 = vld [vmem:[%s1 + $0x40] sm:$0xf]
        %v1431 = vld [vmem:[%s1 + $0x44] sm:$0xf]
        %v1432 = vld [vmem:[%s1 + $0x48] sm:$0xf]
        %v1433 = vld [vmem:[%s1 + $0x4c] sm:$0xf]
        %v1434 = vld [vmem:[%s1 + $0x50] sm:$0xf]
        %v1435 = vld [vmem:[%s1 + $0x54] sm:$0xf]
        %v1436 = vld [vmem:[%s1 + $0x58] sm:$0xf]
        %v1437 = vld [vmem:[%s1 + $0x5c] sm:$0xf]
        %s1438 = scalar_lea.vmem %s1, 96
        %v1439 = vld [vmem:[%s1438] sm:$0xf]
        %v1440 = vld [vmem:[%s1438 + $0x4] sm:$0xf]
        %v1441 = vld [vmem:[%s1438 + $0x8] sm:$0xf]
        %v1442 = vld [vmem:[%s1438 + $0xc] sm:$0xf]
        %v1443 = vld [vmem:[%s1438 + $0x10] sm:$0xf]
        %v1444 = vld [vmem:[%s1438 + $0x14] sm:$0xf]
        %v1445 = vld [vmem:[%s1438 + $0x18] sm:$0xf]
        %v1446 = vld [vmem:[%s1438 + $0x1c] sm:$0xf]
        %v1447 = vld [vmem:[%s1438 + $0x20] sm:$0xf]
        %v1448 = vld [vmem:[%s1438 + $0x24] sm:$0xf]
        %v1449 = vld [vmem:[%s1438 + $0x28] sm:$0xf]
        %v1450 = vld [vmem:[%s1438 + $0x2c] sm:$0xf]
        %v1451 = vld [vmem:[%s1438 + $0x30] sm:$0xf]
        %v1452 = vld [vmem:[%s1438 + $0x34] sm:$0xf]
        %v1453 = vld [vmem:[%s1438 + $0x38] sm:$0xf]
        %v1454 = vld [vmem:[%s1438 + $0x3c] sm:$0xf]
        %v1455 = vld [vmem:[%s1438 + $0x40] sm:$0xf]
        %v1456 = vld [vmem:[%s1438 + $0x44] sm:$0xf]
        %v1457 = vld [vmem:[%s1438 + $0x48] sm:$0xf]
        %v1458 = vld [vmem:[%s1438 + $0x4c] sm:$0xf]
        %v1459 = vld [vmem:[%s1438 + $0x50] sm:$0xf]
        %v1460 = vld [vmem:[%s1438 + $0x54] sm:$0xf]
        %v1461 = vld [vmem:[%s1438 + $0x58] sm:$0xf]
        %v1462 = vld [vmem:[%s1438 + $0x5c] sm:$0xf]
        %v1487 = vunpack.c.l.b16 %v1439
        %v1488 = vunpack.c.l.b16 %v1440
        %v1489 = vunpack.c.l.b16 %v1441
        %v1490 = vunpack.c.l.b16 %v1442
        %v1491 = vunpack.c.l.b16 %v1443
        %v1492 = vunpack.c.l.b16 %v1444
        %v1493 = vunpack.c.l.b16 %v1445
        %v1494 = vunpack.c.l.b16 %v1446
        %v1495 = vunpack.c.l.b16 %v1447
        %v1496 = vunpack.c.l.b16 %v1448
        %v1497 = vunpack.c.l.b16 %v1449
        %v1498 = vunpack.c.l.b16 %v1450
        %v1499 = vunpack.c.l.b16 %v1451
        %v1500 = vunpack.c.l.b16 %v1452
        %v1501 = vunpack.c.l.b16 %v1453
        %v1502 = vunpack.c.l.b16 %v1454
        %v1503 = vunpack.c.l.b16 %v1455
        %v1504 = vunpack.c.l.b16 %v1456
        %v1505 = vunpack.c.l.b16 %v1457
        %v1506 = vunpack.c.l.b16 %v1458
        %v1507 = vunpack.c.l.b16 %v1459
        %v1508 = vunpack.c.l.b16 %v1460
        %v1509 = vunpack.c.l.b16 %v1461
        %v1510 = vunpack.c.l.b16 %v1462
        %v1511 = vpack.c.b16 %v1488, %v1487
        %v1512 = vpack.c.b16 %v1490, %v1489
        %v1513 = vpack.c.b16 %v1492, %v1491
        %v1514 = vpack.c.b16 %v1494, %v1493
        %v1515 = vpack.c.b16 %v1496, %v1495
        %v1516 = vpack.c.b16 %v1498, %v1497
        %v1517 = vpack.c.b16 %v1500, %v1499
        %v1518 = vpack.c.b16 %v1502, %v1501
        %v1519 = vpack.c.b16 %v1504, %v1503
        %v1520 = vpack.c.b16 %v1506, %v1505
        %v1521 = vpack.c.b16 %v1508, %v1507
        %v1522 = vpack.c.b16 %v1510, %v1509
        %v1536 = vsel %vm1353, %v1310, 0
        %v1539 = vsel %vm1353, %v1312, 0
        %v1542 = vsel %vm1353, %v1315, 0
        %v1545 = vsel %vm1353, %v1317, 0
        %v1548 = vsel %vm1353, %v1320, 0
        %v1551 = vsel %vm1353, %v1322, 0
        %v1554 = vsel %vm1353, %v1325, 0
        %v1557 = vsel %vm1353, %v1327, 0
        %v1560 = vsel %vm1353, %v1330, 0
        %v1563 = vsel %vm1353, %v1332, 0
        %v1566 = vsel %vm1353, %v1335, 0
        %v1569 = vsel %vm1353, %v1337, 0
        %v1572 = vsel %vm1353, %v1340, 0
        %v1575 = vsel %vm1353, %v1342, 0
        %v1578 = vsel %vm1353, %v1345, 0
        %v1581 = vsel %vm1353, %v1347, 0
        %1583 = vmatpush.bf16.msra.mxu0 %v1518
        %1584 = vmatpush.bf16.msra.mxu0 %v1517
        %1585 = vmatpush.bf16.msra.mxu0 %v1516
        %1586 = vmatpush.bf16.msra.mxu0 %v1515
        %1587 = vmatpush.bf16.msra.mxu0 %v1514
        %1588 = vmatpush.bf16.msra.mxu0 %v1513
        %1589 = vmatpush.bf16.msra.mxu0 %v1512
        %1590 = vmatpush.bf16.msra.mxu0 %v1511
        %1591 = vmatmul.bf16.gmra.mxu0 %v1361
        %v1592 = vpop.f32.mrf.mxu0
        %v1593 = vadd.f32 0.0, %v1592
        %v1594 = vpop.f32.mrf.mxu0
        %v1595 = vadd.f32 0.0, %v1594
        %1596 = vmatmul.bf16.gmra.mxu0 %v1364
        %v1597 = vpop.f32.mrf.mxu0
        %v1598 = vadd.f32 0.0, %v1597
        %v1599 = vpop.f32.mrf.mxu0
        %v1600 = vadd.f32 0.0, %v1599
        %1601 = vmatmul.bf16.gmra.mxu0 %v1367
        %v1602 = vpop.f32.mrf.mxu0
        %v1603 = vadd.f32 0.0, %v1602
        %v1604 = vpop.f32.mrf.mxu0
        %v1605 = vadd.f32 0.0, %v1604
        %1606 = vmatmul.bf16.gmra.mxu0 %v1370
        %v1607 = vpop.f32.mrf.mxu0
        %v1608 = vadd.f32 0.0, %v1607
        %v1609 = vpop.f32.mrf.mxu0
        %v1610 = vadd.f32 0.0, %v1609
        %1611 = vmatmul.bf16.gmra.mxu0 %v1373
        %v1612 = vpop.f32.mrf.mxu0
        %v1613 = vadd.f32 0.0, %v1612
        %v1614 = vpop.f32.mrf.mxu0
        %v1615 = vadd.f32 0.0, %v1614
        %1616 = vmatmul.bf16.gmra.mxu0 %v1376
        %v1617 = vpop.f32.mrf.mxu0
        %v1618 = vadd.f32 0.0, %v1617
        %v1619 = vpop.f32.mrf.mxu0
        %v1620 = vadd.f32 0.0, %v1619
        %1621 = vmatmul.bf16.gmra.mxu0 %v1379
        %v1622 = vpop.f32.mrf.mxu0
        %v1623 = vadd.f32 0.0, %v1622
        %v1624 = vpop.f32.mrf.mxu0
        %v1625 = vadd.f32 0.0, %v1624
        %1626 = vmatmul.bf16.gmra.mxu0 %v1382
        %v1627 = vpop.f32.mrf.mxu0
        %v1628 = vadd.f32 0.0, %v1627
        %v1629 = vpop.f32.mrf.mxu0
        %v1630 = vadd.f32 0.0, %v1629
        %1631 = vmatmul.bf16.gmra.mxu0 %v1385
        %v1632 = vpop.f32.mrf.mxu0
        %v1633 = vadd.f32 0.0, %v1632
        %v1634 = vpop.f32.mrf.mxu0
        %v1635 = vadd.f32 0.0, %v1634
        %1636 = vmatmul.bf16.gmra.mxu0 %v1388
        %v1637 = vpop.f32.mrf.mxu0
        %v1638 = vadd.f32 0.0, %v1637
        %v1639 = vpop.f32.mrf.mxu0
        %v1640 = vadd.f32 0.0, %v1639
        %1641 = vmatmul.bf16.gmra.mxu0 %v1391
        %v1642 = vpop.f32.mrf.mxu0
        %v1643 = vadd.f32 0.0, %v1642
        %v1644 = vpop.f32.mrf.mxu0
        %v1645 = vadd.f32 0.0, %v1644
        %1646 = vmatmul.bf16.gmra.mxu0 %v1394
        %v1647 = vpop.f32.mrf.mxu0
        %v1648 = vadd.f32 0.0, %v1647
        %v1649 = vpop.f32.mrf.mxu0
        %v1650 = vadd.f32 0.0, %v1649
        %1651 = vmatmul.bf16.gmra.mxu0 %v1397
        %v1652 = vpop.f32.mrf.mxu0
        %v1653 = vadd.f32 0.0, %v1652
        %v1654 = vpop.f32.mrf.mxu0
        %v1655 = vadd.f32 0.0, %v1654
        %1656 = vmatmul.bf16.gmra.mxu0 %v1400
        %v1657 = vpop.f32.mrf.mxu0
        %v1658 = vadd.f32 0.0, %v1657
        %v1659 = vpop.f32.mrf.mxu0
        %v1660 = vadd.f32 0.0, %v1659
        %1661 = vmatmul.bf16.gmra.mxu0 %v1403
        %v1662 = vpop.f32.mrf.mxu0
        %v1663 = vadd.f32 0.0, %v1662
        %v1664 = vpop.f32.mrf.mxu0
        %v1665 = vadd.f32 0.0, %v1664
        %1666 = vmatmul.bf16.gmra.mxu0 %v1406
        %v1667 = vpop.f32.mrf.mxu0
        %v1668 = vadd.f32 0.0, %v1667
        %v1669 = vpop.f32.mrf.mxu0
        %v1670 = vadd.f32 0.0, %v1669
        %1671 = vdwg.mxu0
        %1672 = vmatpush.bf16.msra.mxu0 0
        %1673 = vmatpush.bf16.msra.mxu0 0
        %1674 = vmatpush.bf16.msra.mxu0 0
        %1675 = vmatpush.bf16.msra.mxu0 0
        %1676 = vmatpush.bf16.msra.mxu0 %v1522
        %1677 = vmatpush.bf16.msra.mxu0 %v1521
        %1678 = vmatpush.bf16.msra.mxu0 %v1520
        %1679 = vmatpush.bf16.msra.mxu0 %v1519
        %1680 = vmatmul.bf16.gmra.mxu0 %v1536
        %v1681 = vpop.f32.mrf.mxu0
        %v1682 = vadd.f32 %v1593, %v1681
        %v1683 = vpop.f32.mrf.mxu0
        %v1684 = vadd.f32 %v1595, %v1683
        %1685 = vmatmul.bf16.gmra.mxu0 %v1539
        %v1686 = vpop.f32.mrf.mxu0
        %v1687 = vadd.f32 %v1598, %v1686
        %v1688 = vpop.f32.mrf.mxu0
        %v1689 = vadd.f32 %v1600, %v1688
        %1690 = vmatmul.bf16.gmra.mxu0 %v1542
        %v1691 = vpop.f32.mrf.mxu0
        %v1692 = vadd.f32 %v1603, %v1691
        %v1693 = vpop.f32.mrf.mxu0
        %v1694 = vadd.f32 %v1605, %v1693
        %1695 = vmatmul.bf16.gmra.mxu0 %v1545
        %v1696 = vpop.f32.mrf.mxu0
        %v1697 = vadd.f32 %v1608, %v1696
        %v1698 = vpop.f32.mrf.mxu0
        %v1699 = vadd.f32 %v1610, %v1698
        %1700 = vmatmul.bf16.gmra.mxu0 %v1548
        %v1701 = vpop.f32.mrf.mxu0
        %v1702 = vadd.f32 %v1613, %v1701
        %v1703 = vpop.f32.mrf.mxu0
        %v1704 = vadd.f32 %v1615, %v1703
        %1705 = vmatmul.bf16.gmra.mxu0 %v1551
        %v1706 = vpop.f32.mrf.mxu0
        %v1707 = vadd.f32 %v1618, %v1706
        %v1708 = vpop.f32.mrf.mxu0
        %v1709 = vadd.f32 %v1620, %v1708
        %1710 = vmatmul.bf16.gmra.mxu0 %v1554
        %v1711 = vpop.f32.mrf.mxu0
        %v1712 = vadd.f32 %v1623, %v1711
        %v1713 = vpop.f32.mrf.mxu0
        %v1714 = vadd.f32 %v1625, %v1713
        %1715 = vmatmul.bf16.gmra.mxu0 %v1557
        %v1716 = vpop.f32.mrf.mxu0
        %v1717 = vadd.f32 %v1628, %v1716
        %v1718 = vpop.f32.mrf.mxu0
        %v1719 = vadd.f32 %v1630, %v1718
        %1720 = vmatmul.bf16.gmra.mxu0 %v1560
        %v1721 = vpop.f32.mrf.mxu0
        %v1722 = vadd.f32 %v1633, %v1721
        %v1723 = vpop.f32.mrf.mxu0
        %v1724 = vadd.f32 %v1635, %v1723
        %1725 = vmatmul.bf16.gmra.mxu0 %v1563
        %v1726 = vpop.f32.mrf.mxu0
        %v1727 = vadd.f32 %v1638, %v1726
        %v1728 = vpop.f32.mrf.mxu0
        %v1729 = vadd.f32 %v1640, %v1728
        %1730 = vmatmul.bf16.gmra.mxu0 %v1566
        %v1731 = vpop.f32.mrf.mxu0
        %v1732 = vadd.f32 %v1643, %v1731
        %v1733 = vpop.f32.mrf.mxu0
        %v1734 = vadd.f32 %v1645, %v1733
        %1735 = vmatmul.bf16.gmra.mxu0 %v1569
        %v1736 = vpop.f32.mrf.mxu0
        %v1737 = vadd.f32 %v1648, %v1736
        %v1738 = vpop.f32.mrf.mxu0
        %v1739 = vadd.f32 %v1650, %v1738
        %1740 = vmatmul.bf16.gmra.mxu0 %v1572
        %v1741 = vpop.f32.mrf.mxu0
        %v1742 = vadd.f32 %v1653, %v1741
        %v1743 = vpop.f32.mrf.mxu0
        %v1744 = vadd.f32 %v1655, %v1743
        %1745 = vmatmul.bf16.gmra.mxu0 %v1575
        %v1746 = vpop.f32.mrf.mxu0
        %v1747 = vadd.f32 %v1658, %v1746
        %v1748 = vpop.f32.mrf.mxu0
        %v1749 = vadd.f32 %v1660, %v1748
        %1750 = vmatmul.bf16.gmra.mxu0 %v1578
        %v1751 = vpop.f32.mrf.mxu0
        %v1752 = vadd.f32 %v1663, %v1751
        %v1753 = vpop.f32.mrf.mxu0
        %v1754 = vadd.f32 %v1665, %v1753
        %1755 = vmatmul.bf16.gmra.mxu0 %v1581
        %v1756 = vpop.f32.mrf.mxu0
        %v1757 = vadd.f32 %v1668, %v1756
        %v1758 = vpop.f32.mrf.mxu0
        %v1759 = vadd.f32 %v1670, %v1758
        %1760 = vdwg.mxu0
        %v1785 = vunpack.c.l.b16 %v1414
        %v1786 = vunpack.c.l.b16 %v1415
        %v1787 = vunpack.c.l.b16 %v1416
        %v1788 = vunpack.c.l.b16 %v1417
        %v1789 = vunpack.c.l.b16 %v1418
        %v1790 = vunpack.c.l.b16 %v1419
        %v1791 = vunpack.c.l.b16 %v1420
        %v1792 = vunpack.c.l.b16 %v1421
        %v1793 = vunpack.c.l.b16 %v1422
        %v1794 = vunpack.c.l.b16 %v1423
        %v1795 = vunpack.c.l.b16 %v1424
        %v1796 = vunpack.c.l.b16 %v1425
        %v1797 = vunpack.c.l.b16 %v1426
        %v1798 = vunpack.c.l.b16 %v1427
        %v1799 = vunpack.c.l.b16 %v1428
        %v1800 = vunpack.c.l.b16 %v1429
        %v1801 = vunpack.c.l.b16 %v1430
        %v1802 = vunpack.c.l.b16 %v1431
        %v1803 = vunpack.c.l.b16 %v1432
        %v1804 = vunpack.c.l.b16 %v1433
        %v1805 = vunpack.c.l.b16 %v1434
        %v1806 = vunpack.c.l.b16 %v1435
        %v1807 = vunpack.c.l.b16 %v1436
        %v1808 = vunpack.c.l.b16 %v1437
        %v1809 = vpack.c.b16 %v1786, %v1785
        %v1810 = vpack.c.b16 %v1788, %v1787
        %v1811 = vpack.c.b16 %v1790, %v1789
        %v1812 = vpack.c.b16 %v1792, %v1791
        %v1813 = vpack.c.b16 %v1794, %v1793
        %v1814 = vpack.c.b16 %v1796, %v1795
        %v1815 = vpack.c.b16 %v1798, %v1797
        %v1816 = vpack.c.b16 %v1800, %v1799
        %v1817 = vpack.c.b16 %v1802, %v1801
        %v1818 = vpack.c.b16 %v1804, %v1803
        %v1819 = vpack.c.b16 %v1806, %v1805
        %v1820 = vpack.c.b16 %v1808, %v1807
        %v1834 = vsel %vm1353, %v1305, 0
        %v1837 = vsel %vm1353, %v1307, 0
        %1839 = vmatpush.bf16.msra.mxu0 %v1816
        %1840 = vmatpush.bf16.msra.mxu0 %v1815
        %1841 = vmatpush.bf16.msra.mxu0 %v1814
        %1842 = vmatpush.bf16.msra.mxu0 %v1813
        %1843 = vmatpush.bf16.msra.mxu0 %v1812
        %1844 = vmatpush.bf16.msra.mxu0 %v1811
        %1845 = vmatpush.bf16.msra.mxu0 %v1810
        %1846 = vmatpush.bf16.msra.mxu0 %v1809
        %1847 = vmatmul.bf16.gmra.mxu0 %v1355
        %v1848 = vpop.f32.mrf.mxu0
        %v1849 = vadd.f32 %v1682, %v1848
        %v1850 = vpop.f32.mrf.mxu0
        %v1851 = vadd.f32 %v1684, %v1850
        %1852 = vmatmul.bf16.gmra.mxu0 %v1358
        %v1853 = vpop.f32.mrf.mxu0
        %v1854 = vadd.f32 %v1687, %v1853
        %v1855 = vpop.f32.mrf.mxu0
        %v1856 = vadd.f32 %v1689, %v1855
        %1857 = vmatmul.bf16.gmra.mxu0 %v1361
        %v1858 = vpop.f32.mrf.mxu0
        %v1859 = vadd.f32 %v1692, %v1858
        %v1860 = vpop.f32.mrf.mxu0
        %v1861 = vadd.f32 %v1694, %v1860
        %1862 = vmatmul.bf16.gmra.mxu0 %v1364
        %v1863 = vpop.f32.mrf.mxu0
        %v1864 = vadd.f32 %v1697, %v1863
        %v1865 = vpop.f32.mrf.mxu0
        %v1866 = vadd.f32 %v1699, %v1865
        %1867 = vmatmul.bf16.gmra.mxu0 %v1367
        %v1868 = vpop.f32.mrf.mxu0
        %v1869 = vadd.f32 %v1702, %v1868
        %v1870 = vpop.f32.mrf.mxu0
        %v1871 = vadd.f32 %v1704, %v1870
        %1872 = vmatmul.bf16.gmra.mxu0 %v1370
        %v1873 = vpop.f32.mrf.mxu0
        %v1874 = vadd.f32 %v1707, %v1873
        %v1875 = vpop.f32.mrf.mxu0
        %v1876 = vadd.f32 %v1709, %v1875
        %1877 = vmatmul.bf16.gmra.mxu0 %v1373
        %v1878 = vpop.f32.mrf.mxu0
        %v1879 = vadd.f32 %v1712, %v1878
        %v1880 = vpop.f32.mrf.mxu0
        %v1881 = vadd.f32 %v1714, %v1880
        %1882 = vmatmul.bf16.gmra.mxu0 %v1376
        %v1883 = vpop.f32.mrf.mxu0
        %v1884 = vadd.f32 %v1717, %v1883
        %v1885 = vpop.f32.mrf.mxu0
        %v1886 = vadd.f32 %v1719, %v1885
        %1887 = vmatmul.bf16.gmra.mxu0 %v1379
        %v1888 = vpop.f32.mrf.mxu0
        %v1889 = vadd.f32 %v1722, %v1888
        %v1890 = vpop.f32.mrf.mxu0
        %v1891 = vadd.f32 %v1724, %v1890
        %1892 = vmatmul.bf16.gmra.mxu0 %v1382
        %v1893 = vpop.f32.mrf.mxu0
        %v1894 = vadd.f32 %v1727, %v1893
        %v1895 = vpop.f32.mrf.mxu0
        %v1896 = vadd.f32 %v1729, %v1895
        %1897 = vmatmul.bf16.gmra.mxu0 %v1385
        %v1898 = vpop.f32.mrf.mxu0
        %v1899 = vadd.f32 %v1732, %v1898
        %v1900 = vpop.f32.mrf.mxu0
        %v1901 = vadd.f32 %v1734, %v1900
        %1902 = vmatmul.bf16.gmra.mxu0 %v1388
        %v1903 = vpop.f32.mrf.mxu0
        %v1904 = vadd.f32 %v1737, %v1903
        %v1905 = vpop.f32.mrf.mxu0
        %v1906 = vadd.f32 %v1739, %v1905
        %1907 = vmatmul.bf16.gmra.mxu0 %v1391
        %v1908 = vpop.f32.mrf.mxu0
        %v1909 = vadd.f32 %v1742, %v1908
        %v1910 = vpop.f32.mrf.mxu0
        %v1911 = vadd.f32 %v1744, %v1910
        %1912 = vmatmul.bf16.gmra.mxu0 %v1394
        %v1913 = vpop.f32.mrf.mxu0
        %v1914 = vadd.f32 %v1747, %v1913
        %v1915 = vpop.f32.mrf.mxu0
        %v1916 = vadd.f32 %v1749, %v1915
        %1917 = vmatmul.bf16.gmra.mxu0 %v1397
        %v1918 = vpop.f32.mrf.mxu0
        %v1919 = vadd.f32 %v1752, %v1918
        %v1920 = vpop.f32.mrf.mxu0
        %v1921 = vadd.f32 %v1754, %v1920
        %1922 = vmatmul.bf16.gmra.mxu0 %v1400
        %v1923 = vpop.f32.mrf.mxu0
        %v1924 = vadd.f32 %v1757, %v1923
        %v1925 = vpop.f32.mrf.mxu0
        %v1926 = vadd.f32 %v1759, %v1925
        %1927 = vdwg.mxu0
        %1928 = vmatpush.bf16.msra.mxu0 0
        %1929 = vmatpush.bf16.msra.mxu0 0
        %1930 = vmatpush.bf16.msra.mxu0 0
        %1931 = vmatpush.bf16.msra.mxu0 0
        %1932 = vmatpush.bf16.msra.mxu0 %v1820
        %1933 = vmatpush.bf16.msra.mxu0 %v1819
        %1934 = vmatpush.bf16.msra.mxu0 %v1818
        %1935 = vmatpush.bf16.msra.mxu0 %v1817
        %1936 = vmatmul.bf16.gmra.mxu0 %v1834
        %v1937 = vpop.f32.mrf.mxu0
        %v1938 = vadd.f32 %v1849, %v1937
        %v1939 = vpop.f32.mrf.mxu0
        %v1940 = vadd.f32 %v1851, %v1939
        %1941 = vmatmul.bf16.gmra.mxu0 %v1837
        %v1942 = vpop.f32.mrf.mxu0
        %v1943 = vadd.f32 %v1854, %v1942
        %v1944 = vpop.f32.mrf.mxu0
        %v1945 = vadd.f32 %v1856, %v1944
        %1946 = vmatmul.bf16.gmra.mxu0 %v1536
        %v1947 = vpop.f32.mrf.mxu0
        %v1948 = vadd.f32 %v1859, %v1947
        %v1949 = vpop.f32.mrf.mxu0
        %v1950 = vadd.f32 %v1861, %v1949
        %1951 = vmatmul.bf16.gmra.mxu0 %v1539
        %v1952 = vpop.f32.mrf.mxu0
        %v1953 = vadd.f32 %v1864, %v1952
        %v1954 = vpop.f32.mrf.mxu0
        %v1955 = vadd.f32 %v1866, %v1954
        %1956 = vmatmul.bf16.gmra.mxu0 %v1542
        %v1957 = vpop.f32.mrf.mxu0
        %v1958 = vadd.f32 %v1869, %v1957
        %v1959 = vpop.f32.mrf.mxu0
        %v1960 = vadd.f32 %v1871, %v1959
        %1961 = vmatmul.bf16.gmra.mxu0 %v1545
        %v1962 = vpop.f32.mrf.mxu0
        %v1963 = vadd.f32 %v1874, %v1962
        %v1964 = vpop.f32.mrf.mxu0
        %v1965 = vadd.f32 %v1876, %v1964
        %1966 = vmatmul.bf16.gmra.mxu0 %v1548
        %v1967 = vpop.f32.mrf.mxu0
        %v1968 = vadd.f32 %v1879, %v1967
        %v1969 = vpop.f32.mrf.mxu0
        %v1970 = vadd.f32 %v1881, %v1969
        %1971 = vmatmul.bf16.gmra.mxu0 %v1551
        %v1972 = vpop.f32.mrf.mxu0
        %v1973 = vadd.f32 %v1884, %v1972
        %v1974 = vpop.f32.mrf.mxu0
        %v1975 = vadd.f32 %v1886, %v1974
        %1976 = vmatmul.bf16.gmra.mxu0 %v1554
        %v1977 = vpop.f32.mrf.mxu0
        %v1978 = vadd.f32 %v1889, %v1977
        %v1979 = vpop.f32.mrf.mxu0
        %v1980 = vadd.f32 %v1891, %v1979
        %1981 = vmatmul.bf16.gmra.mxu0 %v1557
        %v1982 = vpop.f32.mrf.mxu0
        %v1983 = vadd.f32 %v1894, %v1982
        %v1984 = vpop.f32.mrf.mxu0
        %v1985 = vadd.f32 %v1896, %v1984
        %1986 = vmatmul.bf16.gmra.mxu0 %v1560
        %v1987 = vpop.f32.mrf.mxu0
        %v1988 = vadd.f32 %v1899, %v1987
        %v1989 = vpop.f32.mrf.mxu0
        %v1990 = vadd.f32 %v1901, %v1989
        %1991 = vmatmul.bf16.gmra.mxu0 %v1563
        %v1992 = vpop.f32.mrf.mxu0
        %v1993 = vadd.f32 %v1904, %v1992
        %v1994 = vpop.f32.mrf.mxu0
        %v1995 = vadd.f32 %v1906, %v1994
        %1996 = vmatmul.bf16.gmra.mxu0 %v1566
        %v1997 = vpop.f32.mrf.mxu0
        %v1998 = vadd.f32 %v1909, %v1997
        %v1999 = vpop.f32.mrf.mxu0
        %v2000 = vadd.f32 %v1911, %v1999
        %2001 = vmatmul.bf16.gmra.mxu0 %v1569
        %v2002 = vpop.f32.mrf.mxu0
        %v2003 = vadd.f32 %v1914, %v2002
        %v2004 = vpop.f32.mrf.mxu0
        %v2005 = vadd.f32 %v1916, %v2004
        %2006 = vmatmul.bf16.gmra.mxu0 %v1572
        %v2007 = vpop.f32.mrf.mxu0
        %v2008 = vadd.f32 %v1919, %v2007
        %v2009 = vpop.f32.mrf.mxu0
        %v2010 = vadd.f32 %v1921, %v2009
        %2011 = vmatmul.bf16.gmra.mxu0 %v1575
        %v2012 = vpop.f32.mrf.mxu0
        %v2013 = vadd.f32 %v1924, %v2012
        %v2014 = vpop.f32.mrf.mxu0
        %v2015 = vadd.f32 %v1926, %v2014
        %2016 = vdwg.mxu0
        %s2017 = scalar_lea.vmem %s1, 192
        %v2018 = vld [vmem:[%s2017] sm:$0xf]
        %v2019 = vld [vmem:[%s2017 + $0x4] sm:$0xf]
        %v2020 = vld [vmem:[%s2017 + $0x8] sm:$0xf]
        %v2021 = vld [vmem:[%s2017 + $0xc] sm:$0xf]
        %v2022 = vld [vmem:[%s2017 + $0x10] sm:$0xf]
        %v2023 = vld [vmem:[%s2017 + $0x14] sm:$0xf]
        %v2024 = vld [vmem:[%s2017 + $0x18] sm:$0xf]
        %v2025 = vld [vmem:[%s2017 + $0x1c] sm:$0xf]
        %v2026 = vld [vmem:[%s2017 + $0x20] sm:$0xf]
        %v2027 = vld [vmem:[%s2017 + $0x24] sm:$0xf]
        %v2028 = vld [vmem:[%s2017 + $0x28] sm:$0xf]
        %v2029 = vld [vmem:[%s2017 + $0x2c] sm:$0xf]
        %v2030 = vld [vmem:[%s2017 + $0x30] sm:$0xf]
        %v2031 = vld [vmem:[%s2017 + $0x34] sm:$0xf]
        %v2032 = vld [vmem:[%s2017 + $0x38] sm:$0xf]
        %v2033 = vld [vmem:[%s2017 + $0x3c] sm:$0xf]
        %v2034 = vld [vmem:[%s2017 + $0x40] sm:$0xf]
        %v2035 = vld [vmem:[%s2017 + $0x44] sm:$0xf]
        %v2036 = vld [vmem:[%s2017 + $0x48] sm:$0xf]
        %v2037 = vld [vmem:[%s2017 + $0x4c] sm:$0xf]
        %v2038 = vld [vmem:[%s2017 + $0x50] sm:$0xf]
        %v2039 = vld [vmem:[%s2017 + $0x54] sm:$0xf]
        %v2040 = vld [vmem:[%s2017 + $0x58] sm:$0xf]
        %v2041 = vld [vmem:[%s2017 + $0x5c] sm:$0xf]
        %v2066 = vunpack.c.l.b16 %v2018
        %v2067 = vunpack.c.l.b16 %v2019
        %v2068 = vunpack.c.l.b16 %v2020
        %v2069 = vunpack.c.l.b16 %v2021
        %v2070 = vunpack.c.l.b16 %v2022
        %v2071 = vunpack.c.l.b16 %v2023
        %v2072 = vunpack.c.l.b16 %v2024
        %v2073 = vunpack.c.l.b16 %v2025
        %v2074 = vunpack.c.l.b16 %v2026
        %v2075 = vunpack.c.l.b16 %v2027
        %v2076 = vunpack.c.l.b16 %v2028
        %v2077 = vunpack.c.l.b16 %v2029
        %v2078 = vunpack.c.l.b16 %v2030
        %v2079 = vunpack.c.l.b16 %v2031
        %v2080 = vunpack.c.l.b16 %v2032
        %v2081 = vunpack.c.l.b16 %v2033
        %v2082 = vunpack.c.l.b16 %v2034
        %v2083 = vunpack.c.l.b16 %v2035
        %v2084 = vunpack.c.l.b16 %v2036
        %v2085 = vunpack.c.l.b16 %v2037
        %v2086 = vunpack.c.l.b16 %v2038
        %v2087 = vunpack.c.l.b16 %v2039
        %v2088 = vunpack.c.l.b16 %v2040
        %v2089 = vunpack.c.l.b16 %v2041
        %v2090 = vpack.c.b16 %v2067, %v2066
        %v2091 = vpack.c.b16 %v2069, %v2068
        %v2092 = vpack.c.b16 %v2071, %v2070
        %v2093 = vpack.c.b16 %v2073, %v2072
        %v2094 = vpack.c.b16 %v2075, %v2074
        %v2095 = vpack.c.b16 %v2077, %v2076
        %v2096 = vpack.c.b16 %v2079, %v2078
        %v2097 = vpack.c.b16 %v2081, %v2080
        %v2098 = vpack.c.b16 %v2083, %v2082
        %v2099 = vpack.c.b16 %v2085, %v2084
        %v2100 = vpack.c.b16 %v2087, %v2086
        %v2101 = vpack.c.b16 %v2089, %v2088
        %v2115 = vsel %vm1353, %v1350, 0
        %v2118 = vsel %vm1353, %v1352, 0
        %2120 = vmatpush.bf16.msra.mxu0 %v2097
        %2121 = vmatpush.bf16.msra.mxu0 %v2096
        %2122 = vmatpush.bf16.msra.mxu0 %v2095
        %2123 = vmatpush.bf16.msra.mxu0 %v2094
        %2124 = vmatpush.bf16.msra.mxu0 %v2093
        %2125 = vmatpush.bf16.msra.mxu0 %v2092
        %2126 = vmatpush.bf16.msra.mxu0 %v2091
        %2127 = vmatpush.bf16.msra.mxu0 %v2090
        %2128 = vmatmul.bf16.gmra.mxu0 %v1367
        %v2129 = vpop.f32.mrf.mxu0
        %v2130 = vadd.f32 0.0, %v2129
        %v2131 = vpop.f32.mrf.mxu0
        %v2132 = vadd.f32 0.0, %v2131
        %2133 = vmatmul.bf16.gmra.mxu0 %v1370
        %v2134 = vpop.f32.mrf.mxu0
        %v2135 = vadd.f32 0.0, %v2134
        %v2136 = vpop.f32.mrf.mxu0
        %v2137 = vadd.f32 0.0, %v2136
        %2138 = vmatmul.bf16.gmra.mxu0 %v1373
        %v2139 = vpop.f32.mrf.mxu0
        %v2140 = vadd.f32 0.0, %v2139
        %v2141 = vpop.f32.mrf.mxu0
        %v2142 = vadd.f32 0.0, %v2141
        %2143 = vmatmul.bf16.gmra.mxu0 %v1376
        %v2144 = vpop.f32.mrf.mxu0
        %v2145 = vadd.f32 0.0, %v2144
        %v2146 = vpop.f32.mrf.mxu0
        %v2147 = vadd.f32 0.0, %v2146
        %2148 = vmatmul.bf16.gmra.mxu0 %v1379
        %v2149 = vpop.f32.mrf.mxu0
        %v2150 = vadd.f32 0.0, %v2149
        %v2151 = vpop.f32.mrf.mxu0
        %v2152 = vadd.f32 0.0, %v2151
        %2153 = vmatmul.bf16.gmra.mxu0 %v1382
        %v2154 = vpop.f32.mrf.mxu0
        %v2155 = vadd.f32 0.0, %v2154
        %v2156 = vpop.f32.mrf.mxu0
        %v2157 = vadd.f32 0.0, %v2156
        %2158 = vmatmul.bf16.gmra.mxu0 %v1385
        %v2159 = vpop.f32.mrf.mxu0
        %v2160 = vadd.f32 0.0, %v2159
        %v2161 = vpop.f32.mrf.mxu0
        %v2162 = vadd.f32 0.0, %v2161
        %2163 = vmatmul.bf16.gmra.mxu0 %v1388
        %v2164 = vpop.f32.mrf.mxu0
        %v2165 = vadd.f32 0.0, %v2164
        %v2166 = vpop.f32.mrf.mxu0
        %v2167 = vadd.f32 0.0, %v2166
        %2168 = vmatmul.bf16.gmra.mxu0 %v1391
        %v2169 = vpop.f32.mrf.mxu0
        %v2170 = vadd.f32 0.0, %v2169
        %v2171 = vpop.f32.mrf.mxu0
        %v2172 = vadd.f32 0.0, %v2171
        %2173 = vmatmul.bf16.gmra.mxu0 %v1394
        %v2174 = vpop.f32.mrf.mxu0
        %v2175 = vadd.f32 0.0, %v2174
        %v2176 = vpop.f32.mrf.mxu0
        %v2177 = vadd.f32 0.0, %v2176
        %2178 = vmatmul.bf16.gmra.mxu0 %v1397
        %v2179 = vpop.f32.mrf.mxu0
        %v2180 = vadd.f32 0.0, %v2179
        %v2181 = vpop.f32.mrf.mxu0
        %v2182 = vadd.f32 0.0, %v2181
        %2183 = vmatmul.bf16.gmra.mxu0 %v1400
        %v2184 = vpop.f32.mrf.mxu0
        %v2185 = vadd.f32 0.0, %v2184
        %v2186 = vpop.f32.mrf.mxu0
        %v2187 = vadd.f32 0.0, %v2186
        %2188 = vmatmul.bf16.gmra.mxu0 %v1403
        %v2189 = vpop.f32.mrf.mxu0
        %v2190 = vadd.f32 0.0, %v2189
        %v2191 = vpop.f32.mrf.mxu0
        %v2192 = vadd.f32 0.0, %v2191
        %2193 = vmatmul.bf16.gmra.mxu0 %v1406
        %v2194 = vpop.f32.mrf.mxu0
        %v2195 = vadd.f32 0.0, %v2194
        %v2196 = vpop.f32.mrf.mxu0
        %v2197 = vadd.f32 0.0, %v2196
        %2198 = vmatmul.bf16.gmra.mxu0 %v1409
        %v2199 = vpop.f32.mrf.mxu0
        %v2200 = vadd.f32 0.0, %v2199
        %v2201 = vpop.f32.mrf.mxu0
        %v2202 = vadd.f32 0.0, %v2201
        %2203 = vmatmul.bf16.gmra.mxu0 %v1412
        %v2204 = vpop.f32.mrf.mxu0
        %v2205 = vadd.f32 0.0, %v2204
        %v2206 = vpop.f32.mrf.mxu0
        %v2207 = vadd.f32 0.0, %v2206
        %2208 = vdwg.mxu0
        %2209 = vmatpush.bf16.msra.mxu0 0
        %2210 = vmatpush.bf16.msra.mxu0 0
        %2211 = vmatpush.bf16.msra.mxu0 0
        %2212 = vmatpush.bf16.msra.mxu0 0
        %2213 = vmatpush.bf16.msra.mxu0 %v2101
        %2214 = vmatpush.bf16.msra.mxu0 %v2100
        %2215 = vmatpush.bf16.msra.mxu0 %v2099
        %2216 = vmatpush.bf16.msra.mxu0 %v2098
        %2217 = vmatmul.bf16.gmra.mxu0 %v1542
        %v2218 = vpop.f32.mrf.mxu0
        %v2219 = vadd.f32 %v2130, %v2218
        %v2220 = vpop.f32.mrf.mxu0
        %v2221 = vadd.f32 %v2132, %v2220
        %2222 = vmatmul.bf16.gmra.mxu0 %v1545
        %v2223 = vpop.f32.mrf.mxu0
        %v2224 = vadd.f32 %v2135, %v2223
        %v2225 = vpop.f32.mrf.mxu0
        %v2226 = vadd.f32 %v2137, %v2225
        %2227 = vmatmul.bf16.gmra.mxu0 %v1548
        %v2228 = vpop.f32.mrf.mxu0
        %v2229 = vadd.f32 %v2140, %v2228
        %v2230 = vpop.f32.mrf.mxu0
        %v2231 = vadd.f32 %v2142, %v2230
        %2232 = vmatmul.bf16.gmra.mxu0 %v1551
        %v2233 = vpop.f32.mrf.mxu0
        %v2234 = vadd.f32 %v2145, %v2233
        %v2235 = vpop.f32.mrf.mxu0
        %v2236 = vadd.f32 %v2147, %v2235
        %2237 = vmatmul.bf16.gmra.mxu0 %v1554
        %v2238 = vpop.f32.mrf.mxu0
        %v2239 = vadd.f32 %v2150, %v2238
        %v2240 = vpop.f32.mrf.mxu0
        %v2241 = vadd.f32 %v2152, %v2240
        %2242 = vmatmul.bf16.gmra.mxu0 %v1557
        %v2243 = vpop.f32.mrf.mxu0
        %v2244 = vadd.f32 %v2155, %v2243
        %v2245 = vpop.f32.mrf.mxu0
        %v2246 = vadd.f32 %v2157, %v2245
        %2247 = vmatmul.bf16.gmra.mxu0 %v1560
        %v2248 = vpop.f32.mrf.mxu0
        %v2249 = vadd.f32 %v2160, %v2248
        %v2250 = vpop.f32.mrf.mxu0
        %v2251 = vadd.f32 %v2162, %v2250
        %2252 = vmatmul.bf16.gmra.mxu0 %v1563
        %v2253 = vpop.f32.mrf.mxu0
        %v2254 = vadd.f32 %v2165, %v2253
        %v2255 = vpop.f32.mrf.mxu0
        %v2256 = vadd.f32 %v2167, %v2255
        %2257 = vmatmul.bf16.gmra.mxu0 %v1566
        %v2258 = vpop.f32.mrf.mxu0
        %v2259 = vadd.f32 %v2170, %v2258
        %v2260 = vpop.f32.mrf.mxu0
        %v2261 = vadd.f32 %v2172, %v2260
        %2262 = vmatmul.bf16.gmra.mxu0 %v1569
        %v2263 = vpop.f32.mrf.mxu0
        %v2264 = vadd.f32 %v2175, %v2263
        %v2265 = vpop.f32.mrf.mxu0
        %v2266 = vadd.f32 %v2177, %v2265
        %2267 = vmatmul.bf16.gmra.mxu0 %v1572
        %v2268 = vpop.f32.mrf.mxu0
        %v2269 = vadd.f32 %v2180, %v2268
        %v2270 = vpop.f32.mrf.mxu0
        %v2271 = vadd.f32 %v2182, %v2270
        %2272 = vmatmul.bf16.gmra.mxu0 %v1575
        %v2273 = vpop.f32.mrf.mxu0
        %v2274 = vadd.f32 %v2185, %v2273
        %v2275 = vpop.f32.mrf.mxu0
        %v2276 = vadd.f32 %v2187, %v2275
        %2277 = vmatmul.bf16.gmra.mxu0 %v1578
        %v2278 = vpop.f32.mrf.mxu0
        %v2279 = vadd.f32 %v2190, %v2278
        %v2280 = vpop.f32.mrf.mxu0
        %v2281 = vadd.f32 %v2192, %v2280
        %2282 = vmatmul.bf16.gmra.mxu0 %v1581
        %v2283 = vpop.f32.mrf.mxu0
        %v2284 = vadd.f32 %v2195, %v2283
        %v2285 = vpop.f32.mrf.mxu0
        %v2286 = vadd.f32 %v2197, %v2285
        %2287 = vmatmul.bf16.gmra.mxu0 %v2115
        %v2288 = vpop.f32.mrf.mxu0
        %v2289 = vadd.f32 %v2200, %v2288
        %v2290 = vpop.f32.mrf.mxu0
        %v2291 = vadd.f32 %v2202, %v2290
        %2292 = vmatmul.bf16.gmra.mxu0 %v2118
        %v2293 = vpop.f32.mrf.mxu0
        %v2294 = vadd.f32 %v2205, %v2293
        %v2295 = vpop.f32.mrf.mxu0
        %v2296 = vadd.f32 %v2207, %v2295
        %2297 = vdwg.mxu0
        %v2298 = vadd.f32 %v1938, %v2219
        %v2299 = vadd.f32 %v1940, %v2221
        %v2300 = vadd.f32 %v1943, %v2224
        %v2301 = vadd.f32 %v1945, %v2226
        %v2302 = vadd.f32 %v1948, %v2229
        %v2303 = vadd.f32 %v1950, %v2231
        %v2304 = vadd.f32 %v1953, %v2234
        %v2305 = vadd.f32 %v1955, %v2236
        %v2306 = vadd.f32 %v1958, %v2239
        %v2307 = vadd.f32 %v1960, %v2241
        %v2308 = vadd.f32 %v1963, %v2244
        %v2309 = vadd.f32 %v1965, %v2246
        %v2310 = vadd.f32 %v1968, %v2249
        %v2311 = vadd.f32 %v1970, %v2251
        %v2312 = vadd.f32 %v1973, %v2254
        %v2313 = vadd.f32 %v1975, %v2256
        %v2314 = vadd.f32 %v1978, %v2259
        %v2315 = vadd.f32 %v1980, %v2261
        %v2316 = vadd.f32 %v1983, %v2264
        %v2317 = vadd.f32 %v1985, %v2266
        %v2318 = vadd.f32 %v1988, %v2269
        %v2319 = vadd.f32 %v1990, %v2271
        %v2320 = vadd.f32 %v1993, %v2274
        %v2321 = vadd.f32 %v1995, %v2276
        %v2322 = vadd.f32 %v1998, %v2279
        %v2323 = vadd.f32 %v2000, %v2281
        %v2324 = vadd.f32 %v2003, %v2284
        %v2325 = vadd.f32 %v2005, %v2286
        %v2326 = vadd.f32 %v2008, %v2289
        %v2327 = vadd.f32 %v2010, %v2291
        %v2328 = vadd.f32 %v2013, %v2294
        %v2329 = vadd.f32 %v2015, %v2296
        %v2362 = vrot.slane %v2298, 2
        %v2363 = vrot.slane %v2298, 4
        %v2364 = vrot.slane %v2298, 6
        %v2365 = vrot.slane %v2299, 2
        %v2366 = vrot.slane %v2299, 4
        %v2367 = vrot.slane %v2299, 6
        %v2368 = vrot.slane %v2300, 2
        %v2369 = vrot.slane %v2300, 4
        %v2370 = vrot.slane %v2300, 6
        %v2371 = vrot.slane %v2301, 2
        %v2372 = vrot.slane %v2301, 4
        %v2373 = vrot.slane %v2301, 6
        %v2374 = vrot.slane %v2302, 2
        %v2375 = vrot.slane %v2302, 4
        %v2376 = vrot.slane %v2302, 6
        %v2377 = vrot.slane %v2303, 2
        %v2378 = vrot.slane %v2303, 4
        %v2379 = vrot.slane %v2303, 6
        %v2380 = vrot.slane %v2304, 2
        %v2381 = vrot.slane %v2304, 4
        %v2382 = vrot.slane %v2304, 6
        %v2383 = vrot.slane %v2305, 2
        %v2384 = vrot.slane %v2305, 4
        %v2385 = vrot.slane %v2305, 6
        %v2386 = vrot.slane %v2306, 2
        %v2387 = vrot.slane %v2306, 4
        %v2388 = vrot.slane %v2306, 6
        %v2389 = vrot.slane %v2307, 2
        %v2390 = vrot.slane %v2307, 4
        %v2391 = vrot.slane %v2307, 6
        %v2392 = vrot.slane %v2308, 2
        %v2393 = vrot.slane %v2308, 4
        %v2394 = vrot.slane %v2308, 6
        %v2395 = vrot.slane %v2309, 2
        %v2396 = vrot.slane %v2309, 4
        %v2397 = vrot.slane %v2309, 6
        %v2398 = vrot.slane %v2310, 2
        %v2399 = vrot.slane %v2310, 4
        %v2400 = vrot.slane %v2310, 6
        %v2401 = vrot.slane %v2311, 2
        %v2402 = vrot.slane %v2311, 4
        %v2403 = vrot.slane %v2311, 6
        %v2404 = vrot.slane %v2312, 2
        %v2405 = vrot.slane %v2312, 4
        %v2406 = vrot.slane %v2312, 6
        %v2407 = vrot.slane %v2313, 2
        %v2408 = vrot.slane %v2313, 4
        %v2409 = vrot.slane %v2313, 6
        %v2410 = vrot.slane %v2314, 2
        %v2411 = vrot.slane %v2314, 4
        %v2412 = vrot.slane %v2314, 6
        %v2413 = vrot.slane %v2315, 2
        %v2414 = vrot.slane %v2315, 4
        %v2415 = vrot.slane %v2315, 6
        %v2416 = vrot.slane %v2316, 2
        %v2417 = vrot.slane %v2316, 4
        %v2418 = vrot.slane %v2316, 6
        %v2419 = vrot.slane %v2317, 2
        %v2420 = vrot.slane %v2317, 4
        %v2421 = vrot.slane %v2317, 6
        %v2422 = vrot.slane %v2318, 2
        %v2423 = vrot.slane %v2318, 4
        %v2424 = vrot.slane %v2318, 6
        %v2425 = vrot.slane %v2319, 2
        %v2426 = vrot.slane %v2319, 4
        %v2427 = vrot.slane %v2319, 6
        %v2428 = vrot.slane %v2320, 2
        %v2429 = vrot.slane %v2320, 4
        %v2430 = vrot.slane %v2320, 6
        %v2431 = vrot.slane %v2321, 2
        %v2432 = vrot.slane %v2321, 4
        %v2433 = vrot.slane %v2321, 6
        %v2434 = vrot.slane %v2322, 2
        %v2435 = vrot.slane %v2322, 4
        %v2436 = vrot.slane %v2322, 6
        %v2437 = vrot.slane %v2323, 2
        %v2438 = vrot.slane %v2323, 4
        %v2439 = vrot.slane %v2323, 6
        %v2440 = vrot.slane %v2324, 2
        %v2441 = vrot.slane %v2324, 4
        %v2442 = vrot.slane %v2324, 6
        %v2443 = vrot.slane %v2325, 2
        %v2444 = vrot.slane %v2325, 4
        %v2445 = vrot.slane %v2325, 6
        %v2446 = vrot.slane %v2326, 2
        %v2447 = vrot.slane %v2326, 4
        %v2448 = vrot.slane %v2326, 6
        %v2449 = vrot.slane %v2327, 2
        %v2450 = vrot.slane %v2327, 4
        %v2451 = vrot.slane %v2327, 6
        %v2452 = vrot.slane %v2328, 2
        %v2453 = vrot.slane %v2328, 4
        %v2454 = vrot.slane %v2328, 6
        %v2455 = vrot.slane %v2329, 2
        %v2456 = vrot.slane %v2329, 4
        %v2457 = vrot.slane %v2329, 6
        %vm2554 = vcmask 517120
        %v2555 = vsel %vm2554, %v2298, -inf
        %v2556 = vrot.slane %v2555, 4
        %v2557 = vmax.f32 %v2555, %v2556
        %v2558 = vrot.slane %v2557, 2
        %v2559 = vmax.f32 %v2557, %v2558
        %v2560 = vrot.slane %v2559, 1
        %v2561 = vmax.f32 %v2559, %v2560
        %v2562 = vsel %vm2554, %v2362, -inf
        %v2563 = vrot.slane %v2562, 4
        %v2564 = vmax.f32 %v2562, %v2563
        %v2565 = vrot.slane %v2564, 2
        %v2566 = vmax.f32 %v2564, %v2565
        %v2567 = vrot.slane %v2566, 1
        %v2568 = vmax.f32 %v2566, %v2567
        %v2569 = vsel %vm2554, %v2363, -inf
        %v2570 = vrot.slane %v2569, 4
        %v2571 = vmax.f32 %v2569, %v2570
        %v2572 = vrot.slane %v2571, 2
        %v2573 = vmax.f32 %v2571, %v2572
        %v2574 = vrot.slane %v2573, 1
        %v2575 = vmax.f32 %v2573, %v2574
        %v2576 = vsel %vm2554, %v2364, -inf
        %v2577 = vrot.slane %v2576, 4
        %v2578 = vmax.f32 %v2576, %v2577
        %v2579 = vrot.slane %v2578, 2
        %v2580 = vmax.f32 %v2578, %v2579
        %v2581 = vrot.slane %v2580, 1
        %v2582 = vmax.f32 %v2580, %v2581
        %v2583 = vsel %vm2554, %v2299, -inf
        %v2584 = vrot.slane %v2583, 4
        %v2585 = vmax.f32 %v2583, %v2584
        %v2586 = vrot.slane %v2585, 2
        %v2587 = vmax.f32 %v2585, %v2586
        %v2588 = vrot.slane %v2587, 1
        %v2589 = vmax.f32 %v2587, %v2588
        %v2590 = vsel %vm2554, %v2365, -inf
        %v2591 = vrot.slane %v2590, 4
        %v2592 = vmax.f32 %v2590, %v2591
        %v2593 = vrot.slane %v2592, 2
        %v2594 = vmax.f32 %v2592, %v2593
        %v2595 = vrot.slane %v2594, 1
        %v2596 = vmax.f32 %v2594, %v2595
        %v2597 = vsel %vm2554, %v2366, -inf
        %v2598 = vrot.slane %v2597, 4
        %v2599 = vmax.f32 %v2597, %v2598
        %v2600 = vrot.slane %v2599, 2
        %v2601 = vmax.f32 %v2599, %v2600
        %v2602 = vrot.slane %v2601, 1
        %v2603 = vmax.f32 %v2601, %v2602
        %v2604 = vsel %vm2554, %v2367, -inf
        %v2605 = vrot.slane %v2604, 4
        %v2606 = vmax.f32 %v2604, %v2605
        %v2607 = vrot.slane %v2606, 2
        %v2608 = vmax.f32 %v2606, %v2607
        %v2609 = vrot.slane %v2608, 1
        %v2610 = vmax.f32 %v2608, %v2609
        %v2611 = vsel %vm2554, %v2300, -inf
        %v2612 = vrot.slane %v2611, 4
        %v2613 = vmax.f32 %v2611, %v2612
        %v2614 = vrot.slane %v2613, 2
        %v2615 = vmax.f32 %v2613, %v2614
        %v2616 = vrot.slane %v2615, 1
        %v2617 = vmax.f32 %v2615, %v2616
        %v2618 = vsel %vm2554, %v2368, -inf
        %v2619 = vrot.slane %v2618, 4
        %v2620 = vmax.f32 %v2618, %v2619
        %v2621 = vrot.slane %v2620, 2
        %v2622 = vmax.f32 %v2620, %v2621
        %v2623 = vrot.slane %v2622, 1
        %v2624 = vmax.f32 %v2622, %v2623
        %v2625 = vsel %vm2554, %v2369, -inf
        %v2626 = vrot.slane %v2625, 4
        %v2627 = vmax.f32 %v2625, %v2626
        %v2628 = vrot.slane %v2627, 2
        %v2629 = vmax.f32 %v2627, %v2628
        %v2630 = vrot.slane %v2629, 1
        %v2631 = vmax.f32 %v2629, %v2630
        %v2632 = vsel %vm2554, %v2370, -inf
        %v2633 = vrot.slane %v2632, 4
        %v2634 = vmax.f32 %v2632, %v2633
        %v2635 = vrot.slane %v2634, 2
        %v2636 = vmax.f32 %v2634, %v2635
        %v2637 = vrot.slane %v2636, 1
        %v2638 = vmax.f32 %v2636, %v2637
        %v2639 = vsel %vm2554, %v2301, -inf
        %v2640 = vrot.slane %v2639, 4
        %v2641 = vmax.f32 %v2639, %v2640
        %v2642 = vrot.slane %v2641, 2
        %v2643 = vmax.f32 %v2641, %v2642
        %v2644 = vrot.slane %v2643, 1
        %v2645 = vmax.f32 %v2643, %v2644
        %v2646 = vsel %vm2554, %v2371, -inf
        %v2647 = vrot.slane %v2646, 4
        %v2648 = vmax.f32 %v2646, %v2647
        %v2649 = vrot.slane %v2648, 2
        %v2650 = vmax.f32 %v2648, %v2649
        %v2651 = vrot.slane %v2650, 1
        %v2652 = vmax.f32 %v2650, %v2651
        %v2653 = vsel %vm2554, %v2372, -inf
        %v2654 = vrot.slane %v2653, 4
        %v2655 = vmax.f32 %v2653, %v2654
        %v2656 = vrot.slane %v2655, 2
        %v2657 = vmax.f32 %v2655, %v2656
        %v2658 = vrot.slane %v2657, 1
        %v2659 = vmax.f32 %v2657, %v2658
        %v2660 = vsel %vm2554, %v2373, -inf
        %v2661 = vrot.slane %v2660, 4
        %v2662 = vmax.f32 %v2660, %v2661
        %v2663 = vrot.slane %v2662, 2
        %v2664 = vmax.f32 %v2662, %v2663
        %v2665 = vrot.slane %v2664, 1
        %v2666 = vmax.f32 %v2664, %v2665
        %v2667 = vsel %vm2554, %v2302, -inf
        %v2668 = vrot.slane %v2667, 4
        %v2669 = vmax.f32 %v2667, %v2668
        %v2670 = vrot.slane %v2669, 2
        %v2671 = vmax.f32 %v2669, %v2670
        %v2672 = vrot.slane %v2671, 1
        %v2673 = vmax.f32 %v2671, %v2672
        %v2674 = vsel %vm2554, %v2374, -inf
        %v2675 = vrot.slane %v2674, 4
        %v2676 = vmax.f32 %v2674, %v2675
        %v2677 = vrot.slane %v2676, 2
        %v2678 = vmax.f32 %v2676, %v2677
        %v2679 = vrot.slane %v2678, 1
        %v2680 = vmax.f32 %v2678, %v2679
        %v2681 = vsel %vm2554, %v2375, -inf
        %v2682 = vrot.slane %v2681, 4
        %v2683 = vmax.f32 %v2681, %v2682
        %v2684 = vrot.slane %v2683, 2
        %v2685 = vmax.f32 %v2683, %v2684
        %v2686 = vrot.slane %v2685, 1
        %v2687 = vmax.f32 %v2685, %v2686
        %v2688 = vsel %vm2554, %v2376, -inf
        %v2689 = vrot.slane %v2688, 4
        %v2690 = vmax.f32 %v2688, %v2689
        %v2691 = vrot.slane %v2690, 2
        %v2692 = vmax.f32 %v2690, %v2691
        %v2693 = vrot.slane %v2692, 1
        %v2694 = vmax.f32 %v2692, %v2693
        %v2695 = vsel %vm2554, %v2303, -inf
        %v2696 = vrot.slane %v2695, 4
        %v2697 = vmax.f32 %v2695, %v2696
        %v2698 = vrot.slane %v2697, 2
        %v2699 = vmax.f32 %v2697, %v2698
        %v2700 = vrot.slane %v2699, 1
        %v2701 = vmax.f32 %v2699, %v2700
        %v2702 = vsel %vm2554, %v2377, -inf
        %v2703 = vrot.slane %v2702, 4
        %v2704 = vmax.f32 %v2702, %v2703
        %v2705 = vrot.slane %v2704, 2
        %v2706 = vmax.f32 %v2704, %v2705
        %v2707 = vrot.slane %v2706, 1
        %v2708 = vmax.f32 %v2706, %v2707
        %v2709 = vsel %vm2554, %v2378, -inf
        %v2710 = vrot.slane %v2709, 4
        %v2711 = vmax.f32 %v2709, %v2710
        %v2712 = vrot.slane %v2711, 2
        %v2713 = vmax.f32 %v2711, %v2712
        %v2714 = vrot.slane %v2713, 1
        %v2715 = vmax.f32 %v2713, %v2714
        %v2716 = vsel %vm2554, %v2379, -inf
        %v2717 = vrot.slane %v2716, 4
        %v2718 = vmax.f32 %v2716, %v2717
        %v2719 = vrot.slane %v2718, 2
        %v2720 = vmax.f32 %v2718, %v2719
        %v2721 = vrot.slane %v2720, 1
        %v2722 = vmax.f32 %v2720, %v2721
        %v2723 = vsel %vm2554, %v2304, -inf
        %v2724 = vrot.slane %v2723, 4
        %v2725 = vmax.f32 %v2723, %v2724
        %v2726 = vrot.slane %v2725, 2
        %v2727 = vmax.f32 %v2725, %v2726
        %v2728 = vrot.slane %v2727, 1
        %v2729 = vmax.f32 %v2727, %v2728
        %v2730 = vsel %vm2554, %v2380, -inf
        %v2731 = vrot.slane %v2730, 4
        %v2732 = vmax.f32 %v2730, %v2731
        %v2733 = vrot.slane %v2732, 2
        %v2734 = vmax.f32 %v2732, %v2733
        %v2735 = vrot.slane %v2734, 1
        %v2736 = vmax.f32 %v2734, %v2735
        %v2737 = vsel %vm2554, %v2381, -inf
        %v2738 = vrot.slane %v2737, 4
        %v2739 = vmax.f32 %v2737, %v2738
        %v2740 = vrot.slane %v2739, 2
        %v2741 = vmax.f32 %v2739, %v2740
        %v2742 = vrot.slane %v2741, 1
        %v2743 = vmax.f32 %v2741, %v2742
        %v2744 = vsel %vm2554, %v2382, -inf
        %v2745 = vrot.slane %v2744, 4
        %v2746 = vmax.f32 %v2744, %v2745
        %v2747 = vrot.slane %v2746, 2
        %v2748 = vmax.f32 %v2746, %v2747
        %v2749 = vrot.slane %v2748, 1
        %v2750 = vmax.f32 %v2748, %v2749
        %v2751 = vsel %vm2554, %v2305, -inf
        %v2752 = vrot.slane %v2751, 4
        %v2753 = vmax.f32 %v2751, %v2752
        %v2754 = vrot.slane %v2753, 2
        %v2755 = vmax.f32 %v2753, %v2754
        %v2756 = vrot.slane %v2755, 1
        %v2757 = vmax.f32 %v2755, %v2756
        %v2758 = vsel %vm2554, %v2383, -inf
        %v2759 = vrot.slane %v2758, 4
        %v2760 = vmax.f32 %v2758, %v2759
        %v2761 = vrot.slane %v2760, 2
        %v2762 = vmax.f32 %v2760, %v2761
        %v2763 = vrot.slane %v2762, 1
        %v2764 = vmax.f32 %v2762, %v2763
        %v2765 = vsel %vm2554, %v2384, -inf
        %v2766 = vrot.slane %v2765, 4
        %v2767 = vmax.f32 %v2765, %v2766
        %v2768 = vrot.slane %v2767, 2
        %v2769 = vmax.f32 %v2767, %v2768
        %v2770 = vrot.slane %v2769, 1
        %v2771 = vmax.f32 %v2769, %v2770
        %v2772 = vsel %vm2554, %v2385, -inf
        %v2773 = vrot.slane %v2772, 4
        %v2774 = vmax.f32 %v2772, %v2773
        %v2775 = vrot.slane %v2774, 2
        %v2776 = vmax.f32 %v2774, %v2775
        %v2777 = vrot.slane %v2776, 1
        %v2778 = vmax.f32 %v2776, %v2777
        %v2779 = vsel %vm2554, %v2306, -inf
        %v2780 = vrot.slane %v2779, 4
        %v2781 = vmax.f32 %v2779, %v2780
        %v2782 = vrot.slane %v2781, 2
        %v2783 = vmax.f32 %v2781, %v2782
        %v2784 = vrot.slane %v2783, 1
        %v2785 = vmax.f32 %v2783, %v2784
        %v2786 = vsel %vm2554, %v2386, -inf
        %v2787 = vrot.slane %v2786, 4
        %v2788 = vmax.f32 %v2786, %v2787
        %v2789 = vrot.slane %v2788, 2
        %v2790 = vmax.f32 %v2788, %v2789
        %v2791 = vrot.slane %v2790, 1
        %v2792 = vmax.f32 %v2790, %v2791
        %v2793 = vsel %vm2554, %v2387, -inf
        %v2794 = vrot.slane %v2793, 4
        %v2795 = vmax.f32 %v2793, %v2794
        %v2796 = vrot.slane %v2795, 2
        %v2797 = vmax.f32 %v2795, %v2796
        %v2798 = vrot.slane %v2797, 1
        %v2799 = vmax.f32 %v2797, %v2798
        %v2800 = vsel %vm2554, %v2388, -inf
        %v2801 = vrot.slane %v2800, 4
        %v2802 = vmax.f32 %v2800, %v2801
        %v2803 = vrot.slane %v2802, 2
        %v2804 = vmax.f32 %v2802, %v2803
        %v2805 = vrot.slane %v2804, 1
        %v2806 = vmax.f32 %v2804, %v2805
        %v2807 = vsel %vm2554, %v2307, -inf
        %v2808 = vrot.slane %v2807, 4
        %v2809 = vmax.f32 %v2807, %v2808
        %v2810 = vrot.slane %v2809, 2
        %v2811 = vmax.f32 %v2809, %v2810
        %v2812 = vrot.slane %v2811, 1
        %v2813 = vmax.f32 %v2811, %v2812
        %v2814 = vsel %vm2554, %v2389, -inf
        %v2815 = vrot.slane %v2814, 4
        %v2816 = vmax.f32 %v2814, %v2815
        %v2817 = vrot.slane %v2816, 2
        %v2818 = vmax.f32 %v2816, %v2817
        %v2819 = vrot.slane %v2818, 1
        %v2820 = vmax.f32 %v2818, %v2819
        %v2821 = vsel %vm2554, %v2390, -inf
        %v2822 = vrot.slane %v2821, 4
        %v2823 = vmax.f32 %v2821, %v2822
        %v2824 = vrot.slane %v2823, 2
        %v2825 = vmax.f32 %v2823, %v2824
        %v2826 = vrot.slane %v2825, 1
        %v2827 = vmax.f32 %v2825, %v2826
        %v2828 = vsel %vm2554, %v2391, -inf
        %v2829 = vrot.slane %v2828, 4
        %v2830 = vmax.f32 %v2828, %v2829
        %v2831 = vrot.slane %v2830, 2
        %v2832 = vmax.f32 %v2830, %v2831
        %v2833 = vrot.slane %v2832, 1
        %v2834 = vmax.f32 %v2832, %v2833
        %v2835 = vsel %vm2554, %v2308, -inf
        %v2836 = vrot.slane %v2835, 4
        %v2837 = vmax.f32 %v2835, %v2836
        %v2838 = vrot.slane %v2837, 2
        %v2839 = vmax.f32 %v2837, %v2838
        %v2840 = vrot.slane %v2839, 1
        %v2841 = vmax.f32 %v2839, %v2840
        %v2842 = vsel %vm2554, %v2392, -inf
        %v2843 = vrot.slane %v2842, 4
        %v2844 = vmax.f32 %v2842, %v2843
        %v2845 = vrot.slane %v2844, 2
        %v2846 = vmax.f32 %v2844, %v2845
        %v2847 = vrot.slane %v2846, 1
        %v2848 = vmax.f32 %v2846, %v2847
        %v2849 = vsel %vm2554, %v2393, -inf
        %v2850 = vrot.slane %v2849, 4
        %v2851 = vmax.f32 %v2849, %v2850
        %v2852 = vrot.slane %v2851, 2
        %v2853 = vmax.f32 %v2851, %v2852
        %v2854 = vrot.slane %v2853, 1
        %v2855 = vmax.f32 %v2853, %v2854
        %v2856 = vsel %vm2554, %v2394, -inf
        %v2857 = vrot.slane %v2856, 4
        %v2858 = vmax.f32 %v2856, %v2857
        %v2859 = vrot.slane %v2858, 2
        %v2860 = vmax.f32 %v2858, %v2859
        %v2861 = vrot.slane %v2860, 1
        %v2862 = vmax.f32 %v2860, %v2861
        %v2863 = vsel %vm2554, %v2309, -inf
        %v2864 = vrot.slane %v2863, 4
        %v2865 = vmax.f32 %v2863, %v2864
        %v2866 = vrot.slane %v2865, 2
        %v2867 = vmax.f32 %v2865, %v2866
        %v2868 = vrot.slane %v2867, 1
        %v2869 = vmax.f32 %v2867, %v2868
        %v2870 = vsel %vm2554, %v2395, -inf
        %v2871 = vrot.slane %v2870, 4
        %v2872 = vmax.f32 %v2870, %v2871
        %v2873 = vrot.slane %v2872, 2
        %v2874 = vmax.f32 %v2872, %v2873
        %v2875 = vrot.slane %v2874, 1
        %v2876 = vmax.f32 %v2874, %v2875
        %v2877 = vsel %vm2554, %v2396, -inf
        %v2878 = vrot.slane %v2877, 4
        %v2879 = vmax.f32 %v2877, %v2878
        %v2880 = vrot.slane %v2879, 2
        %v2881 = vmax.f32 %v2879, %v2880
        %v2882 = vrot.slane %v2881, 1
        %v2883 = vmax.f32 %v2881, %v2882
        %v2884 = vsel %vm2554, %v2397, -inf
        %v2885 = vrot.slane %v2884, 4
        %v2886 = vmax.f32 %v2884, %v2885
        %v2887 = vrot.slane %v2886, 2
        %v2888 = vmax.f32 %v2886, %v2887
        %v2889 = vrot.slane %v2888, 1
        %v2890 = vmax.f32 %v2888, %v2889
        %v2891 = vsel %vm2554, %v2310, -inf
        %v2892 = vrot.slane %v2891, 4
        %v2893 = vmax.f32 %v2891, %v2892
        %v2894 = vrot.slane %v2893, 2
        %v2895 = vmax.f32 %v2893, %v2894
        %v2896 = vrot.slane %v2895, 1
        %v2897 = vmax.f32 %v2895, %v2896
        %v2898 = vsel %vm2554, %v2398, -inf
        %v2899 = vrot.slane %v2898, 4
        %v2900 = vmax.f32 %v2898, %v2899
        %v2901 = vrot.slane %v2900, 2
        %v2902 = vmax.f32 %v2900, %v2901
        %v2903 = vrot.slane %v2902, 1
        %v2904 = vmax.f32 %v2902, %v2903
        %v2905 = vsel %vm2554, %v2399, -inf
        %v2906 = vrot.slane %v2905, 4
        %v2907 = vmax.f32 %v2905, %v2906
        %v2908 = vrot.slane %v2907, 2
        %v2909 = vmax.f32 %v2907, %v2908
        %v2910 = vrot.slane %v2909, 1
        %v2911 = vmax.f32 %v2909, %v2910
        %v2912 = vsel %vm2554, %v2400, -inf
        %v2913 = vrot.slane %v2912, 4
        %v2914 = vmax.f32 %v2912, %v2913
        %v2915 = vrot.slane %v2914, 2
        %v2916 = vmax.f32 %v2914, %v2915
        %v2917 = vrot.slane %v2916, 1
        %v2918 = vmax.f32 %v2916, %v2917
        %v2919 = vsel %vm2554, %v2311, -inf
        %v2920 = vrot.slane %v2919, 4
        %v2921 = vmax.f32 %v2919, %v2920
        %v2922 = vrot.slane %v2921, 2
        %v2923 = vmax.f32 %v2921, %v2922
        %v2924 = vrot.slane %v2923, 1
        %v2925 = vmax.f32 %v2923, %v2924
        %v2926 = vsel %vm2554, %v2401, -inf
        %v2927 = vrot.slane %v2926, 4
        %v2928 = vmax.f32 %v2926, %v2927
        %v2929 = vrot.slane %v2928, 2
        %v2930 = vmax.f32 %v2928, %v2929
        %v2931 = vrot.slane %v2930, 1
        %v2932 = vmax.f32 %v2930, %v2931
        %v2933 = vsel %vm2554, %v2402, -inf
        %v2934 = vrot.slane %v2933, 4
        %v2935 = vmax.f32 %v2933, %v2934
        %v2936 = vrot.slane %v2935, 2
        %v2937 = vmax.f32 %v2935, %v2936
        %v2938 = vrot.slane %v2937, 1
        %v2939 = vmax.f32 %v2937, %v2938
        %v2940 = vsel %vm2554, %v2403, -inf
        %v2941 = vrot.slane %v2940, 4
        %v2942 = vmax.f32 %v2940, %v2941
        %v2943 = vrot.slane %v2942, 2
        %v2944 = vmax.f32 %v2942, %v2943
        %v2945 = vrot.slane %v2944, 1
        %v2946 = vmax.f32 %v2944, %v2945
        %v2947 = vsel %vm2554, %v2312, -inf
        %v2948 = vrot.slane %v2947, 4
        %v2949 = vmax.f32 %v2947, %v2948
        %v2950 = vrot.slane %v2949, 2
        %v2951 = vmax.f32 %v2949, %v2950
        %v2952 = vrot.slane %v2951, 1
        %v2953 = vmax.f32 %v2951, %v2952
        %v2954 = vsel %vm2554, %v2404, -inf
        %v2955 = vrot.slane %v2954, 4
        %v2956 = vmax.f32 %v2954, %v2955
        %v2957 = vrot.slane %v2956, 2
        %v2958 = vmax.f32 %v2956, %v2957
        %v2959 = vrot.slane %v2958, 1
        %v2960 = vmax.f32 %v2958, %v2959
        %v2961 = vsel %vm2554, %v2405, -inf
        %v2962 = vrot.slane %v2961, 4
        %v2963 = vmax.f32 %v2961, %v2962
        %v2964 = vrot.slane %v2963, 2
        %v2965 = vmax.f32 %v2963, %v2964
        %v2966 = vrot.slane %v2965, 1
        %v2967 = vmax.f32 %v2965, %v2966
        %v2968 = vsel %vm2554, %v2406, -inf
        %v2969 = vrot.slane %v2968, 4
        %v2970 = vmax.f32 %v2968, %v2969
        %v2971 = vrot.slane %v2970, 2
        %v2972 = vmax.f32 %v2970, %v2971
        %v2973 = vrot.slane %v2972, 1
        %v2974 = vmax.f32 %v2972, %v2973
        %v2975 = vsel %vm2554, %v2313, -inf
        %v2976 = vrot.slane %v2975, 4
        %v2977 = vmax.f32 %v2975, %v2976
        %v2978 = vrot.slane %v2977, 2
        %v2979 = vmax.f32 %v2977, %v2978
        %v2980 = vrot.slane %v2979, 1
        %v2981 = vmax.f32 %v2979, %v2980
        %v2982 = vsel %vm2554, %v2407, -inf
        %v2983 = vrot.slane %v2982, 4
        %v2984 = vmax.f32 %v2982, %v2983
        %v2985 = vrot.slane %v2984, 2
        %v2986 = vmax.f32 %v2984, %v2985
        %v2987 = vrot.slane %v2986, 1
        %v2988 = vmax.f32 %v2986, %v2987
        %v2989 = vsel %vm2554, %v2408, -inf
        %v2990 = vrot.slane %v2989, 4
        %v2991 = vmax.f32 %v2989, %v2990
        %v2992 = vrot.slane %v2991, 2
        %v2993 = vmax.f32 %v2991, %v2992
        %v2994 = vrot.slane %v2993, 1
        %v2995 = vmax.f32 %v2993, %v2994
        %v2996 = vsel %vm2554, %v2409, -inf
        %v2997 = vrot.slane %v2996, 4
        %v2998 = vmax.f32 %v2996, %v2997
        %v2999 = vrot.slane %v2998, 2
        %v3000 = vmax.f32 %v2998, %v2999
        %v3001 = vrot.slane %v3000, 1
        %v3002 = vmax.f32 %v3000, %v3001
        %v3003 = vsel %vm2554, %v2314, -inf
        %v3004 = vrot.slane %v3003, 4
        %v3005 = vmax.f32 %v3003, %v3004
        %v3006 = vrot.slane %v3005, 2
        %v3007 = vmax.f32 %v3005, %v3006
        %v3008 = vrot.slane %v3007, 1
        %v3009 = vmax.f32 %v3007, %v3008
        %v3010 = vsel %vm2554, %v2410, -inf
        %v3011 = vrot.slane %v3010, 4
        %v3012 = vmax.f32 %v3010, %v3011
        %v3013 = vrot.slane %v3012, 2
        %v3014 = vmax.f32 %v3012, %v3013
        %v3015 = vrot.slane %v3014, 1
        %v3016 = vmax.f32 %v3014, %v3015
        %v3017 = vsel %vm2554, %v2411, -inf
        %v3018 = vrot.slane %v3017, 4
        %v3019 = vmax.f32 %v3017, %v3018
        %v3020 = vrot.slane %v3019, 2
        %v3021 = vmax.f32 %v3019, %v3020
        %v3022 = vrot.slane %v3021, 1
        %v3023 = vmax.f32 %v3021, %v3022
        %v3024 = vsel %vm2554, %v2412, -inf
        %v3025 = vrot.slane %v3024, 4
        %v3026 = vmax.f32 %v3024, %v3025
        %v3027 = vrot.slane %v3026, 2
        %v3028 = vmax.f32 %v3026, %v3027
        %v3029 = vrot.slane %v3028, 1
        %v3030 = vmax.f32 %v3028, %v3029
        %v3031 = vsel %vm2554, %v2315, -inf
        %v3032 = vrot.slane %v3031, 4
        %v3033 = vmax.f32 %v3031, %v3032
        %v3034 = vrot.slane %v3033, 2
        %v3035 = vmax.f32 %v3033, %v3034
        %v3036 = vrot.slane %v3035, 1
        %v3037 = vmax.f32 %v3035, %v3036
        %v3038 = vsel %vm2554, %v2413, -inf
        %v3039 = vrot.slane %v3038, 4
        %v3040 = vmax.f32 %v3038, %v3039
        %v3041 = vrot.slane %v3040, 2
        %v3042 = vmax.f32 %v3040, %v3041
        %v3043 = vrot.slane %v3042, 1
        %v3044 = vmax.f32 %v3042, %v3043
        %v3045 = vsel %vm2554, %v2414, -inf
        %v3046 = vrot.slane %v3045, 4
        %v3047 = vmax.f32 %v3045, %v3046
        %v3048 = vrot.slane %v3047, 2
        %v3049 = vmax.f32 %v3047, %v3048
        %v3050 = vrot.slane %v3049, 1
        %v3051 = vmax.f32 %v3049, %v3050
        %v3052 = vsel %vm2554, %v2415, -inf
        %v3053 = vrot.slane %v3052, 4
        %v3054 = vmax.f32 %v3052, %v3053
        %v3055 = vrot.slane %v3054, 2
        %v3056 = vmax.f32 %v3054, %v3055
        %v3057 = vrot.slane %v3056, 1
        %v3058 = vmax.f32 %v3056, %v3057
        %v3059 = vsel %vm2554, %v2316, -inf
        %v3060 = vrot.slane %v3059, 4
        %v3061 = vmax.f32 %v3059, %v3060
        %v3062 = vrot.slane %v3061, 2
        %v3063 = vmax.f32 %v3061, %v3062
        %v3064 = vrot.slane %v3063, 1
        %v3065 = vmax.f32 %v3063, %v3064
        %v3066 = vsel %vm2554, %v2416, -inf
        %v3067 = vrot.slane %v3066, 4
        %v3068 = vmax.f32 %v3066, %v3067
        %v3069 = vrot.slane %v3068, 2
        %v3070 = vmax.f32 %v3068, %v3069
        %v3071 = vrot.slane %v3070, 1
        %v3072 = vmax.f32 %v3070, %v3071
        %v3073 = vsel %vm2554, %v2417, -inf
        %v3074 = vrot.slane %v3073, 4
        %v3075 = vmax.f32 %v3073, %v3074
        %v3076 = vrot.slane %v3075, 2
        %v3077 = vmax.f32 %v3075, %v3076
        %v3078 = vrot.slane %v3077, 1
        %v3079 = vmax.f32 %v3077, %v3078
        %v3080 = vsel %vm2554, %v2418, -inf
        %v3081 = vrot.slane %v3080, 4
        %v3082 = vmax.f32 %v3080, %v3081
        %v3083 = vrot.slane %v3082, 2
        %v3084 = vmax.f32 %v3082, %v3083
        %v3085 = vrot.slane %v3084, 1
        %v3086 = vmax.f32 %v3084, %v3085
        %v3087 = vsel %vm2554, %v2317, -inf
        %v3088 = vrot.slane %v3087, 4
        %v3089 = vmax.f32 %v3087, %v3088
        %v3090 = vrot.slane %v3089, 2
        %v3091 = vmax.f32 %v3089, %v3090
        %v3092 = vrot.slane %v3091, 1
        %v3093 = vmax.f32 %v3091, %v3092
        %v3094 = vsel %vm2554, %v2419, -inf
        %v3095 = vrot.slane %v3094, 4
        %v3096 = vmax.f32 %v3094, %v3095
        %v3097 = vrot.slane %v3096, 2
        %v3098 = vmax.f32 %v3096, %v3097
        %v3099 = vrot.slane %v3098, 1
        %v3100 = vmax.f32 %v3098, %v3099
        %v3101 = vsel %vm2554, %v2420, -inf
        %v3102 = vrot.slane %v3101, 4
        %v3103 = vmax.f32 %v3101, %v3102
        %v3104 = vrot.slane %v3103, 2
        %v3105 = vmax.f32 %v3103, %v3104
        %v3106 = vrot.slane %v3105, 1
        %v3107 = vmax.f32 %v3105, %v3106
        %v3108 = vsel %vm2554, %v2421, -inf
        %v3109 = vrot.slane %v3108, 4
        %v3110 = vmax.f32 %v3108, %v3109
        %v3111 = vrot.slane %v3110, 2
        %v3112 = vmax.f32 %v3110, %v3111
        %v3113 = vrot.slane %v3112, 1
        %v3114 = vmax.f32 %v3112, %v3113
        %v3115 = vsel %vm2554, %v2318, -inf
        %v3116 = vrot.slane %v3115, 4
        %v3117 = vmax.f32 %v3115, %v3116
        %v3118 = vrot.slane %v3117, 2
        %v3119 = vmax.f32 %v3117, %v3118
        %v3120 = vrot.slane %v3119, 1
        %v3121 = vmax.f32 %v3119, %v3120
        %v3122 = vsel %vm2554, %v2422, -inf
        %v3123 = vrot.slane %v3122, 4
        %v3124 = vmax.f32 %v3122, %v3123
        %v3125 = vrot.slane %v3124, 2
        %v3126 = vmax.f32 %v3124, %v3125
        %v3127 = vrot.slane %v3126, 1
        %v3128 = vmax.f32 %v3126, %v3127
        %v3129 = vsel %vm2554, %v2423, -inf
        %v3130 = vrot.slane %v3129, 4
        %v3131 = vmax.f32 %v3129, %v3130
        %v3132 = vrot.slane %v3131, 2
        %v3133 = vmax.f32 %v3131, %v3132
        %v3134 = vrot.slane %v3133, 1
        %v3135 = vmax.f32 %v3133, %v3134
        %v3136 = vsel %vm2554, %v2424, -inf
        %v3137 = vrot.slane %v3136, 4
        %v3138 = vmax.f32 %v3136, %v3137
        %v3139 = vrot.slane %v3138, 2
        %v3140 = vmax.f32 %v3138, %v3139
        %v3141 = vrot.slane %v3140, 1
        %v3142 = vmax.f32 %v3140, %v3141
        %v3143 = vsel %vm2554, %v2319, -inf
        %v3144 = vrot.slane %v3143, 4
        %v3145 = vmax.f32 %v3143, %v3144
        %v3146 = vrot.slane %v3145, 2
        %v3147 = vmax.f32 %v3145, %v3146
        %v3148 = vrot.slane %v3147, 1
        %v3149 = vmax.f32 %v3147, %v3148
        %v3150 = vsel %vm2554, %v2425, -inf
        %v3151 = vrot.slane %v3150, 4
        %v3152 = vmax.f32 %v3150, %v3151
        %v3153 = vrot.slane %v3152, 2
        %v3154 = vmax.f32 %v3152, %v3153
        %v3155 = vrot.slane %v3154, 1
        %v3156 = vmax.f32 %v3154, %v3155
        %v3157 = vsel %vm2554, %v2426, -inf
        %v3158 = vrot.slane %v3157, 4
        %v3159 = vmax.f32 %v3157, %v3158
        %v3160 = vrot.slane %v3159, 2
        %v3161 = vmax.f32 %v3159, %v3160
        %v3162 = vrot.slane %v3161, 1
        %v3163 = vmax.f32 %v3161, %v3162
        %v3164 = vsel %vm2554, %v2427, -inf
        %v3165 = vrot.slane %v3164, 4
        %v3166 = vmax.f32 %v3164, %v3165
        %v3167 = vrot.slane %v3166, 2
        %v3168 = vmax.f32 %v3166, %v3167
        %v3169 = vrot.slane %v3168, 1
        %v3170 = vmax.f32 %v3168, %v3169
        %v3171 = vsel %vm2554, %v2320, -inf
        %v3172 = vrot.slane %v3171, 4
        %v3173 = vmax.f32 %v3171, %v3172
        %v3174 = vrot.slane %v3173, 2
        %v3175 = vmax.f32 %v3173, %v3174
        %v3176 = vrot.slane %v3175, 1
        %v3177 = vmax.f32 %v3175, %v3176
        %v3178 = vsel %vm2554, %v2428, -inf
        %v3179 = vrot.slane %v3178, 4
        %v3180 = vmax.f32 %v3178, %v3179
        %v3181 = vrot.slane %v3180, 2
        %v3182 = vmax.f32 %v3180, %v3181
        %v3183 = vrot.slane %v3182, 1
        %v3184 = vmax.f32 %v3182, %v3183
        %v3185 = vsel %vm2554, %v2429, -inf
        %v3186 = vrot.slane %v3185, 4
        %v3187 = vmax.f32 %v3185, %v3186
        %v3188 = vrot.slane %v3187, 2
        %v3189 = vmax.f32 %v3187, %v3188
        %v3190 = vrot.slane %v3189, 1
        %v3191 = vmax.f32 %v3189, %v3190
        %v3192 = vsel %vm2554, %v2430, -inf
        %v3193 = vrot.slane %v3192, 4
        %v3194 = vmax.f32 %v3192, %v3193
        %v3195 = vrot.slane %v3194, 2
        %v3196 = vmax.f32 %v3194, %v3195
        %v3197 = vrot.slane %v3196, 1
        %v3198 = vmax.f32 %v3196, %v3197
        %v3199 = vsel %vm2554, %v2321, -inf
        %v3200 = vrot.slane %v3199, 4
        %v3201 = vmax.f32 %v3199, %v3200
        %v3202 = vrot.slane %v3201, 2
        %v3203 = vmax.f32 %v3201, %v3202
        %v3204 = vrot.slane %v3203, 1
        %v3205 = vmax.f32 %v3203, %v3204
        %v3206 = vsel %vm2554, %v2431, -inf
        %v3207 = vrot.slane %v3206, 4
        %v3208 = vmax.f32 %v3206, %v3207
        %v3209 = vrot.slane %v3208, 2
        %v3210 = vmax.f32 %v3208, %v3209
        %v3211 = vrot.slane %v3210, 1
        %v3212 = vmax.f32 %v3210, %v3211
        %v3213 = vsel %vm2554, %v2432, -inf
        %v3214 = vrot.slane %v3213, 4
        %v3215 = vmax.f32 %v3213, %v3214
        %v3216 = vrot.slane %v3215, 2
        %v3217 = vmax.f32 %v3215, %v3216
        %v3218 = vrot.slane %v3217, 1
        %v3219 = vmax.f32 %v3217, %v3218
        %v3220 = vsel %vm2554, %v2433, -inf
        %v3221 = vrot.slane %v3220, 4
        %v3222 = vmax.f32 %v3220, %v3221
        %v3223 = vrot.slane %v3222, 2
        %v3224 = vmax.f32 %v3222, %v3223
        %v3225 = vrot.slane %v3224, 1
        %v3226 = vmax.f32 %v3224, %v3225
        %v3227 = vsel %vm2554, %v2322, -inf
        %v3228 = vrot.slane %v3227, 4
        %v3229 = vmax.f32 %v3227, %v3228
        %v3230 = vrot.slane %v3229, 2
        %v3231 = vmax.f32 %v3229, %v3230
        %v3232 = vrot.slane %v3231, 1
        %v3233 = vmax.f32 %v3231, %v3232
        %v3234 = vsel %vm2554, %v2434, -inf
        %v3235 = vrot.slane %v3234, 4
        %v3236 = vmax.f32 %v3234, %v3235
        %v3237 = vrot.slane %v3236, 2
        %v3238 = vmax.f32 %v3236, %v3237
        %v3239 = vrot.slane %v3238, 1
        %v3240 = vmax.f32 %v3238, %v3239
        %v3241 = vsel %vm2554, %v2435, -inf
        %v3242 = vrot.slane %v3241, 4
        %v3243 = vmax.f32 %v3241, %v3242
        %v3244 = vrot.slane %v3243, 2
        %v3245 = vmax.f32 %v3243, %v3244
        %v3246 = vrot.slane %v3245, 1
        %v3247 = vmax.f32 %v3245, %v3246
        %v3248 = vsel %vm2554, %v2436, -inf
        %v3249 = vrot.slane %v3248, 4
        %v3250 = vmax.f32 %v3248, %v3249
        %v3251 = vrot.slane %v3250, 2
        %v3252 = vmax.f32 %v3250, %v3251
        %v3253 = vrot.slane %v3252, 1
        %v3254 = vmax.f32 %v3252, %v3253
        %v3255 = vsel %vm2554, %v2323, -inf
        %v3256 = vrot.slane %v3255, 4
        %v3257 = vmax.f32 %v3255, %v3256
        %v3258 = vrot.slane %v3257, 2
        %v3259 = vmax.f32 %v3257, %v3258
        %v3260 = vrot.slane %v3259, 1
        %v3261 = vmax.f32 %v3259, %v3260
        %v3262 = vsel %vm2554, %v2437, -inf
        %v3263 = vrot.slane %v3262, 4
        %v3264 = vmax.f32 %v3262, %v3263
        %v3265 = vrot.slane %v3264, 2
        %v3266 = vmax.f32 %v3264, %v3265
        %v3267 = vrot.slane %v3266, 1
        %v3268 = vmax.f32 %v3266, %v3267
        %v3269 = vsel %vm2554, %v2438, -inf
        %v3270 = vrot.slane %v3269, 4
        %v3271 = vmax.f32 %v3269, %v3270
        %v3272 = vrot.slane %v3271, 2
        %v3273 = vmax.f32 %v3271, %v3272
        %v3274 = vrot.slane %v3273, 1
        %v3275 = vmax.f32 %v3273, %v3274
        %v3276 = vsel %vm2554, %v2439, -inf
        %v3277 = vrot.slane %v3276, 4
        %v3278 = vmax.f32 %v3276, %v3277
        %v3279 = vrot.slane %v3278, 2
        %v3280 = vmax.f32 %v3278, %v3279
        %v3281 = vrot.slane %v3280, 1
        %v3282 = vmax.f32 %v3280, %v3281
        %v3283 = vsel %vm2554, %v2324, -inf
        %v3284 = vrot.slane %v3283, 4
        %v3285 = vmax.f32 %v3283, %v3284
        %v3286 = vrot.slane %v3285, 2
        %v3287 = vmax.f32 %v3285, %v3286
        %v3288 = vrot.slane %v3287, 1
        %v3289 = vmax.f32 %v3287, %v3288
        %v3290 = vsel %vm2554, %v2440, -inf
        %v3291 = vrot.slane %v3290, 4
        %v3292 = vmax.f32 %v3290, %v3291
        %v3293 = vrot.slane %v3292, 2
        %v3294 = vmax.f32 %v3292, %v3293
        %v3295 = vrot.slane %v3294, 1
        %v3296 = vmax.f32 %v3294, %v3295
        %v3297 = vsel %vm2554, %v2441, -inf
        %v3298 = vrot.slane %v3297, 4
        %v3299 = vmax.f32 %v3297, %v3298
        %v3300 = vrot.slane %v3299, 2
        %v3301 = vmax.f32 %v3299, %v3300
        %v3302 = vrot.slane %v3301, 1
        %v3303 = vmax.f32 %v3301, %v3302
        %v3304 = vsel %vm2554, %v2442, -inf
        %v3305 = vrot.slane %v3304, 4
        %v3306 = vmax.f32 %v3304, %v3305
        %v3307 = vrot.slane %v3306, 2
        %v3308 = vmax.f32 %v3306, %v3307
        %v3309 = vrot.slane %v3308, 1
        %v3310 = vmax.f32 %v3308, %v3309
        %v3311 = vsel %vm2554, %v2325, -inf
        %v3312 = vrot.slane %v3311, 4
        %v3313 = vmax.f32 %v3311, %v3312
        %v3314 = vrot.slane %v3313, 2
        %v3315 = vmax.f32 %v3313, %v3314
        %v3316 = vrot.slane %v3315, 1
        %v3317 = vmax.f32 %v3315, %v3316
        %v3318 = vsel %vm2554, %v2443, -inf
        %v3319 = vrot.slane %v3318, 4
        %v3320 = vmax.f32 %v3318, %v3319
        %v3321 = vrot.slane %v3320, 2
        %v3322 = vmax.f32 %v3320, %v3321
        %v3323 = vrot.slane %v3322, 1
        %v3324 = vmax.f32 %v3322, %v3323
        %v3325 = vsel %vm2554, %v2444, -inf
        %v3326 = vrot.slane %v3325, 4
        %v3327 = vmax.f32 %v3325, %v3326
        %v3328 = vrot.slane %v3327, 2
        %v3329 = vmax.f32 %v3327, %v3328
        %v3330 = vrot.slane %v3329, 1
        %v3331 = vmax.f32 %v3329, %v3330
        %v3332 = vsel %vm2554, %v2445, -inf
        %v3333 = vrot.slane %v3332, 4
        %v3334 = vmax.f32 %v3332, %v3333
        %v3335 = vrot.slane %v3334, 2
        %v3336 = vmax.f32 %v3334, %v3335
        %v3337 = vrot.slane %v3336, 1
        %v3338 = vmax.f32 %v3336, %v3337
        %v3339 = vsel %vm2554, %v2326, -inf
        %v3340 = vrot.slane %v3339, 4
        %v3341 = vmax.f32 %v3339, %v3340
        %v3342 = vrot.slane %v3341, 2
        %v3343 = vmax.f32 %v3341, %v3342
        %v3344 = vrot.slane %v3343, 1
        %v3345 = vmax.f32 %v3343, %v3344
        %v3346 = vsel %vm2554, %v2446, -inf
        %v3347 = vrot.slane %v3346, 4
        %v3348 = vmax.f32 %v3346, %v3347
        %v3349 = vrot.slane %v3348, 2
        %v3350 = vmax.f32 %v3348, %v3349
        %v3351 = vrot.slane %v3350, 1
        %v3352 = vmax.f32 %v3350, %v3351
        %v3353 = vsel %vm2554, %v2447, -inf
        %v3354 = vrot.slane %v3353, 4
        %v3355 = vmax.f32 %v3353, %v3354
        %v3356 = vrot.slane %v3355, 2
        %v3357 = vmax.f32 %v3355, %v3356
        %v3358 = vrot.slane %v3357, 1
        %v3359 = vmax.f32 %v3357, %v3358
        %v3360 = vsel %vm2554, %v2448, -inf
        %v3361 = vrot.slane %v3360, 4
        %v3362 = vmax.f32 %v3360, %v3361
        %v3363 = vrot.slane %v3362, 2
        %v3364 = vmax.f32 %v3362, %v3363
        %v3365 = vrot.slane %v3364, 1
        %v3366 = vmax.f32 %v3364, %v3365
        %v3367 = vsel %vm2554, %v2327, -inf
        %v3368 = vrot.slane %v3367, 4
        %v3369 = vmax.f32 %v3367, %v3368
        %v3370 = vrot.slane %v3369, 2
        %v3371 = vmax.f32 %v3369, %v3370
        %v3372 = vrot.slane %v3371, 1
        %v3373 = vmax.f32 %v3371, %v3372
        %v3374 = vsel %vm2554, %v2449, -inf
        %v3375 = vrot.slane %v3374, 4
        %v3376 = vmax.f32 %v3374, %v3375
        %v3377 = vrot.slane %v3376, 2
        %v3378 = vmax.f32 %v3376, %v3377
        %v3379 = vrot.slane %v3378, 1
        %v3380 = vmax.f32 %v3378, %v3379
        %v3381 = vsel %vm2554, %v2450, -inf
        %v3382 = vrot.slane %v3381, 4
        %v3383 = vmax.f32 %v3381, %v3382
        %v3384 = vrot.slane %v3383, 2
        %v3385 = vmax.f32 %v3383, %v3384
        %v3386 = vrot.slane %v3385, 1
        %v3387 = vmax.f32 %v3385, %v3386
        %v3388 = vsel %vm2554, %v2451, -inf
        %v3389 = vrot.slane %v3388, 4
        %v3390 = vmax.f32 %v3388, %v3389
        %v3391 = vrot.slane %v3390, 2
        %v3392 = vmax.f32 %v3390, %v3391
        %v3393 = vrot.slane %v3392, 1
        %v3394 = vmax.f32 %v3392, %v3393
        %v3395 = vsel %vm2554, %v2328, -inf
        %v3396 = vrot.slane %v3395, 4
        %v3397 = vmax.f32 %v3395, %v3396
        %v3398 = vrot.slane %v3397, 2
        %v3399 = vmax.f32 %v3397, %v3398
        %v3400 = vrot.slane %v3399, 1
        %v3401 = vmax.f32 %v3399, %v3400
        %v3402 = vsel %vm2554, %v2452, -inf
        %v3403 = vrot.slane %v3402, 4
        %v3404 = vmax.f32 %v3402, %v3403
        %v3405 = vrot.slane %v3404, 2
        %v3406 = vmax.f32 %v3404, %v3405
        %v3407 = vrot.slane %v3406, 1
        %v3408 = vmax.f32 %v3406, %v3407
        %v3409 = vsel %vm2554, %v2453, -inf
        %v3410 = vrot.slane %v3409, 4
        %v3411 = vmax.f32 %v3409, %v3410
        %v3412 = vrot.slane %v3411, 2
        %v3413 = vmax.f32 %v3411, %v3412
        %v3414 = vrot.slane %v3413, 1
        %v3415 = vmax.f32 %v3413, %v3414
        %v3416 = vsel %vm2554, %v2454, -inf
        %v3417 = vrot.slane %v3416, 4
        %v3418 = vmax.f32 %v3416, %v3417
        %v3419 = vrot.slane %v3418, 2
        %v3420 = vmax.f32 %v3418, %v3419
        %v3421 = vrot.slane %v3420, 1
        %v3422 = vmax.f32 %v3420, %v3421
        %v3423 = vsel %vm2554, %v2329, -inf
        %v3424 = vrot.slane %v3423, 4
        %v3425 = vmax.f32 %v3423, %v3424
        %v3426 = vrot.slane %v3425, 2
        %v3427 = vmax.f32 %v3425, %v3426
        %v3428 = vrot.slane %v3427, 1
        %v3429 = vmax.f32 %v3427, %v3428
        %v3430 = vsel %vm2554, %v2455, -inf
        %v3431 = vrot.slane %v3430, 4
        %v3432 = vmax.f32 %v3430, %v3431
        %v3433 = vrot.slane %v3432, 2
        %v3434 = vmax.f32 %v3432, %v3433
        %v3435 = vrot.slane %v3434, 1
        %v3436 = vmax.f32 %v3434, %v3435
        %v3437 = vsel %vm2554, %v2456, -inf
        %v3438 = vrot.slane %v3437, 4
        %v3439 = vmax.f32 %v3437, %v3438
        %v3440 = vrot.slane %v3439, 2
        %v3441 = vmax.f32 %v3439, %v3440
        %v3442 = vrot.slane %v3441, 1
        %v3443 = vmax.f32 %v3441, %v3442
        %v3444 = vsel %vm2554, %v2457, -inf
        %v3445 = vrot.slane %v3444, 4
        %v3446 = vmax.f32 %v3444, %v3445
        %v3447 = vrot.slane %v3446, 2
        %v3448 = vmax.f32 %v3446, %v3447
        %v3449 = vrot.slane %v3448, 1
        %v3450 = vmax.f32 %v3448, %v3449
        %v3451 = vsel %vm1353, %v2561, -inf
        %v3452 = vsel %vm1353, %v2673, -inf
        %v3453 = vmax.f32 %v3451, %v3452
        %v3454 = vsel %vm1353, %v2568, -inf
        %v3455 = vsel %vm1353, %v2680, -inf
        %v3456 = vmax.f32 %v3454, %v3455
        %v3457 = vsel %vm1353, %v2575, -inf
        %v3458 = vsel %vm1353, %v2687, -inf
        %v3459 = vmax.f32 %v3457, %v3458
        %v3460 = vsel %vm1353, %v2582, -inf
        %v3461 = vsel %vm1353, %v2694, -inf
        %v3462 = vmax.f32 %v3460, %v3461
        %v3463 = vsel %vm1353, %v2589, -inf
        %v3464 = vsel %vm1353, %v2701, -inf
        %v3465 = vmax.f32 %v3463, %v3464
        %v3466 = vsel %vm1353, %v2596, -inf
        %v3467 = vsel %vm1353, %v2708, -inf
        %v3468 = vmax.f32 %v3466, %v3467
        %v3469 = vsel %vm1353, %v2603, -inf
        %v3470 = vsel %vm1353, %v2715, -inf
        %v3471 = vmax.f32 %v3469, %v3470
        %v3472 = vsel %vm1353, %v2610, -inf
        %v3473 = vsel %vm1353, %v2722, -inf
        %v3474 = vmax.f32 %v3472, %v3473
        %v3475 = vsel %vm1353, %v2617, -inf
        %v3476 = vsel %vm1353, %v2729, -inf
        %v3477 = vmax.f32 %v3475, %v3476
        %v3478 = vsel %vm1353, %v2624, -inf
        %v3479 = vsel %vm1353, %v2736, -inf
        %v3480 = vmax.f32 %v3478, %v3479
        %v3481 = vsel %vm1353, %v2631, -inf
        %v3482 = vsel %vm1353, %v2743, -inf
        %v3483 = vmax.f32 %v3481, %v3482
        %v3484 = vsel %vm1353, %v2638, -inf
        %v3485 = vsel %vm1353, %v2750, -inf
        %v3486 = vmax.f32 %v3484, %v3485
        %v3487 = vsel %vm1353, %v2645, -inf
        %v3488 = vsel %vm1353, %v2757, -inf
        %v3489 = vmax.f32 %v3487, %v3488
        %v3490 = vsel %vm1353, %v2652, -inf
        %v3491 = vsel %vm1353, %v2764, -inf
        %v3492 = vmax.f32 %v3490, %v3491
        %v3493 = vsel %vm1353, %v2659, -inf
        %v3494 = vsel %vm1353, %v2771, -inf
        %v3495 = vmax.f32 %v3493, %v3494
        %v3496 = vsel %vm1353, %v2666, -inf
        %v3497 = vsel %vm1353, %v2778, -inf
        %v3498 = vmax.f32 %v3496, %v3497
        %v3499 = vsel %vm1353, %v2785, -inf
        %v3500 = vsel %vm1353, %v2897, -inf
        %v3501 = vmax.f32 %v3499, %v3500
        %v3502 = vsel %vm1353, %v2792, -inf
        %v3503 = vsel %vm1353, %v2904, -inf
        %v3504 = vmax.f32 %v3502, %v3503
        %v3505 = vsel %vm1353, %v2799, -inf
        %v3506 = vsel %vm1353, %v2911, -inf
        %v3507 = vmax.f32 %v3505, %v3506
        %v3508 = vsel %vm1353, %v2806, -inf
        %v3509 = vsel %vm1353, %v2918, -inf
        %v3510 = vmax.f32 %v3508, %v3509
        %v3511 = vsel %vm1353, %v2813, -inf
        %v3512 = vsel %vm1353, %v2925, -inf
        %v3513 = vmax.f32 %v3511, %v3512
        %v3514 = vsel %vm1353, %v2820, -inf
        %v3515 = vsel %vm1353, %v2932, -inf
        %v3516 = vmax.f32 %v3514, %v3515
        %v3517 = vsel %vm1353, %v2827, -inf
        %v3518 = vsel %vm1353, %v2939, -inf
        %v3519 = vmax.f32 %v3517, %v3518
        %v3520 = vsel %vm1353, %v2834, -inf
        %v3521 = vsel %vm1353, %v2946, -inf
        %v3522 = vmax.f32 %v3520, %v3521
        %v3523 = vsel %vm1353, %v2841, -inf
        %v3524 = vsel %vm1353, %v2953, -inf
        %v3525 = vmax.f32 %v3523, %v3524
        %v3526 = vsel %vm1353, %v2848, -inf
        %v3527 = vsel %vm1353, %v2960, -inf
        %v3528 = vmax.f32 %v3526, %v3527
        %v3529 = vsel %vm1353, %v2855, -inf
        %v3530 = vsel %vm1353, %v2967, -inf
        %v3531 = vmax.f32 %v3529, %v3530
        %v3532 = vsel %vm1353, %v2862, -inf
        %v3533 = vsel %vm1353, %v2974, -inf
        %v3534 = vmax.f32 %v3532, %v3533
        %v3535 = vsel %vm1353, %v2869, -inf
        %v3536 = vsel %vm1353, %v2981, -inf
        %v3537 = vmax.f32 %v3535, %v3536
        %v3538 = vsel %vm1353, %v2876, -inf
        %v3539 = vsel %vm1353, %v2988, -inf
        %v3540 = vmax.f32 %v3538, %v3539
        %v3541 = vsel %vm1353, %v2883, -inf
        %v3542 = vsel %vm1353, %v2995, -inf
        %v3543 = vmax.f32 %v3541, %v3542
        %v3544 = vsel %vm1353, %v2890, -inf
        %v3545 = vsel %vm1353, %v3002, -inf
        %v3546 = vmax.f32 %v3544, %v3545
        %v3547 = vsel %vm1353, %v3009, -inf
        %v3548 = vsel %vm1353, %v3121, -inf
        %v3549 = vmax.f32 %v3547, %v3548
        %v3550 = vsel %vm1353, %v3016, -inf
        %v3551 = vsel %vm1353, %v3128, -inf
        %v3552 = vmax.f32 %v3550, %v3551
        %v3553 = vsel %vm1353, %v3023, -inf
        %v3554 = vsel %vm1353, %v3135, -inf
        %v3555 = vmax.f32 %v3553, %v3554
        %v3556 = vsel %vm1353, %v3030, -inf
        %v3557 = vsel %vm1353, %v3142, -inf
        %v3558 = vmax.f32 %v3556, %v3557
        %v3559 = vsel %vm1353, %v3037, -inf
        %v3560 = vsel %vm1353, %v3149, -inf
        %v3561 = vmax.f32 %v3559, %v3560
        %v3562 = vsel %vm1353, %v3044, -inf
        %v3563 = vsel %vm1353, %v3156, -inf
        %v3564 = vmax.f32 %v3562, %v3563
        %v3565 = vsel %vm1353, %v3051, -inf
        %v3566 = vsel %vm1353, %v3163, -inf
        %v3567 = vmax.f32 %v3565, %v3566
        %v3568 = vsel %vm1353, %v3058, -inf
        %v3569 = vsel %vm1353, %v3170, -inf
        %v3570 = vmax.f32 %v3568, %v3569
        %v3571 = vsel %vm1353, %v3065, -inf
        %v3572 = vsel %vm1353, %v3177, -inf
        %v3573 = vmax.f32 %v3571, %v3572
        %v3574 = vsel %vm1353, %v3072, -inf
        %v3575 = vsel %vm1353, %v3184, -inf
        %v3576 = vmax.f32 %v3574, %v3575
        %v3577 = vsel %vm1353, %v3079, -inf
        %v3578 = vsel %vm1353, %v3191, -inf
        %v3579 = vmax.f32 %v3577, %v3578
        %v3580 = vsel %vm1353, %v3086, -inf
        %v3581 = vsel %vm1353, %v3198, -inf
        %v3582 = vmax.f32 %v3580, %v3581
        %v3583 = vsel %vm1353, %v3093, -inf
        %v3584 = vsel %vm1353, %v3205, -inf
        %v3585 = vmax.f32 %v3583, %v3584
        %v3586 = vsel %vm1353, %v3100, -inf
        %v3587 = vsel %vm1353, %v3212, -inf
        %v3588 = vmax.f32 %v3586, %v3587
        %v3589 = vsel %vm1353, %v3107, -inf
        %v3590 = vsel %vm1353, %v3219, -inf
        %v3591 = vmax.f32 %v3589, %v3590
        %v3592 = vsel %vm1353, %v3114, -inf
        %v3593 = vsel %vm1353, %v3226, -inf
        %v3594 = vmax.f32 %v3592, %v3593
        %v3595 = vsel %vm1353, %v3233, -inf
        %v3596 = vsel %vm1353, %v3345, -inf
        %v3597 = vmax.f32 %v3595, %v3596
        %v3598 = vsel %vm1353, %v3240, -inf
        %v3599 = vsel %vm1353, %v3352, -inf
        %v3600 = vmax.f32 %v3598, %v3599
        %v3601 = vsel %vm1353, %v3247, -inf
        %v3602 = vsel %vm1353, %v3359, -inf
        %v3603 = vmax.f32 %v3601, %v3602
        %v3604 = vsel %vm1353, %v3254, -inf
        %v3605 = vsel %vm1353, %v3366, -inf
        %v3606 = vmax.f32 %v3604, %v3605
        %v3607 = vsel %vm1353, %v3261, -inf
        %v3608 = vsel %vm1353, %v3373, -inf
        %v3609 = vmax.f32 %v3607, %v3608
        %v3610 = vsel %vm1353, %v3268, -inf
        %v3611 = vsel %vm1353, %v3380, -inf
        %v3612 = vmax.f32 %v3610, %v3611
        %v3613 = vsel %vm1353, %v3275, -inf
        %v3614 = vsel %vm1353, %v3387, -inf
        %v3615 = vmax.f32 %v3613, %v3614
        %v3616 = vsel %vm1353, %v3282, -inf
        %v3617 = vsel %vm1353, %v3394, -inf
        %v3618 = vmax.f32 %v3616, %v3617
        %v3619 = vsel %vm1353, %v3289, -inf
        %v3620 = vsel %vm1353, %v3401, -inf
        %v3621 = vmax.f32 %v3619, %v3620
        %v3622 = vsel %vm1353, %v3296, -inf
        %v3623 = vsel %vm1353, %v3408, -inf
        %v3624 = vmax.f32 %v3622, %v3623
        %v3625 = vsel %vm1353, %v3303, -inf
        %v3626 = vsel %vm1353, %v3415, -inf
        %v3627 = vmax.f32 %v3625, %v3626
        %v3628 = vsel %vm1353, %v3310, -inf
        %v3629 = vsel %vm1353, %v3422, -inf
        %v3630 = vmax.f32 %v3628, %v3629
        %v3631 = vsel %vm1353, %v3317, -inf
        %v3632 = vsel %vm1353, %v3429, -inf
        %v3633 = vmax.f32 %v3631, %v3632
        %v3634 = vsel %vm1353, %v3324, -inf
        %v3635 = vsel %vm1353, %v3436, -inf
        %v3636 = vmax.f32 %v3634, %v3635
        %v3637 = vsel %vm1353, %v3331, -inf
        %v3638 = vsel %vm1353, %v3443, -inf
        %v3639 = vmax.f32 %v3637, %v3638
        %v3640 = vsel %vm1353, %v3338, -inf
        %v3641 = vsel %vm1353, %v3450, -inf
        %v3642 = vmax.f32 %v3640, %v3641
        %v3643 = vld [vmem:[%s2] sm:$0x1]
        %v3645 = vperm.slane %v3643, 0
        %v3647 = vadd.f32 %v3453, %v3645
        %v3648 = vadd.f32 %v3456, %v3645
        %v3649 = vadd.f32 %v3459, %v3645
        %v3650 = vadd.f32 %v3462, %v3645
        %v3651 = vadd.f32 %v3465, %v3645
        %v3652 = vadd.f32 %v3468, %v3645
        %v3653 = vadd.f32 %v3471, %v3645
        %v3654 = vadd.f32 %v3474, %v3645
        %v3655 = vadd.f32 %v3477, %v3645
        %v3656 = vadd.f32 %v3480, %v3645
        %v3657 = vadd.f32 %v3483, %v3645
        %v3658 = vadd.f32 %v3486, %v3645
        %v3659 = vadd.f32 %v3489, %v3645
        %v3660 = vadd.f32 %v3492, %v3645
        %v3661 = vadd.f32 %v3495, %v3645
        %v3662 = vadd.f32 %v3498, %v3645
        %v3663 = vadd.f32 %v3501, %v3645
        %v3664 = vadd.f32 %v3504, %v3645
        %v3665 = vadd.f32 %v3507, %v3645
        %v3666 = vadd.f32 %v3510, %v3645
        %v3667 = vadd.f32 %v3513, %v3645
        %v3668 = vadd.f32 %v3516, %v3645
        %v3669 = vadd.f32 %v3519, %v3645
        %v3670 = vadd.f32 %v3522, %v3645
        %v3671 = vadd.f32 %v3525, %v3645
        %v3672 = vadd.f32 %v3528, %v3645
        %v3673 = vadd.f32 %v3531, %v3645
        %v3674 = vadd.f32 %v3534, %v3645
        %v3675 = vadd.f32 %v3537, %v3645
        %v3676 = vadd.f32 %v3540, %v3645
        %v3677 = vadd.f32 %v3543, %v3645
        %v3678 = vadd.f32 %v3546, %v3645
        %v3679 = vadd.f32 %v3549, %v3645
        %v3680 = vadd.f32 %v3552, %v3645
        %v3681 = vadd.f32 %v3555, %v3645
        %v3682 = vadd.f32 %v3558, %v3645
        %v3683 = vadd.f32 %v3561, %v3645
        %v3684 = vadd.f32 %v3564, %v3645
        %v3685 = vadd.f32 %v3567, %v3645
        %v3686 = vadd.f32 %v3570, %v3645
        %v3687 = vadd.f32 %v3573, %v3645
        %v3688 = vadd.f32 %v3576, %v3645
        %v3689 = vadd.f32 %v3579, %v3645
        %v3690 = vadd.f32 %v3582, %v3645
        %v3691 = vadd.f32 %v3585, %v3645
        %v3692 = vadd.f32 %v3588, %v3645
        %v3693 = vadd.f32 %v3591, %v3645
        %v3694 = vadd.f32 %v3594, %v3645
        %v3695 = vadd.f32 %v3597, %v3645
        %v3696 = vadd.f32 %v3600, %v3645
        %v3697 = vadd.f32 %v3603, %v3645
        %v3698 = vadd.f32 %v3606, %v3645
        %v3699 = vadd.f32 %v3609, %v3645
        %v3700 = vadd.f32 %v3612, %v3645
        %v3701 = vadd.f32 %v3615, %v3645
        %v3702 = vadd.f32 %v3618, %v3645
        %v3703 = vadd.f32 %v3621, %v3645
        %v3704 = vadd.f32 %v3624, %v3645
        %v3705 = vadd.f32 %v3627, %v3645
        %v3706 = vadd.f32 %v3630, %v3645
        %v3707 = vadd.f32 %v3633, %v3645
        %v3708 = vadd.f32 %v3636, %v3645
        %v3709 = vadd.f32 %v3639, %v3645
        %v3710 = vadd.f32 %v3642, %v3645
        %v3711 = vmax.f32 %v3647, 0.0
        %v3712 = vmax.f32 %v3648, 0.0
        %v3713 = vmax.f32 %v3649, 0.0
        %v3714 = vmax.f32 %v3650, 0.0
        %v3715 = vmax.f32 %v3651, 0.0
        %v3716 = vmax.f32 %v3652, 0.0
        %v3717 = vmax.f32 %v3653, 0.0
        %v3718 = vmax.f32 %v3654, 0.0
        %v3719 = vmax.f32 %v3655, 0.0
        %v3720 = vmax.f32 %v3656, 0.0
        %v3721 = vmax.f32 %v3657, 0.0
        %v3722 = vmax.f32 %v3658, 0.0
        %v3723 = vmax.f32 %v3659, 0.0
        %v3724 = vmax.f32 %v3660, 0.0
        %v3725 = vmax.f32 %v3661, 0.0
        %v3726 = vmax.f32 %v3662, 0.0
        %v3727 = vmax.f32 %v3663, 0.0
        %v3728 = vmax.f32 %v3664, 0.0
        %v3729 = vmax.f32 %v3665, 0.0
        %v3730 = vmax.f32 %v3666, 0.0
        %v3731 = vmax.f32 %v3667, 0.0
        %v3732 = vmax.f32 %v3668, 0.0
        %v3733 = vmax.f32 %v3669, 0.0
        %v3734 = vmax.f32 %v3670, 0.0
        %v3735 = vmax.f32 %v3671, 0.0
        %v3736 = vmax.f32 %v3672, 0.0
        %v3737 = vmax.f32 %v3673, 0.0
        %v3738 = vmax.f32 %v3674, 0.0
        %v3739 = vmax.f32 %v3675, 0.0
        %v3740 = vmax.f32 %v3676, 0.0
        %v3741 = vmax.f32 %v3677, 0.0
        %v3742 = vmax.f32 %v3678, 0.0
        %v3743 = vmax.f32 %v3679, 0.0
        %v3744 = vmax.f32 %v3680, 0.0
        %v3745 = vmax.f32 %v3681, 0.0
        %v3746 = vmax.f32 %v3682, 0.0
        %v3747 = vmax.f32 %v3683, 0.0
        %v3748 = vmax.f32 %v3684, 0.0
        %v3749 = vmax.f32 %v3685, 0.0
        %v3750 = vmax.f32 %v3686, 0.0
        %v3751 = vmax.f32 %v3687, 0.0
        %v3752 = vmax.f32 %v3688, 0.0
        %v3753 = vmax.f32 %v3689, 0.0
        %v3754 = vmax.f32 %v3690, 0.0
        %v3755 = vmax.f32 %v3691, 0.0
        %v3756 = vmax.f32 %v3692, 0.0
        %v3757 = vmax.f32 %v3693, 0.0
        %v3758 = vmax.f32 %v3694, 0.0
        %v3759 = vmax.f32 %v3695, 0.0
        %v3760 = vmax.f32 %v3696, 0.0
        %v3761 = vmax.f32 %v3697, 0.0
        %v3762 = vmax.f32 %v3698, 0.0
        %v3763 = vmax.f32 %v3699, 0.0
        %v3764 = vmax.f32 %v3700, 0.0
        %v3765 = vmax.f32 %v3701, 0.0
        %v3766 = vmax.f32 %v3702, 0.0
        %v3767 = vmax.f32 %v3703, 0.0
        %v3768 = vmax.f32 %v3704, 0.0
        %v3769 = vmax.f32 %v3705, 0.0
        %v3770 = vmax.f32 %v3706, 0.0
        %v3771 = vmax.f32 %v3707, 0.0
        %v3772 = vmax.f32 %v3708, 0.0
        %v3773 = vmax.f32 %v3709, 0.0
        %v3774 = vmax.f32 %v3710, 0.0
        %v3775 = vpack.c.bf16 %v3711, %v3711
        %v3776 = vpack.c.bf16 %v3712, %v3712
        %v3777 = vpack.c.bf16 %v3713, %v3713
        %v3778 = vpack.c.bf16 %v3714, %v3714
        %v3779 = vpack.c.bf16 %v3715, %v3715
        %v3780 = vpack.c.bf16 %v3716, %v3716
        %v3781 = vpack.c.bf16 %v3717, %v3717
        %v3782 = vpack.c.bf16 %v3718, %v3718
        %v3783 = vpack.c.bf16 %v3719, %v3719
        %v3784 = vpack.c.bf16 %v3720, %v3720
        %v3785 = vpack.c.bf16 %v3721, %v3721
        %v3786 = vpack.c.bf16 %v3722, %v3722
        %v3787 = vpack.c.bf16 %v3723, %v3723
        %v3788 = vpack.c.bf16 %v3724, %v3724
        %v3789 = vpack.c.bf16 %v3725, %v3725
        %v3790 = vpack.c.bf16 %v3726, %v3726
        %v3791 = vpack.c.bf16 %v3727, %v3727
        %v3792 = vpack.c.bf16 %v3728, %v3728
        %v3793 = vpack.c.bf16 %v3729, %v3729
        %v3794 = vpack.c.bf16 %v3730, %v3730
        %v3795 = vpack.c.bf16 %v3731, %v3731
        %v3796 = vpack.c.bf16 %v3732, %v3732
        %v3797 = vpack.c.bf16 %v3733, %v3733
        %v3798 = vpack.c.bf16 %v3734, %v3734
        %v3799 = vpack.c.bf16 %v3735, %v3735
        %v3800 = vpack.c.bf16 %v3736, %v3736
        %v3801 = vpack.c.bf16 %v3737, %v3737
        %v3802 = vpack.c.bf16 %v3738, %v3738
        %v3803 = vpack.c.bf16 %v3739, %v3739
        %v3804 = vpack.c.bf16 %v3740, %v3740
        %v3805 = vpack.c.bf16 %v3741, %v3741
        %v3806 = vpack.c.bf16 %v3742, %v3742
        %v3807 = vpack.c.bf16 %v3743, %v3743
        %v3808 = vpack.c.bf16 %v3744, %v3744
        %v3809 = vpack.c.bf16 %v3745, %v3745
        %v3810 = vpack.c.bf16 %v3746, %v3746
        %v3811 = vpack.c.bf16 %v3747, %v3747
        %v3812 = vpack.c.bf16 %v3748, %v3748
        %v3813 = vpack.c.bf16 %v3749, %v3749
        %v3814 = vpack.c.bf16 %v3750, %v3750
        %v3815 = vpack.c.bf16 %v3751, %v3751
        %v3816 = vpack.c.bf16 %v3752, %v3752
        %v3817 = vpack.c.bf16 %v3753, %v3753
        %v3818 = vpack.c.bf16 %v3754, %v3754
        %v3819 = vpack.c.bf16 %v3755, %v3755
        %v3820 = vpack.c.bf16 %v3756, %v3756
        %v3821 = vpack.c.bf16 %v3757, %v3757
        %v3822 = vpack.c.bf16 %v3758, %v3758
        %v3823 = vpack.c.bf16 %v3759, %v3759
        %v3824 = vpack.c.bf16 %v3760, %v3760
        %v3825 = vpack.c.bf16 %v3761, %v3761
        %v3826 = vpack.c.bf16 %v3762, %v3762
        %v3827 = vpack.c.bf16 %v3763, %v3763
        %v3828 = vpack.c.bf16 %v3764, %v3764
        %v3829 = vpack.c.bf16 %v3765, %v3765
        %v3830 = vpack.c.bf16 %v3766, %v3766
        %v3831 = vpack.c.bf16 %v3767, %v3767
        %v3832 = vpack.c.bf16 %v3768, %v3768
        %v3833 = vpack.c.bf16 %v3769, %v3769
        %v3834 = vpack.c.bf16 %v3770, %v3770
        %v3835 = vpack.c.bf16 %v3771, %v3771
        %v3836 = vpack.c.bf16 %v3772, %v3772
        %v3837 = vpack.c.bf16 %v3773, %v3773
        %v3838 = vpack.c.bf16 %v3774, %v3774
        %v3903 = vunpack.c.l.b16 %v3775
        %v3904 = vunpack.c.l.b16 %v3776
        %v3905 = vunpack.c.l.b16 %v3777
        %v3906 = vunpack.c.l.b16 %v3778
        %v3907 = vunpack.c.l.b16 %v3779
        %v3908 = vunpack.c.l.b16 %v3780
        %v3909 = vunpack.c.l.b16 %v3781
        %v3910 = vunpack.c.l.b16 %v3782
        %v3911 = vunpack.c.l.b16 %v3783
        %v3912 = vunpack.c.l.b16 %v3784
        %v3913 = vunpack.c.l.b16 %v3785
        %v3914 = vunpack.c.l.b16 %v3786
        %v3915 = vunpack.c.l.b16 %v3787
        %v3916 = vunpack.c.l.b16 %v3788
        %v3917 = vunpack.c.l.b16 %v3789
        %v3918 = vunpack.c.l.b16 %v3790
        %v3919 = vunpack.c.l.b16 %v3791
        %v3920 = vunpack.c.l.b16 %v3792
        %v3921 = vunpack.c.l.b16 %v3793
        %v3922 = vunpack.c.l.b16 %v3794
        %v3923 = vunpack.c.l.b16 %v3795
        %v3924 = vunpack.c.l.b16 %v3796
        %v3925 = vunpack.c.l.b16 %v3797
        %v3926 = vunpack.c.l.b16 %v3798
        %v3927 = vunpack.c.l.b16 %v3799
        %v3928 = vunpack.c.l.b16 %v3800
        %v3929 = vunpack.c.l.b16 %v3801
        %v3930 = vunpack.c.l.b16 %v3802
        %v3931 = vunpack.c.l.b16 %v3803
        %v3932 = vunpack.c.l.b16 %v3804
        %v3933 = vunpack.c.l.b16 %v3805
        %v3934 = vunpack.c.l.b16 %v3806
        %v3935 = vunpack.c.l.b16 %v3807
        %v3936 = vunpack.c.l.b16 %v3808
        %v3937 = vunpack.c.l.b16 %v3809
        %v3938 = vunpack.c.l.b16 %v3810
        %v3939 = vunpack.c.l.b16 %v3811
        %v3940 = vunpack.c.l.b16 %v3812
        %v3941 = vunpack.c.l.b16 %v3813
        %v3942 = vunpack.c.l.b16 %v3814
        %v3943 = vunpack.c.l.b16 %v3815
        %v3944 = vunpack.c.l.b16 %v3816
        %v3945 = vunpack.c.l.b16 %v3817
        %v3946 = vunpack.c.l.b16 %v3818
        %v3947 = vunpack.c.l.b16 %v3819
        %v3948 = vunpack.c.l.b16 %v3820
        %v3949 = vunpack.c.l.b16 %v3821
        %v3950 = vunpack.c.l.b16 %v3822
        %v3951 = vunpack.c.l.b16 %v3823
        %v3952 = vunpack.c.l.b16 %v3824
        %v3953 = vunpack.c.l.b16 %v3825
        %v3954 = vunpack.c.l.b16 %v3826
        %v3955 = vunpack.c.l.b16 %v3827
        %v3956 = vunpack.c.l.b16 %v3828
        %v3957 = vunpack.c.l.b16 %v3829
        %v3958 = vunpack.c.l.b16 %v3830
        %v3959 = vunpack.c.l.b16 %v3831
        %v3960 = vunpack.c.l.b16 %v3832
        %v3961 = vunpack.c.l.b16 %v3833
        %v3962 = vunpack.c.l.b16 %v3834
        %v3963 = vunpack.c.l.b16 %v3835
        %v3964 = vunpack.c.l.b16 %v3836
        %v3965 = vunpack.c.l.b16 %v3837
        %v3966 = vunpack.c.l.b16 %v3838
        %v3967 = vrot.slane %v3904, 7
        %vm3968 = vcmask 1041409
        %v3969 = vsel %vm3968, %v3967, %v3903
        %v3970 = vrot.slane %v3905, 6
        %vm3971 = vcmask 1042434
        %v3972 = vsel %vm3971, %v3970, %v3969
        %v3973 = vrot.slane %v3906, 5
        %vm3974 = vcmask 1043459
        %v3975 = vsel %vm3974, %v3973, %v3972
        %v3976 = vrot.slane %v3907, 4
        %vm3977 = vcmask 1044484
        %v3978 = vsel %vm3977, %v3976, %v3975
        %v3979 = vrot.slane %v3908, 3
        %vm3980 = vcmask 1045509
        %v3981 = vsel %vm3980, %v3979, %v3978
        %v3982 = vrot.slane %v3909, 2
        %vm3983 = vcmask 1046534
        %v3984 = vsel %vm3983, %v3982, %v3981
        %v3985 = vrot.slane %v3910, 1
        %vm3986 = vcmask 1047559
        %v3987 = vsel %vm3986, %v3985, %v3984
        %v3988 = vrot.slane %v3912, 7
        %v3989 = vsel %vm3968, %v3988, %v3911
        %v3990 = vrot.slane %v3913, 6
        %v3991 = vsel %vm3971, %v3990, %v3989
        %v3992 = vrot.slane %v3914, 5
        %v3993 = vsel %vm3974, %v3992, %v3991
        %v3994 = vrot.slane %v3915, 4
        %v3995 = vsel %vm3977, %v3994, %v3993
        %v3996 = vrot.slane %v3916, 3
        %v3997 = vsel %vm3980, %v3996, %v3995
        %v3998 = vrot.slane %v3917, 2
        %v3999 = vsel %vm3983, %v3998, %v3997
        %v4000 = vrot.slane %v3918, 1
        %v4001 = vsel %vm3986, %v4000, %v3999
        %v4002 = vrot.slane %v3920, 7
        %v4003 = vsel %vm3968, %v4002, %v3919
        %v4004 = vrot.slane %v3921, 6
        %v4005 = vsel %vm3971, %v4004, %v4003
        %v4006 = vrot.slane %v3922, 5
        %v4007 = vsel %vm3974, %v4006, %v4005
        %v4008 = vrot.slane %v3923, 4
        %v4009 = vsel %vm3977, %v4008, %v4007
        %v4010 = vrot.slane %v3924, 3
        %v4011 = vsel %vm3980, %v4010, %v4009
        %v4012 = vrot.slane %v3925, 2
        %v4013 = vsel %vm3983, %v4012, %v4011
        %v4014 = vrot.slane %v3926, 1
        %v4015 = vsel %vm3986, %v4014, %v4013
        %v4016 = vrot.slane %v3928, 7
        %v4017 = vsel %vm3968, %v4016, %v3927
        %v4018 = vrot.slane %v3929, 6
        %v4019 = vsel %vm3971, %v4018, %v4017
        %v4020 = vrot.slane %v3930, 5
        %v4021 = vsel %vm3974, %v4020, %v4019
        %v4022 = vrot.slane %v3931, 4
        %v4023 = vsel %vm3977, %v4022, %v4021
        %v4024 = vrot.slane %v3932, 3
        %v4025 = vsel %vm3980, %v4024, %v4023
        %v4026 = vrot.slane %v3933, 2
        %v4027 = vsel %vm3983, %v4026, %v4025
        %v4028 = vrot.slane %v3934, 1
        %v4029 = vsel %vm3986, %v4028, %v4027
        %v4030 = vrot.slane %v3936, 7
        %v4031 = vsel %vm3968, %v4030, %v3935
        %v4032 = vrot.slane %v3937, 6
        %v4033 = vsel %vm3971, %v4032, %v4031
        %v4034 = vrot.slane %v3938, 5
        %v4035 = vsel %vm3974, %v4034, %v4033
        %v4036 = vrot.slane %v3939, 4
        %v4037 = vsel %vm3977, %v4036, %v4035
        %v4038 = vrot.slane %v3940, 3
        %v4039 = vsel %vm3980, %v4038, %v4037
        %v4040 = vrot.slane %v3941, 2
        %v4041 = vsel %vm3983, %v4040, %v4039
        %v4042 = vrot.slane %v3942, 1
        %v4043 = vsel %vm3986, %v4042, %v4041
        %v4044 = vrot.slane %v3944, 7
        %v4045 = vsel %vm3968, %v4044, %v3943
        %v4046 = vrot.slane %v3945, 6
        %v4047 = vsel %vm3971, %v4046, %v4045
        %v4048 = vrot.slane %v3946, 5
        %v4049 = vsel %vm3974, %v4048, %v4047
        %v4050 = vrot.slane %v3947, 4
        %v4051 = vsel %vm3977, %v4050, %v4049
        %v4052 = vrot.slane %v3948, 3
        %v4053 = vsel %vm3980, %v4052, %v4051
        %v4054 = vrot.slane %v3949, 2
        %v4055 = vsel %vm3983, %v4054, %v4053
        %v4056 = vrot.slane %v3950, 1
        %v4057 = vsel %vm3986, %v4056, %v4055
        %v4058 = vrot.slane %v3952, 7
        %v4059 = vsel %vm3968, %v4058, %v3951
        %v4060 = vrot.slane %v3953, 6
        %v4061 = vsel %vm3971, %v4060, %v4059
        %v4062 = vrot.slane %v3954, 5
        %v4063 = vsel %vm3974, %v4062, %v4061
        %v4064 = vrot.slane %v3955, 4
        %v4065 = vsel %vm3977, %v4064, %v4063
        %v4066 = vrot.slane %v3956, 3
        %v4067 = vsel %vm3980, %v4066, %v4065
        %v4068 = vrot.slane %v3957, 2
        %v4069 = vsel %vm3983, %v4068, %v4067
        %v4070 = vrot.slane %v3958, 1
        %v4071 = vsel %vm3986, %v4070, %v4069
        %v4072 = vrot.slane %v3960, 7
        %v4073 = vsel %vm3968, %v4072, %v3959
        %v4074 = vrot.slane %v3961, 6
        %v4075 = vsel %vm3971, %v4074, %v4073
        %v4076 = vrot.slane %v3962, 5
        %v4077 = vsel %vm3974, %v4076, %v4075
        %v4078 = vrot.slane %v3963, 4
        %v4079 = vsel %vm3977, %v4078, %v4077
        %v4080 = vrot.slane %v3964, 3
        %v4081 = vsel %vm3980, %v4080, %v4079
        %v4082 = vrot.slane %v3965, 2
        %v4083 = vsel %vm3983, %v4082, %v4081
        %v4084 = vrot.slane %v3966, 1
        %v4085 = vsel %vm3986, %v4084, %v4083
        %v4086 = vpack.c.b16 %v3987, %v3987
        %v4087 = vpack.c.b16 %v4001, %v4001
        %v4088 = vpack.c.b16 %v4015, %v4015
        %v4089 = vpack.c.b16 %v4029, %v4029
        %v4090 = vpack.c.b16 %v4043, %v4043
        %v4091 = vpack.c.b16 %v4057, %v4057
        %v4092 = vpack.c.b16 %v4071, %v4071
        %v4093 = vpack.c.b16 %v4085, %v4085
        %4102 = vst.msk [vmem:[%s204] sm:$0xf] %vm636, %v4086
        %4103 = vst.msk [vmem:[%s204 + $0x4] sm:$0xf] %vm636, %v4087
        %4104 = vst.msk [vmem:[%s204 + $0x8] sm:$0xf] %vm636, %v4088
        %4105 = vst.msk [vmem:[%s204 + $0xc] sm:$0xf] %vm636, %v4089
        %4106 = vst.msk [vmem:[%s204 + $0x10] sm:$0xf] %vm636, %v4090
        %4107 = vst.msk [vmem:[%s204 + $0x14] sm:$0xf] %vm636, %v4091
        %4108 = vst.msk [vmem:[%s204 + $0x18] sm:$0xf] %vm636, %v4092
        %4109 = vst.msk [vmem:[%s204 + $0x1c] sm:$0xf] %vm636, %v4093
        %s4110 = sand.u32 %s110, 1
        %s4111 = scalar_lea.sflag [#allocation5], %s4110
        %s4112 = sand.u32 %s110, 1
        %s4113 = smul.addr %s4112, 32
        %s4114 = scalar_lea.vmem [#allocation6], %s4113
        // Predicated region
        $region37: #{tpu_custom_call.1} parent=31 // pred_check
          %p4115 = pneg %p120
        $region38: #{tpu_custom_call.1} parent=31 // pred_check_branch
          %4117 = sbr.rel (%p4115) target = $region40
        $region39: #{tpu_custom_call.1} parent=31 // pred_region
          %s4118 = smul.u32 4, %s25
          %4120 = vsyncadd %s4111, 0
          %s4121 = smul.addr %s4118, 2
          %s4122 = smul.addr %s24, 32
          %s4123 = sadd.s32 %s4121, %s4122
          %s4124 = smul.addr %s4123, 4
          %s4125 = scalar_lea.hbm %s3, %s4124
          %s4126 = sshll.u32 %s4114, 4
          %s4127 = int_to_ptr.vmem [resolvable:$true] %s4126
          %s4128 = sshll.u32 %s4125, 4
          %s4129 = int_to_ptr.hbm [resolvable:$true] %s4128
          %4134 = dma.vmem_to_hbm [thread:$0]  %s4127, 512, %s4129, %s4111, 64, 64, 4
        $region40: #{tpu_custom_call.1} parent=31 // pred_fallthru
          _
      $region32: #{tpu_custom_call.1} parent=5 // pred_fallthru
        _
      %p4135 = scmp.le.s32.totalorder 2, %s15
      // Predicated region
      $region41: #{tpu_custom_call.1} parent=5 // pred_check
        %p4136 = pneg %p4135
      $region42: #{tpu_custom_call.1} parent=5 // pred_check_branch
        %4138 = sbr.rel (%p4136) target = $region44
      $region43: #{tpu_custom_call.1} parent=5 // pred_region
        %s4139 = ssub.s32 %s15, 2
        // Predicated region
        $region45: #{tpu_custom_call.1} parent=43 // pred_check
          %p4140 = pneg %p126
        $region46: #{tpu_custom_call.1} parent=43 // pred_check_branch
          %4142 = sbr.rel (%p4140) target = $region48
        $region47: #{tpu_custom_call.1} parent=43 // pred_region
          %s4143 = sand.u32 %s111, 1
          %s4144 = scalar_lea.sflag [#allocation5], %s4143
          %s4145 = sand.u32 %s111, 1
          %s4146 = smul.addr %s4145, 32
          %s4147 = scalar_lea.vmem [#allocation6], %s4146
          %4149 = dma.done %s4144, 512
        $region48: #{tpu_custom_call.1} parent=43 // pred_fallthru
          _
      $region44: #{tpu_custom_call.1} parent=5 // pred_fallthru
        _
    $region6: #{tpu_custom_call.1} parent=1 // loop_footer
      %s19 = sadd.s32 1, %s15
    $region7: #{tpu_custom_call.1} parent=1 // loop_footer_branch
      %14 = sbr.rel target = $region3
    $region8: #{tpu_custom_call.1} parent=1 // loop_exit
      _
    %4150 = vsyncpa [#allocation4], 1
    %s4151 = scalar_lea.sflag [#allocation4], 1
    %4152 = vsyncpa %s4151, 1
    %4153 = vsyncpa [#allocation5], 1
    %s4154 = scalar_lea.sflag [#allocation5], 1
    %4155 = vsyncpa %s4154, 1

</llo_original>
